<compile_context>
chip_gen: v7x
topology: tpu7x:2x2x1
jax: 0.10.0
libtpu: 0.0.40
codegen_flags: <defaults>
</compile_context>

<pallas_src>
import numpy as np
import jax
import jax.numpy as jnp
from jax.experimental import pallas as pl
from jax.experimental.pallas import tpu as pltpu

EPS = float(np.finfo(float).eps)  # matches np.finfo(float).eps in the torch code
VMEM_LIMIT = 48 * 1024 * 1024     # fits v7x's 64 MiB VMEM with headroom


def _tile(dim, pref):
    """Tile size `pref` if it evenly divides `dim`, else the full dim (single block)."""
    return pref if (dim >= pref and dim % pref == 0) else dim


# --------------------------------------------------------------------------------------
# Stage 1: fused, tiled GEMM  x @ [W_qkv | W_a_q | W_a_v] + [b_qkv | 0 | 0]
# --------------------------------------------------------------------------------------

def _fused_qkv_lora_gemm_kernel(x_ref, w_ref, b_ref, o_ref, acc_ref):
    @pl.when(pl.program_id(2) == 0)
    def _():
        acc_ref[...] = jnp.zeros_like(acc_ref)

    acc_ref[...] += jnp.dot(x_ref[...], w_ref[...], preferred_element_type=jnp.float32)

    @pl.when(pl.program_id(2) == pl.num_programs(2) - 1)
    def _():
        o_ref[...] = acc_ref[...] + b_ref[...]


def fused_qkv_lora_gemm(x, w, b, *, tm_pref=256, tn_pref=512, tk_pref=256):
    """(M, K) bf16 @ (K, N) bf16 + b -> (M, N) f32, tiled with a VMEM f32 accumulator."""
    M, K = x.shape
    N = w.shape[1]
    tm, tn, tk = _tile(M, tm_pref), _tile(N, tn_pref), _tile(K, tk_pref)
    grid = (M // tm, N // tn, K // tk)
    flops = 2 * M * N * K
    bytes_acc = (M * K * x.dtype.itemsize * (N // tn)
                 + K * N * w.dtype.itemsize * (M // tm)
                 + M * N * 4)
    return pl.pallas_call(
        _fused_qkv_lora_gemm_kernel,
        out_shape=jax.ShapeDtypeStruct((M, N), jnp.float32),
        grid=grid,
        in_specs=[
            pl.BlockSpec((tm, tk), lambda i, j, k: (i, k)),
            pl.BlockSpec((tk, tn), lambda i, j, k: (k, j)),
            pl.BlockSpec((1, tn), lambda i, j, k: (0, j)),
        ],
        out_specs=pl.BlockSpec((tm, tn), lambda i, j, k: (i, j)),
        scratch_shapes=[pltpu.VMEM((tm, tn), jnp.float32)],
        compiler_params=pltpu.CompilerParams(
            dimension_semantics=("parallel", "parallel", "arbitrary"),
            vmem_limit_bytes=VMEM_LIMIT,
        ),
        cost_estimate=pl.CostEstimate(
            flops=int(flops), transcendentals=0, bytes_accessed=int(bytes_acc)),
    )(x, w, b.reshape(1, N))


# --------------------------------------------------------------------------------------
# Stage 2: fused MoE conv (im2col GEMM over all taps/experts/branches) + stable
#          gate-weighted log-sum-exp combine + residual + LoRA-B + final qkv assembly
# --------------------------------------------------------------------------------------

def _make_moe_lora_kernel(E, r, C):
    def kernel(patches_ref, w2_ref, b2_ref, fused_ref, g_ref, wbq_ref, wbv_ref, o_ref):
        # One GEMM: all 9 taps x all E experts x both branches (block-diag weights).
        eo = (jnp.dot(patches_ref[...], w2_ref[...], preferred_element_type=jnp.float32)
              + b2_ref[...])                              # (tm, 2*E*r) f32
        fu = fused_ref[...]                               # (tm, 3C + 2r) f32
        g = g_ref[...]                                    # (tm, 2*E)    f32

        combined = []
        for br in range(2):                               # 0 = q branch, 1 = v branch
            lora = fu[:, 3 * C + br * r: 3 * C + (br + 1) * r]            # (tm, r)
            slabs = [eo[:, (br * E + e) * r: (br * E + e + 1) * r] for e in range(E)]
            m = slabs[0]
            for e in range(1, E):
                m = jnp.maximum(m, slabs[e])
            s = jnp.zeros_like(m)
            for e in range(E):
                gate = g[:, br * E + e: br * E + e + 1]                   # (tm, 1)
                s = s + gate * jnp.exp(slabs[e] - m)
            s = jnp.where(s == 0.0, EPS, s)
            # lora_res = lora_res + SparseDispatcher.combine(...)   (stable LSE)
            combined.append(lora + m + jnp.log(s))                        # (tm, r)

        q_ba = jnp.dot(combined[0].astype(wbq_ref.dtype), wbq_ref[...],
                       preferred_element_type=jnp.float32)                # (tm, C)
        v_ba = jnp.dot(combined[1].astype(wbv_ref.dtype), wbv_ref[...],
                       preferred_element_type=jnp.float32)                # (tm, C)

        # Slab-wise stores (no concatenate): q / k / v column blocks of the output.
        o_ref[:, :C] = fu[:, :C] + q_ba
        o_ref[:, C:2 * C] = fu[:, C:2 * C]
        o_ref[:, 2 * C:] = fu[:, 2 * C:3 * C] + v_ba
    return kernel


def moe_conv_lora_combine(patches, w2, b2, fused, gates_rows, wbq, wbv,
                          *, E, r, C, tm_pref=256):
    M = patches.shape[0]
    Kp = patches.shape[1]        # 2 * 9 * r
    Ne = w2.shape[1]             # 2 * E * r
    N1 = fused.shape[1]          # 3C + 2r
    tm = _tile(M, tm_pref)
    grid = (M // tm,)
    flops = 2 * M * Kp * Ne + 2 * 2 * M * r * C
    transc = 2 * M * r * (E + 1)                     # E exps + 1 log per branch element
    bytes_acc = (patches.size * patches.dtype.itemsize + w2.size * w2.dtype.itemsize
                 + fused.size * 4 + gates_rows.size * 4
                 + (wbq.size + wbv.size) * wbq.dtype.itemsize + M * 3 * C * 4)
    return pl.pallas_call(
        _make_moe_lora_kernel(E, r, C),
        out_shape=jax.ShapeDtypeStruct((M, 3 * C), jnp.float32),
        grid=grid,
        in_specs=[
            pl.BlockSpec((tm, Kp), lambda i: (i, 0)),
            pl.BlockSpec((Kp, Ne), lambda i: (0, 0)),
            pl.BlockSpec((1, Ne), lambda i: (0, 0)),
            pl.BlockSpec((tm, N1), lambda i: (i, 0)),
            pl.BlockSpec((tm, 2 * E), lambda i: (i, 0)),
            pl.BlockSpec((r, C), lambda i: (0, 0)),
            pl.BlockSpec((r, C), lambda i: (0, 0)),
        ],
        out_specs=pl.BlockSpec((tm, 3 * C), lambda i: (i, 0)),
        compiler_params=pltpu.CompilerParams(
            dimension_semantics=("parallel",),
            vmem_limit_bytes=VMEM_LIMIT,
        ),
        cost_estimate=pl.CostEstimate(
            flops=int(flops), transcendentals=int(transc), bytes_accessed=int(bytes_acc)),
    )(patches, w2, b2.reshape(1, Ne), fused, gates_rows, wbq, wbv)


# --------------------------------------------------------------------------------------
# Forward pass (tiny glue in plain JAX, all heavy work in the two Pallas kernels)
# --------------------------------------------------------------------------------------

def _im2col_3x3(x_nhwc):
    """(B, H, W, C) -> (B*H*W, 9*C) 'SAME' 3x3 patches, tap index = dy*3 + dx."""
    B, H, W, Cc = x_nhwc.shape
    xp = jnp.pad(x_nhwc, ((0, 0), (1, 1), (1, 1), (0, 0)))
    taps = [xp[:, dy:dy + H, dx:dx + W, :] for dy in range(3) for dx in range(3)]
    return jnp.concatenate(taps, axis=-1).reshape(B * H * W, 9 * Cc)


def _pack_expert_weights(ew):
    """(E, 9, r, r) -> (9r, E*r): row = tap*r + cin, col = e*r + cout."""
    E, T, r, _ = ew.shape
    return jnp.transpose(ew, (1, 2, 0, 3)).reshape(T * r, E * r)


def conv_lora_qkv_forward(x, p):
    B, H, W, C = x.shape
    r = p["w_a_q"].shape[1]
    E = p["wg_q"].shape[1]
    M = B * H * W
    x2 = x.reshape(M, C)

    # ---- stage 1: one fused, tiled GEMM producing [qkv | lora_q | lora_v] -------------
    w1 = jnp.concatenate([p["w_qkv"], p["w_a_q"], p["w_a_v"]], axis=1)       # (C, 3C+2r)
    b1 = jnp.concatenate([p["b_qkv"], jnp.zeros((2 * r,), jnp.float32)])
    fused = fused_qkv_lora_gemm(x2.astype(jnp.bfloat16), w1.astype(jnp.bfloat16), b1)

    lora_q = fused[:, 3 * C: 3 * C + r].reshape(B, H, W, r)
    lora_v = fused[:, 3 * C + r:].reshape(B, H, W, r)

    # ---- gating: deterministic dense softmax gate over pooled LoRA features (tiny) ----
    gates_q = jax.nn.softmax(jnp.mean(lora_q, axis=(1, 2)) @ p["wg_q"], axis=-1)  # (B,E)
    gates_v = jax.nn.softmax(jnp.mean(lora_v, axis=(1, 2)) @ p["wg_v"], axis=-1)
    gates_rows = jnp.broadcast_to(
        jnp.concatenate([gates_q, gates_v], axis=1)[:, None, :], (B, H * W, 2 * E)
    ).reshape(M, 2 * E)

    # ---- stage 2 inputs: im2col patches for both branches, packed expert weights ------
    # TODO(synk): the SAME-padding / im2col halo construction stays in XLA; moving it
    #             in-kernel would require lane-dim concatenation of r-wide tap columns.
    patches = jnp.concatenate(
        [_im2col_3x3(lora_q), _im2col_3x3(lora_v)], axis=-1
    ).astype(jnp.bfloat16)                                                    # (M, 18r)

    wq_pack = _pack_expert_weights(p["expq_w"])                               # (9r, E*r)
    wv_pack = _pack_expert_weights(p["expv_w"])
    z = jnp.zeros_like(wq_pack)
    w2 = jnp.concatenate(
        [jnp.concatenate([wq_pack, z], axis=1),
         jnp.concatenate([z, wv_pack], axis=1)], axis=0
    ).astype(jnp.bfloat16)                                                    # (18r, 2Er)
    b2 = jnp.concatenate([p["expq_b"].reshape(-1), p["expv_b"].reshape(-1)])  # (2Er,)

    out = moe_conv_lora_combine(
        patches, w2, b2, fused, gates_rows,
        p["w_b_q"].astype(jnp.bfloat16), p["w_b_v"].astype(jnp.bfloat16),
        E=E, r=r, C=C)
    return out.reshape(B, H, W, 3 * C)


# --------------------------------------------------------------------------------------
# Pure-JAX f32 reference (matches the PyTorch formulation; used for correctness check)
# --------------------------------------------------------------------------------------

def reference_forward(x, p):
    B, H, W, C = x.shape
    r = p["w_a_q"].shape[1]
    E = p["wg_q"].shape[1]
    x2 = x.reshape(-1, C)
    qkv = x2 @ p["w_qkv"] + p["b_qkv"]

    def branch(w_a, w_gate, ew, eb):
        lo = (x2 @ w_a).reshape(B, H, W, r)
        gates = jax.nn.softmax(jnp.mean(lo, axis=(1, 2)) @ w_gate, axis=-1)
        outs = []
        for e in range(E):
            w_hwio = ew[e].reshape(3, 3, r, r)
            o = jax.lax.conv_general_dilated(
                lo, w_hwio, (1, 1), "SAME",
                dimension_numbers=("NHWC", "HWIO", "NHWC")) + eb[e]
            outs.append(o)
        stacked = jnp.stack(outs, 0)  # (E, B, H, W, r)
        s = jnp.sum(jnp.exp(stacked) * gates.T[:, :, None, None, None], axis=0)
        s = jnp.where(s == 0.0, EPS, s)
        return (lo + jnp.log(s)).reshape(-1, r)

    lq = branch(p["w_a_q"], p["wg_q"], p["expq_w"], p["expq_b"])
    lv = branch(p["w_a_v"], p["wg_v"], p["expv_w"], p["expv_b"])
    qkv = qkv.at[:, :C].add(lq @ p["w_b_q"])
    qkv = qkv.at[:, 2 * C:].add(lv @ p["w_b_v"])
    return qkv.reshape(B, H, W, 3 * C)


# --------------------------------------------------------------------------------------
# Deterministic parameter init + driver
# --------------------------------------------------------------------------------------

def init_params(key, d_model, r, num_experts):
    ks = jax.random.split(key, 12)
    s = 0.1
    return {
        "w_qkv": s * jax.random.normal(ks[0], (d_model, 3 * d_model), jnp.float32),
        "b_qkv": s * jax.random.normal(ks[1], (3 * d_model,), jnp.float32),
        "w_a_q": s * jax.random.normal(ks[2], (d_model, r), jnp.float32),
        "w_b_q": s * jax.random.normal(ks[3], (r, d_model), jnp.float32),
        "w_a_v": s * jax.random.normal(ks[4], (d_model, r), jnp.float32),
        "w_b_v": s * jax.random.normal(ks[5], (r, d_model), jnp.float32),
        "wg_q": s * jax.random.normal(ks[6], (r, num_experts), jnp.float32),
        "wg_v": s * jax.random.normal(ks[7], (r, num_experts), jnp.float32),
        "expq_w": s * jax.random.normal(ks[8], (num_experts, 9, r, r), jnp.float32),
        "expq_b": s * jax.random.normal(ks[9], (num_experts, r), jnp.float32),
        "expv_w": s * jax.random.normal(ks[10], (num_experts, 9, r, r), jnp.float32),
        "expv_b": s * jax.random.normal(ks[11], (num_experts, r), jnp.float32),
    }


if __name__ == "__main__":
    B, H, W, d_model = 2, 16, 16, 32
    r, num_experts = 4, 2
    upsample_ratios = (1, 1)  # TODO(synk): bicubic interpolate branch is a no-op at ratio 1

    key = jax.random.PRNGKey(0)
    kx, kp = jax.random.split(key)
    x = jax.random.normal(kx, (B, H, W, d_model), jnp.float32)
    params = init_params(kp, d_model, r, num_experts)

    fwd = jax.jit(conv_lora_qkv_forward)
    out = jax.block_until_ready(fwd(x, params))

    ref = jax.block_until_ready(reference_forward(x, params))
    assert out.shape == (B, H, W, 3 * d_model)
    # bf16 MXU operands (f32 accumulation) vs f32 reference -> 2e-2 tolerance.
    np.testing.assert_allclose(np.asarray(out), np.asarray(ref), rtol=2e-2, atol=2e-2)

    print("KERNEL_OK")
</pallas_src>

<mosaic_0001>
module attributes {stable_mosaic.version = 11 : i64} {
  func.func @_fused_qkv_lora_gemm_kernel(%arg0: i32, %arg1: i32, %arg2: i32, %arg3: memref<256x32xbf16, #tpu.memory_space<vmem>>, %arg4: memref<32x104xbf16, #tpu.memory_space<vmem>>, %arg5: memref<1x104xf32, #tpu.memory_space<vmem>>, %arg6: memref<256x104xf32, #tpu.memory_space<vmem>>, %arg7: memref<256x104xf32, #tpu.memory_space<vmem>>) attributes {dimension_semantics = [#tpu.dimension_semantics<parallel>, #tpu.dimension_semantics<parallel>, #tpu.dimension_semantics<arbitrary>], iteration_bounds = array<i64: 2, 1, 1>, scalar_prefetch = 0 : i64, scratch_operands = 1 : i64, tpu.core_type = #tpu.core_type<tc>, window_params = [{transform_indices = @transform_0, window_bounds = array<i64: 256, 32>}, {transform_indices = @transform_1, window_bounds = array<i64: 32, 104>}, {transform_indices = @transform_2, window_bounds = array<i64: 1, 104>}, {transform_indices = @transform_3, window_bounds = array<i64: 256, 104>}]} {
    %c0_i32 = arith.constant 0 : i32
    %0 = arith.cmpi eq, %arg2, %c0_i32 : i32
    %1 = arith.extui %0 : i1 to i32
    %c0_i32_0 = arith.constant 0 : i32
    %2 = arith.cmpi ne, %1, %c0_i32_0 : i32
    scf.if %2 {
      %cst_10 = arith.constant 0.000000e+00 : f32
      %12 = vector.broadcast %cst_10 : f32 to vector<256x104xf32>
      %c0_11 = arith.constant 0 : index
      %c0_12 = arith.constant 0 : index
      %13 = vector.load %arg7[%c0_11, %c0_12] : memref<256x104xf32, #tpu.memory_space<vmem>>, vector<256x104xf32>
      tpu.vector_store %arg7[%c0_11, %c0_12], %12 {strides = array<i32>} : memref<256x104xf32, #tpu.memory_space<vmem>>, vector<256x104xf32>,
    } else {
    }
    %c0 = arith.constant 0 : index
    %c0_1 = arith.constant 0 : index
    %3 = vector.load %arg7[%c0, %c0_1] : memref<256x104xf32, #tpu.memory_space<vmem>>, vector<256x104xf32>
    %c0_2 = arith.constant 0 : index
    %c0_3 = arith.constant 0 : index
    %4 = vector.load %arg3[%c0_2, %c0_3] : memref<256x32xbf16, #tpu.memory_space<vmem>>, vector<256x32xbf16>
    %c0_4 = arith.constant 0 : index
    %c0_5 = arith.constant 0 : index
    %5 = vector.load %arg4[%c0_4, %c0_5] : memref<32x104xbf16, #tpu.memory_space<vmem>>, vector<32x104xbf16>
    %cst = arith.constant dense<0.000000e+00> : vector<256x104xf32>
    %6 = tpu.matmul %4, %5, %cst {dimension_numbers = #tpu.dot_dimension_numbers<[1], [0], [0], [1], [0, 0, 1, 1], [], []>} : vector<256x32xbf16>, vector<32x104xbf16>, vector<256x104xf32> -> vector<256x104xf32>
    %7 = arith.addf %3, %6 : vector<256x104xf32>
    %c0_6 = arith.constant 0 : index
    %c0_7 = arith.constant 0 : index
    %8 = vector.load %arg7[%c0_6, %c0_7] : memref<256x104xf32, #tpu.memory_space<vmem>>, vector<256x104xf32>
    tpu.vector_store %arg7[%c0_6, %c0_7], %7 {strides = array<i32>} : memref<256x104xf32, #tpu.memory_space<vmem>>, vector<256x104xf32>,
    %c0_i32_8 = arith.constant 0 : i32
    %9 = arith.cmpi eq, %arg2, %c0_i32_8 : i32
    %10 = arith.extui %9 : i1 to i32
    %c0_i32_9 = arith.constant 0 : i32
    %11 = arith.cmpi ne, %10, %c0_i32_9 : i32
    scf.if %11 {
      %c0_10 = arith.constant 0 : index
      %c0_11 = arith.constant 0 : index
      %12 = vector.load %arg7[%c0_10, %c0_11] : memref<256x104xf32, #tpu.memory_space<vmem>>, vector<256x104xf32>
      %c0_12 = arith.constant 0 : index
      %c0_13 = arith.constant 0 : index
      %13 = vector.load %arg5[%c0_12, %c0_13] : memref<1x104xf32, #tpu.memory_space<vmem>>, vector<1x104xf32>
      %14 = vector.broadcast %13 : vector<1x104xf32> to vector<256x104xf32>
      %15 = arith.addf %12, %14 : vector<256x104xf32>
      %c0_14 = arith.constant 0 : index
      %c0_15 = arith.constant 0 : index
      %16 = vector.load %arg6[%c0_14, %c0_15] : memref<256x104xf32, #tpu.memory_space<vmem>>, vector<256x104xf32>
      tpu.vector_store %arg6[%c0_14, %c0_15], %15 {strides = array<i32>} : memref<256x104xf32, #tpu.memory_space<vmem>>, vector<256x104xf32>,
    } else {
    }
    return
  }
  func.func @transform_0(%arg0: i32, %arg1: i32, %arg2: i32) -> (i32, i32) {
    %c0_i32 = arith.constant 0 : i32
    return %arg0, %arg2 : i32, i32
  }
  func.func @transform_1(%arg0: i32, %arg1: i32, %arg2: i32) -> (i32, i32) {
    %c0_i32 = arith.constant 0 : i32
    return %arg2, %arg1 : i32, i32
  }
  func.func @transform_2(%arg0: i32, %arg1: i32, %arg2: i32) -> (i32, i32) {
    %c0_i32 = arith.constant 0 : i32
    %c0_i32_0 = arith.constant 0 : i32
    return %c0_i32, %arg1 : i32, i32
  }
  func.func @transform_3(%arg0: i32, %arg1: i32, %arg2: i32) -> (i32, i32) {
    %c0_i32 = arith.constant 0 : i32
    return %arg0, %arg1 : i32, i32
  }
}

module attributes {stable_mosaic.version = 11 : i64} {
  func.func @kernel(%arg0: i32, %arg1: memref<256x72xbf16, #tpu.memory_space<vmem>>, %arg2: memref<72x16xbf16, #tpu.memory_space<vmem>>, %arg3: memref<1x16xf32, #tpu.memory_space<vmem>>, %arg4: memref<256x104xf32, #tpu.memory_space<vmem>>, %arg5: memref<256x4xf32, #tpu.memory_space<vmem>>, %arg6: memref<4x32xbf16, #tpu.memory_space<vmem>>, %arg7: memref<4x32xbf16, #tpu.memory_space<vmem>>, %arg8: memref<256x96xf32, #tpu.memory_space<vmem>>) attributes {dimension_semantics = [#tpu.dimension_semantics<parallel>], iteration_bounds = array<i64: 2>, scalar_prefetch = 0 : i64, scratch_operands = 0 : i64, tpu.core_type = #tpu.core_type<tc>, window_params = [{transform_indices = @transform_0, window_bounds = array<i64: 256, 72>}, {pipeline_mode = #tpu.pipeline_mode<synchronous>, transform_indices = @transform_1, window_bounds = array<i64: 72, 16>}, {pipeline_mode = #tpu.pipeline_mode<synchronous>, transform_indices = @transform_2, window_bounds = array<i64: 1, 16>}, {transform_indices = @transform_3, window_bounds = array<i64: 256, 104>}, {transform_indices = @transform_4, window_bounds = array<i64: 256, 4>}, {pipeline_mode = #tpu.pipeline_mode<synchronous>, transform_indices = @transform_5, window_bounds = array<i64: 4, 32>}, {pipeline_mode = #tpu.pipeline_mode<synchronous>, transform_indices = @transform_6, window_bounds = array<i64: 4, 32>}, {transform_indices = @transform_7, window_bounds = array<i64: 256, 96>}]} {
    %c0 = arith.constant 0 : index
    %c0_0 = arith.constant 0 : index
    %0 = vector.load %arg1[%c0, %c0_0] : memref<256x72xbf16, #tpu.memory_space<vmem>>, vector<256x72xbf16>
    %c0_1 = arith.constant 0 : index
    %c0_2 = arith.constant 0 : index
    %1 = vector.load %arg2[%c0_1, %c0_2] : memref<72x16xbf16, #tpu.memory_space<vmem>>, vector<72x16xbf16>
    %cst = arith.constant dense<0.000000e+00> : vector<256x16xf32>
    %2 = tpu.matmul %0, %1, %cst {dimension_numbers = #tpu.dot_dimension_numbers<[1], [0], [0], [1], [0, 0, 1, 1], [], []>} : vector<256x72xbf16>, vector<72x16xbf16>, vector<256x16xf32> -> vector<256x16xf32>
    %c0_3 = arith.constant 0 : index
    %c0_4 = arith.constant 0 : index
    %3 = vector.load %arg3[%c0_3, %c0_4] : memref<1x16xf32, #tpu.memory_space<vmem>>, vector<1x16xf32>
    %4 = vector.broadcast %3 : vector<1x16xf32> to vector<256x16xf32>
    %5 = arith.addf %2, %4 : vector<256x16xf32>
    %c0_5 = arith.constant 0 : index
    %c0_6 = arith.constant 0 : index
    %6 = vector.load %arg4[%c0_5, %c0_6] : memref<256x104xf32, #tpu.memory_space<vmem>>, vector<256x104xf32>
    %c0_7 = arith.constant 0 : index
    %c0_8 = arith.constant 0 : index
    %7 = vector.load %arg5[%c0_7, %c0_8] : memref<256x4xf32, #tpu.memory_space<vmem>>, vector<256x4xf32>
    %8 = vector.extract_strided_slice %6 {offsets = [0, 96], sizes = [256, 4], strides = [1, 1]} : vector<256x104xf32> to vector<256x4xf32>
    %9 = vector.extract_strided_slice %5 {offsets = [0, 0], sizes = [256, 4], strides = [1, 1]} : vector<256x16xf32> to vector<256x4xf32>
    %10 = vector.extract_strided_slice %5 {offsets = [0, 4], sizes = [256, 4], strides = [1, 1]} : vector<256x16xf32> to vector<256x4xf32>
    %11 = arith.maximumf %9, %10 : vector<256x4xf32>
    %cst_9 = arith.constant 0.000000e+00 : f32
    %12 = vector.broadcast %cst_9 : f32 to vector<256x4xf32>
    %13 = vector.extract_strided_slice %7 {offsets = [0, 0], sizes = [256, 1], strides = [1, 1]} : vector<256x4xf32> to vector<256x1xf32>
    %14 = arith.subf %9, %11 : vector<256x4xf32>
    %15 = math.exp %14 : vector<256x4xf32>
    %16 = vector.broadcast %13 : vector<256x1xf32> to vector<256x4xf32>
    %17 = arith.mulf %16, %15 : vector<256x4xf32>
    %18 = arith.addf %12, %17 : vector<256x4xf32>
    %19 = vector.extract_strided_slice %7 {offsets = [0, 1], sizes = [256, 1], strides = [1, 1]} : vector<256x4xf32> to vector<256x1xf32>
    %20 = arith.subf %10, %11 : vector<256x4xf32>
    %21 = math.exp %20 : vector<256x4xf32>
    %22 = vector.broadcast %19 : vector<256x1xf32> to vector<256x4xf32>
    %23 = arith.mulf %22, %21 : vector<256x4xf32>
    %24 = arith.addf %18, %23 : vector<256x4xf32>
    %cst_10 = arith.constant 0.000000e+00 : f32
    %25 = vector.broadcast %cst_10 : f32 to vector<256x4xf32>
    %26 = arith.cmpf oeq, %24, %25 : vector<256x4xf32>
    %cst_11 = arith.constant 2.22044605E-16 : f32
    %27 = vector.broadcast %cst_11 : f32 to vector<256x4xf32>
    %28 = arith.select %26, %27, %24 : vector<256x4xi1>, vector<256x4xf32>
    %29 = arith.addf %8, %11 : vector<256x4xf32>
    %30 = math.log %28 : vector<256x4xf32>
    %31 = arith.addf %29, %30 : vector<256x4xf32>
    %32 = vector.extract_strided_slice %6 {offsets = [0, 100], sizes = [256, 4], strides = [1, 1]} : vector<256x104xf32> to vector<256x4xf32>
    %33 = vector.extract_strided_slice %5 {offsets = [0, 8], sizes = [256, 4], strides = [1, 1]} : vector<256x16xf32> to vector<256x4xf32>
    %34 = vector.extract_strided_slice %5 {offsets = [0, 12], sizes = [256, 4], strides = [1, 1]} : vector<256x16xf32> to vector<256x4xf32>
    %35 = arith.maximumf %33, %34 : vector<256x4xf32>
    %cst_12 = arith.constant 0.000000e+00 : f32
    %36 = vector.broadcast %cst_12 : f32 to vector<256x4xf32>
    %37 = vector.extract_strided_slice %7 {offsets = [0, 2], sizes = [256, 1], strides = [1, 1]} : vector<256x4xf32> to vector<256x1xf32>
    %38 = arith.subf %33, %35 : vector<256x4xf32>
    %39 = math.exp %38 : vector<256x4xf32>
    %40 = vector.broadcast %37 : vector<256x1xf32> to vector<256x4xf32>
    %41 = arith.mulf %40, %39 : vector<256x4xf32>
    %42 = arith.addf %36, %41 : vector<256x4xf32>
    %43 = vector.extract_strided_slice %7 {offsets = [0, 3], sizes = [256, 1], strides = [1, 1]} : vector<256x4xf32> to vector<256x1xf32>
    %44 = arith.subf %34, %35 : vector<256x4xf32>
    %45 = math.exp %44 : vector<256x4xf32>
    %46 = vector.broadcast %43 : vector<256x1xf32> to vector<256x4xf32>
    %47 = arith.mulf %46, %45 : vector<256x4xf32>
    %48 = arith.addf %42, %47 : vector<256x4xf32>
    %cst_13 = arith.constant 0.000000e+00 : f32
    %49 = vector.broadcast %cst_13 : f32 to vector<256x4xf32>
    %50 = arith.cmpf oeq, %48, %49 : vector<256x4xf32>
    %cst_14 = arith.constant 2.22044605E-16 : f32
    %51 = vector.broadcast %cst_14 : f32 to vector<256x4xf32>
    %52 = arith.select %50, %51, %48 : vector<256x4xi1>, vector<256x4xf32>
    %53 = arith.addf %32, %35 : vector<256x4xf32>
    %54 = math.log %52 : vector<256x4xf32>
    %55 = arith.addf %53, %54 : vector<256x4xf32>
    %56 = arith.truncf %31 : vector<256x4xf32> to vector<256x4xbf16>
    %c0_15 = arith.constant 0 : index
    %c0_16 = arith.constant 0 : index
    %57 = vector.load %arg6[%c0_15, %c0_16] : memref<4x32xbf16, #tpu.memory_space<vmem>>, vector<4x32xbf16>
    %cst_17 = arith.constant dense<0.000000e+00> : vector<256x32xf32>
    %58 = tpu.matmul %56, %57, %cst_17 {dimension_numbers = #tpu.dot_dimension_numbers<[1], [0], [0], [1], [0, 0, 1, 1], [], []>} : vector<256x4xbf16>, vector<4x32xbf16>, vector<256x32xf32> -> vector<256x32xf32>
    %59 = arith.truncf %55 : vector<256x4xf32> to vector<256x4xbf16>
    %c0_18 = arith.constant 0 : index
    %c0_19 = arith.constant 0 : index
    %60 = vector.load %arg7[%c0_18, %c0_19] : memref<4x32xbf16, #tpu.memory_space<vmem>>, vector<4x32xbf16>
    %cst_20 = arith.constant dense<0.000000e+00> : vector<256x32xf32>
    %61 = tpu.matmul %59, %60, %cst_20 {dimension_numbers = #tpu.dot_dimension_numbers<[1], [0], [0], [1], [0, 0, 1, 1], [], []>} : vector<256x4xbf16>, vector<4x32xbf16>, vector<256x32xf32> -> vector<256x32xf32>
    %62 = vector.extract_strided_slice %6 {offsets = [0, 0], sizes = [256, 32], strides = [1, 1]} : vector<256x104xf32> to vector<256x32xf32>
    %63 = arith.addf %62, %58 : vector<256x32xf32>
    %c0_21 = arith.constant 0 : index
    %c0_22 = arith.constant 0 : index
    %64 = vector.load %arg8[%c0_21, %c0_22] : memref<256x96xf32, #tpu.memory_space<vmem>>, vector<256x32xf32>
    tpu.vector_store %arg8[%c0_21, %c0_22], %63 {strides = array<i32>} : memref<256x96xf32, #tpu.memory_space<vmem>>, vector<256x32xf32>,
    %65 = vector.extract_strided_slice %6 {offsets = [0, 32], sizes = [256, 32], strides = [1, 1]} : vector<256x104xf32> to vector<256x32xf32>
    %c0_23 = arith.constant 0 : index
    %c32 = arith.constant 32 : index
    %66 = vector.load %arg8[%c0_23, %c32] : memref<256x96xf32, #tpu.memory_space<vmem>>, vector<256x32xf32>
    tpu.vector_store %arg8[%c0_23, %c32], %65 {strides = array<i32>} : memref<256x96xf32, #tpu.memory_space<vmem>>, vector<256x32xf32>,
    %67 = vector.extract_strided_slice %6 {offsets = [0, 64], sizes = [256, 32], strides = [1, 1]} : vector<256x104xf32> to vector<256x32xf32>
    %68 = arith.addf %67, %61 : vector<256x32xf32>
    %c0_24 = arith.constant 0 : index
    %c64 = arith.constant 64 : index
    %69 = vector.load %arg8[%c0_24, %c64] : memref<256x96xf32, #tpu.memory_space<vmem>>, vector<256x32xf32>
    tpu.vector_store %arg8[%c0_24, %c64], %68 {strides = array<i32>} : memref<256x96xf32, #tpu.memory_space<vmem>>, vector<256x32xf32>,
    return
  }
  func.func @transform_0(%arg0: i32) -> (i32, i32) {
    %c0_i32 = arith.constant 0 : i32
    %c0_i32_0 = arith.constant 0 : i32
    return %arg0, %c0_i32 : i32, i32
  }
  func.func @transform_1(%arg0: i32) -> (i32, i32) {
    %c0_i32 = arith.constant 0 : i32
    %c0_i32_0 = arith.constant 0 : i32
    %c0_i32_1 = arith.constant 0 : i32
    return %c0_i32, %c0_i32_0 : i32, i32
  }
  func.func @transform_2(%arg0: i32) -> (i32, i32) {
    %c0_i32 = arith.constant 0 : i32
    %c0_i32_0 = arith.constant 0 : i32
    %c0_i32_1 = arith.constant 0 : i32
    return %c0_i32, %c0_i32_0 : i32, i32
  }
  func.func @transform_3(%arg0: i32) -> (i32, i32) {
    %c0_i32 = arith.constant 0 : i32
    %c0_i32_0 = arith.constant 0 : i32
    return %arg0, %c0_i32 : i32, i32
  }
  func.func @transform_4(%arg0: i32) -> (i32, i32) {
    %c0_i32 = arith.constant 0 : i32
    %c0_i32_0 = arith.constant 0 : i32
    return %arg0, %c0_i32 : i32, i32
  }
  func.func @transform_5(%arg0: i32) -> (i32, i32) {
    %c0_i32 = arith.constant 0 : i32
    %c0_i32_0 = arith.constant 0 : i32
    %c0_i32_1 = arith.constant 0 : i32
    return %c0_i32, %c0_i32_0 : i32, i32
  }
  func.func @transform_6(%arg0: i32) -> (i32, i32) {
    %c0_i32 = arith.constant 0 : i32
    %c0_i32_0 = arith.constant 0 : i32
    %c0_i32_1 = arith.constant 0 : i32
    return %c0_i32, %c0_i32_0 : i32, i32
  }
  func.func @transform_7(%arg0: i32) -> (i32, i32) {
    %c0_i32 = arith.constant 0 : i32
    %c0_i32_0 = arith.constant 0 : i32
    return %arg0, %c0_i32 : i32, i32
  }
}

</mosaic_0001>

<llo_original>
// kernel: conv_lora_qkv_forward.2
$region0: #{conv_lora_qkv_forward.2}
  #allocation0 [shape = 'u32[]', space=smem, size = 0x4, offset = 0x4, fixed_abs, tag = 'smem constant byte address 0x4 - core index']
  #allocation1 [shape = 'u32[144,128]{1,0:T(1,128)}', space=vmem, size = 0x12000, scoped, tag = 'internal scratch']
  #allocation2 [shape = 'f32[256,104]{1,0:T(8,128)}', space=vmem, size = 0x20000, scoped, tag = 'scratch operand']
  %s0 = inlined_call_operand.vmem [shape: bf16[512,32], index: 0, kind: input, shape index: {}]
  %s1 = inlined_call_operand.vmem [shape: bf16[32,104], index: 1, kind: input, shape index: {}]
  %s2 = inlined_call_operand.vmem [shape: f32[1,104], index: 2, kind: input, shape index: {}]
  %s3 = inlined_call_operand.vmem [shape: f32[512,104], index: 3, kind: output, shape index: {}]
  %s4 = sld [smem:[#allocation0]]
  $region53: #{conv_lora_qkv_forward.2} parent=0
    _
  %s6 = ssub.s32 1, %s4
  %s7 = scalar_select 0, %s6, %s4
  loop: start=0, step=1, limit=4
  $region2: #{conv_lora_qkv_forward.2} parent=0 // loop_pre_header
    _
  $region3: #{conv_lora_qkv_forward.2} parent=0 // loop_header
    %s9 = sphi 0, %s13
    %p10 = scmp.ge.s32.totalorder %s9, 4
    %s16 = sphi 0, %s35
    %s17 = sphi 0, %s31
    %s18 = sphi 0, %s27
    %s19 = sphi 0, %s16
    %s20 = sphi 0, %s17
    %s21 = sphi 0, %s18
    %s22 = sphi 0, %s19
    %s23 = sphi 0, %s20
    %s24 = sphi 0, %s21
    %s40 = sphi 0, %s42
    %s43 = sphi 0, %s40
    %s44 = sphi 0, %s43
    %s60 = sphi 0, %s44
    %s68 = sphi 0, %s70
    %s71 = sphi 0, %s68
    %s72 = sphi 0, %s71
    %s88 = sphi 0, %s72
    %s94 = sphi 0, %s96
    %s97 = sphi 0, %s94
    %s98 = sphi 0, %s97
    %s114 = sphi 0, %s98
    %s122 = sphi 0, %s124
    %s125 = sphi 0, %s122
    %s126 = sphi 0, %s125
    %s142 = sphi 0, %s126
  $region4: #{conv_lora_qkv_forward.2} parent=0 // loop_header_branch
    %12 = sbr.rel (%p10) target = $region8
  $region5: #{conv_lora_qkv_forward.2} parent=0 // loop_body
    %s14 = ssub.s32 %s9, 1
    %s15 = ssub.s32 %s9, 2
    %s25 = sadd.s32 1, %s18
    %p26 = scmp.ge.s32.totalorder %s25, 1
    %s27 = scalar_select %p26, 0, %s25
    %s28 = sadd.s32 1, %s17
    %s29 = scalar_select %p26, %s28, %s17
    %p30 = scmp.ge.s32.totalorder %s29, 1
    %s31 = scalar_select %p30, 0, %s29
    %s32 = sadd.s32 1, %s16
    %s33 = scalar_select %p30, %s32, %s16
    %p34 = scmp.ge.s32.totalorder %s33, 2
    %s35 = scalar_select %p34, 0, %s33
    %s36 = ssub.s32 %s16, %s35
    %s37 = ssub.s32 %s18, %s27
    %s38 = sor.u32 %s36, %s37
    %p39 = scmp.eq.s32.totalorder %s38, 0
    %s41 = sadd.s32 %s40, 1
    %s42 = scalar_select %p39, %s40, %s41
    %p45 = pneg %p39
    %p46 = scmp.eq.s32.totalorder %s9, 1
    %p47 = por %p45, %p46
    %p48 = scmp.ne.s32.totalorder %s40, %s43
    %p49 = scmp.eq.s32.totalorder %s9, 0
    %p50 = por %p48, %p49
    %p51 = scmp.ne.s32.totalorder %s40, %s43
    %p52 = scmp.eq.s32.totalorder %s14, 1
    %p53 = por %p51, %p52
    %p54 = scmp.ne.s32.totalorder %s43, %s44
    %p55 = scmp.eq.s32.totalorder %s14, 0
    %p56 = por %p54, %p55
    %p57 = scmp.ne.s32.totalorder %s43, %s44
    %p58 = scmp.eq.s32.totalorder %s15, 1
    %p59 = por %p57, %p58
    %p61 = scmp.ne.s32.totalorder %s44, %s60
    %p62 = scmp.eq.s32.totalorder %s15, 0
    %p63 = por %p61, %p62
    %s64 = ssub.s32 %s18, %s27
    %s65 = ssub.s32 %s17, %s31
    %s66 = sor.u32 %s64, %s65
    %p67 = scmp.eq.s32.totalorder %s66, 0
    %s69 = sadd.s32 %s68, 1
    %s70 = scalar_select %p67, %s68, %s69
    %p73 = pneg %p67
    %p74 = scmp.eq.s32.totalorder %s9, 1
    %p75 = por %p73, %p74
    %p76 = scmp.ne.s32.totalorder %s68, %s71
    %p77 = scmp.eq.s32.totalorder %s9, 0
    %p78 = por %p76, %p77
    %p79 = scmp.ne.s32.totalorder %s68, %s71
    %p80 = scmp.eq.s32.totalorder %s14, 1
    %p81 = por %p79, %p80
    %p82 = scmp.ne.s32.totalorder %s71, %s72
    %p83 = scmp.eq.s32.totalorder %s14, 0
    %p84 = por %p82, %p83
    %p85 = scmp.ne.s32.totalorder %s71, %s72
    %p86 = scmp.eq.s32.totalorder %s15, 1
    %p87 = por %p85, %p86
    %p89 = scmp.ne.s32.totalorder %s72, %s88
    %p90 = scmp.eq.s32.totalorder %s15, 0
    %p91 = por %p89, %p90
    %s92 = ssub.s32 %s17, %s31
    %p93 = scmp.eq.s32.totalorder %s92, 0
    %s95 = sadd.s32 %s94, 1
    %s96 = scalar_select %p93, %s94, %s95
    %p99 = pneg %p93
    %p100 = scmp.eq.s32.totalorder %s9, 1
    %p101 = por %p99, %p100
    %p102 = scmp.ne.s32.totalorder %s94, %s97
    %p103 = scmp.eq.s32.totalorder %s9, 0
    %p104 = por %p102, %p103
    %p105 = scmp.ne.s32.totalorder %s94, %s97
    %p106 = scmp.eq.s32.totalorder %s14, 1
    %p107 = por %p105, %p106
    %p108 = scmp.ne.s32.totalorder %s97, %s98
    %p109 = scmp.eq.s32.totalorder %s14, 0
    %p110 = por %p108, %p109
    %p111 = scmp.ne.s32.totalorder %s97, %s98
    %p112 = scmp.eq.s32.totalorder %s15, 1
    %p113 = por %p111, %p112
    %p115 = scmp.ne.s32.totalorder %s98, %s114
    %p116 = scmp.eq.s32.totalorder %s15, 0
    %p117 = por %p115, %p116
    %s118 = ssub.s32 %s16, %s35
    %s119 = ssub.s32 %s17, %s31
    %s120 = sor.u32 %s118, %s119
    %p121 = scmp.eq.s32.totalorder %s120, 0
    %s123 = sadd.s32 %s122, 1
    %s124 = scalar_select %p121, %s122, %s123
    %p127 = pneg %p121
    %p128 = scmp.eq.s32.totalorder %s9, 1
    %p129 = por %p127, %p128
    %p130 = scmp.ne.s32.totalorder %s122, %s125
    %p131 = scmp.eq.s32.totalorder %s9, 0
    %p132 = por %p130, %p131
    %p133 = scmp.ne.s32.totalorder %s122, %s125
    %p134 = scmp.eq.s32.totalorder %s14, 1
    %p135 = por %p133, %p134
    %p136 = scmp.ne.s32.totalorder %s125, %s126
    %p137 = scmp.eq.s32.totalorder %s14, 0
    %p138 = por %p136, %p137
    %p139 = scmp.ne.s32.totalorder %s125, %s126
    %p140 = scmp.eq.s32.totalorder %s15, 1
    %p141 = por %p139, %p140
    %p143 = scmp.ne.s32.totalorder %s126, %s142
    %p144 = scmp.eq.s32.totalorder %s15, 0
    %p145 = por %p143, %p144
    %p146 = scmp.le.s32.totalorder 1, %s9
    %p147 = scmp.lt.s32.totalorder %s9, 3
    %p148 = pnand %p146, %p147
    %p149 = pneg %p148
    // Predicated region
    $region9: #{conv_lora_qkv_forward.2} parent=5 // pred_check
      _
    $region10: #{conv_lora_qkv_forward.2} parent=5 // pred_check_branch
      %151 = sbr.rel (%p148) target = $region12
    $region11: #{conv_lora_qkv_forward.2} parent=5 // pred_region
      %s152 = ssub.s32 %s9, 1
      // Predicated region
      $region13: #{conv_lora_qkv_forward.2} parent=11 // pred_check
        %p153 = pneg %p84
      $region14: #{conv_lora_qkv_forward.2} parent=11 // pred_check_branch
        %155 = sbr.rel (%p153) target = $region16
      $region15: #{conv_lora_qkv_forward.2} parent=11 // pred_region
        %s156 = smul.u32 4, %s21
        %p157 = scmp.lt.s32.totalorder %s156, 3
        %s158 = scalar_select %p157, %s156, 3
        %p159 = scmp.lt.s32.totalorder %s20, 0
        %s160 = scalar_select %p159, %s20, 0
        %s161 = sadd.s32 %s160, %s158
        %s162 = smul.addr %s161, 4
        %s163 = scalar_lea.vmem %s1, %s162
        %s164 = smul.u32 4, %s21
      $region16: #{conv_lora_qkv_forward.2} parent=11 // pred_fallthru
        _
      // Predicated region
      $region17: #{conv_lora_qkv_forward.2} parent=11 // pred_check
        %p165 = pneg %p110
      $region18: #{conv_lora_qkv_forward.2} parent=11 // pred_check_branch
        %167 = sbr.rel (%p165) target = $region20
      $region19: #{conv_lora_qkv_forward.2} parent=11 // pred_region
        %p168 = scmp.lt.s32.totalorder %s20, 0
        %s169 = scalar_select %p168, %s20, 0
        %s170 = scalar_lea.vmem %s2, %s169
      $region20: #{conv_lora_qkv_forward.2} parent=11 // pred_fallthru
        _
    $region12: #{conv_lora_qkv_forward.2} parent=5 // pred_fallthru
      _
    %p171 = scmp.lt.s32.totalorder %s9, 2
    // Predicated region
    $region21: #{conv_lora_qkv_forward.2} parent=5 // pred_check
      %p172 = pneg %p171
    $region22: #{conv_lora_qkv_forward.2} parent=5 // pred_check_branch
      %174 = sbr.rel (%p172) target = $region24
    $region23: #{conv_lora_qkv_forward.2} parent=5 // pred_region
      // Predicated region
      $region25: #{conv_lora_qkv_forward.2} parent=23 // pred_check
        %p175 = pneg %p50
      $region26: #{conv_lora_qkv_forward.2} parent=23 // pred_check_branch
        %177 = sbr.rel (%p175) target = $region28
      $region27: #{conv_lora_qkv_forward.2} parent=23 // pred_region
        %s178 = smul.u32 32, %s16
        %p179 = scmp.lt.s32.totalorder %s178, 63
        %s180 = scalar_select %p179, %s178, 63
        %p181 = scmp.lt.s32.totalorder %s18, 0
        %s182 = scalar_select %p181, %s18, 0
        %s183 = sadd.s32 %s182, %s180
        %s184 = smul.addr %s183, 4
        %s185 = scalar_lea.vmem %s0, %s184
        %s186 = smul.u32 32, %s16
      $region28: #{conv_lora_qkv_forward.2} parent=23 // pred_fallthru
        _
    $region24: #{conv_lora_qkv_forward.2} parent=5 // pred_fallthru
      _
    %p187 = scmp.le.s32.totalorder 1, %s9
    %p188 = scmp.lt.s32.totalorder %s9, 3
    %p189 = pnand %p187, %p188
    %p190 = pneg %p189
    // Predicated region
    $region29: #{conv_lora_qkv_forward.2} parent=5 // pred_check
      _
    $region30: #{conv_lora_qkv_forward.2} parent=5 // pred_check_branch
      %192 = sbr.rel (%p189) target = $region32
    $region31: #{conv_lora_qkv_forward.2} parent=5 // pred_region
      %s193 = ssub.s32 %s9, 1
      %s194 = smul.u32 32, %s19
      %p195 = scmp.lt.s32.totalorder %s194, 63
      %s196 = scalar_select %p195, %s194, 63
      %p197 = scmp.lt.s32.totalorder %s21, 0
      %s198 = scalar_select %p197, %s21, 0
      %s199 = sadd.s32 %s198, %s196
      %s200 = smul.addr %s199, 4
      %s201 = scalar_lea.vmem %s0, %s200
      %p202 = pneg %p56
      %p203 = pneg %p53
      %s204 = smul.u32 4, %s21
      %p205 = scmp.lt.s32.totalorder %s204, 3
      %s206 = scalar_select %p205, %s204, 3
      %p207 = scmp.lt.s32.totalorder %s20, 0
      %s208 = scalar_select %p207, %s20, 0
      %s209 = sadd.s32 %s208, %s206
      %s210 = smul.addr %s209, 4
      %s211 = scalar_lea.vmem %s1, %s210
      %p212 = pneg %p84
      %p213 = pneg %p81
      %p214 = scmp.lt.s32.totalorder %s20, 0
      %s215 = scalar_select %p214, %s20, 0
      %s216 = scalar_lea.vmem %s2, %s215
      %p217 = pneg %p110
      %p218 = pneg %p107
      %p219 = pneg %p138
      %p220 = pneg %p135
      %s221 = smul.u32 32, %s19
      %p222 = scmp.lt.s32.totalorder %s221, 63
      %s223 = scalar_select %p222, %s221, 63
      %p224 = scmp.lt.s32.totalorder %s20, 0
      %s225 = scalar_select %p224, %s20, 0
      %s226 = sadd.s32 %s225, %s223
      %s227 = smul.addr %s226, 8
      %s228 = scalar_lea.vmem %s3, %s227
      %s229 = smul.u32 32, %s19
      %p230 = scmp.lt.s32.totalorder %s229, 63
      %s231 = scalar_select %p230, %s229, 63
      %p232 = scmp.lt.s32.totalorder %s21, 0
      %s233 = scalar_select %p232, %s21, 0
      %s234 = sadd.s32 %s233, %s231
      %s235 = smul.addr %s234, 4
      %s236 = scalar_lea.vmem %s0, %s235
      %s237 = smul.u32 32, %s19
      %s238 = smul.u32 4, %s21
      %p239 = scmp.lt.s32.totalorder %s238, 3
      %s240 = scalar_select %p239, %s238, 3
      %p241 = scmp.lt.s32.totalorder %s20, 0
      %s242 = scalar_select %p241, %s20, 0
      %s243 = sadd.s32 %s242, %s240
      %s244 = smul.addr %s243, 4
      %s245 = scalar_lea.vmem %s1, %s244
      %s246 = smul.u32 4, %s21
      %p247 = scmp.lt.s32.totalorder %s20, 0
      %s248 = scalar_select %p247, %s20, 0
      %s249 = scalar_lea.vmem %s2, %s248
      %s250 = smul.u32 32, %s19
      %p251 = scmp.lt.s32.totalorder %s250, 63
      %s252 = scalar_select %p251, %s250, 63
      %p253 = scmp.lt.s32.totalorder %s20, 0
      %s254 = scalar_select %p253, %s20, 0
      %s255 = sadd.s32 %s254, %s252
      %s256 = smul.addr %s255, 8
      %s257 = scalar_lea.vmem %s3, %s256
      %s258 = smul.u32 32, %s19
      %p260 = scmp.eq.s32.totalorder %s21, 0
      // Predicated region
      $region33: #{conv_lora_qkv_forward.2} parent=31 // pred_check
        %p261 = pneg %p260
      $region34: #{conv_lora_qkv_forward.2} parent=31 // pred_check_branch
        %263 = sbr.rel (%p261) target = $region36
      $region35: #{conv_lora_qkv_forward.2} parent=31 // pred_region
        %vm264 = vcmask 850944
        %265 = vst.msk [vmem:[#allocation2] sm:$0xff] %vm264, 0.0
        %266 = vst.msk [vmem:[#allocation2 + $0x8] sm:$0xff] %vm264, 0.0
        %267 = vst.msk [vmem:[#allocation2 + $0x10] sm:$0xff] %vm264, 0.0
        %268 = vst.msk [vmem:[#allocation2 + $0x18] sm:$0xff] %vm264, 0.0
        %269 = vst.msk [vmem:[#allocation2 + $0x20] sm:$0xff] %vm264, 0.0
        %270 = vst.msk [vmem:[#allocation2 + $0x28] sm:$0xff] %vm264, 0.0
        %271 = vst.msk [vmem:[#allocation2 + $0x30] sm:$0xff] %vm264, 0.0
        %272 = vst.msk [vmem:[#allocation2 + $0x38] sm:$0xff] %vm264, 0.0
        %273 = vst.msk [vmem:[#allocation2 + $0x40] sm:$0xff] %vm264, 0.0
        %274 = vst.msk [vmem:[#allocation2 + $0x48] sm:$0xff] %vm264, 0.0
        %275 = vst.msk [vmem:[#allocation2 + $0x50] sm:$0xff] %vm264, 0.0
        %276 = vst.msk [vmem:[#allocation2 + $0x58] sm:$0xff] %vm264, 0.0
        %277 = vst.msk [vmem:[#allocation2 + $0x60] sm:$0xff] %vm264, 0.0
        %278 = vst.msk [vmem:[#allocation2 + $0x68] sm:$0xff] %vm264, 0.0
        %279 = vst.msk [vmem:[#allocation2 + $0x70] sm:$0xff] %vm264, 0.0
        %280 = vst.msk [vmem:[#allocation2 + $0x78] sm:$0xff] %vm264, 0.0
        %281 = vst.msk [vmem:[#allocation2 + $0x80] sm:$0xff] %vm264, 0.0
        %282 = vst.msk [vmem:[#allocation2 + $0x88] sm:$0xff] %vm264, 0.0
        %283 = vst.msk [vmem:[#allocation2 + $0x90] sm:$0xff] %vm264, 0.0
        %284 = vst.msk [vmem:[#allocation2 + $0x98] sm:$0xff] %vm264, 0.0
        %285 = vst.msk [vmem:[#allocation2 + $0xa0] sm:$0xff] %vm264, 0.0
        %286 = vst.msk [vmem:[#allocation2 + $0xa8] sm:$0xff] %vm264, 0.0
        %287 = vst.msk [vmem:[#allocation2 + $0xb0] sm:$0xff] %vm264, 0.0
        %288 = vst.msk [vmem:[#allocation2 + $0xb8] sm:$0xff] %vm264, 0.0
        %289 = vst.msk [vmem:[#allocation2 + $0xc0] sm:$0xff] %vm264, 0.0
        %290 = vst.msk [vmem:[#allocation2 + $0xc8] sm:$0xff] %vm264, 0.0
        %291 = vst.msk [vmem:[#allocation2 + $0xd0] sm:$0xff] %vm264, 0.0
        %292 = vst.msk [vmem:[#allocation2 + $0xd8] sm:$0xff] %vm264, 0.0
        %293 = vst.msk [vmem:[#allocation2 + $0xe0] sm:$0xff] %vm264, 0.0
        %294 = vst.msk [vmem:[#allocation2 + $0xe8] sm:$0xff] %vm264, 0.0
        %295 = vst.msk [vmem:[#allocation2 + $0xf0] sm:$0xff] %vm264, 0.0
        %296 = vst.msk [vmem:[#allocation2 + $0xf8] sm:$0xff] %vm264, 0.0
      $region36: #{conv_lora_qkv_forward.2} parent=31 // pred_fallthru
        _
      %v297 = vld [vmem:[#allocation2] sm:$0xff]
      %v298 = vld [vmem:[#allocation2 + $0x8] sm:$0xff]
      %v299 = vld [vmem:[#allocation2 + $0x10] sm:$0xff]
      %v300 = vld [vmem:[#allocation2 + $0x18] sm:$0xff]
      %v301 = vld [vmem:[#allocation2 + $0x20] sm:$0xff]
      %v302 = vld [vmem:[#allocation2 + $0x28] sm:$0xff]
      %v303 = vld [vmem:[#allocation2 + $0x30] sm:$0xff]
      %v304 = vld [vmem:[#allocation2 + $0x38] sm:$0xff]
      %v305 = vld [vmem:[#allocation2 + $0x40] sm:$0xff]
      %v306 = vld [vmem:[#allocation2 + $0x48] sm:$0xff]
      %v307 = vld [vmem:[#allocation2 + $0x50] sm:$0xff]
      %v308 = vld [vmem:[#allocation2 + $0x58] sm:$0xff]
      %v309 = vld [vmem:[#allocation2 + $0x60] sm:$0xff]
      %v310 = vld [vmem:[#allocation2 + $0x68] sm:$0xff]
      %v311 = vld [vmem:[#allocation2 + $0x70] sm:$0xff]
      %v312 = vld [vmem:[#allocation2 + $0x78] sm:$0xff]
      %v313 = vld [vmem:[#allocation2 + $0x80] sm:$0xff]
      %v314 = vld [vmem:[#allocation2 + $0x88] sm:$0xff]
      %v315 = vld [vmem:[#allocation2 + $0x90] sm:$0xff]
      %v316 = vld [vmem:[#allocation2 + $0x98] sm:$0xff]
      %v317 = vld [vmem:[#allocation2 + $0xa0] sm:$0xff]
      %v318 = vld [vmem:[#allocation2 + $0xa8] sm:$0xff]
      %v319 = vld [vmem:[#allocation2 + $0xb0] sm:$0xff]
      %v320 = vld [vmem:[#allocation2 + $0xb8] sm:$0xff]
      %v321 = vld [vmem:[#allocation2 + $0xc0] sm:$0xff]
      %v322 = vld [vmem:[#allocation2 + $0xc8] sm:$0xff]
      %v323 = vld [vmem:[#allocation2 + $0xd0] sm:$0xff]
      %v324 = vld [vmem:[#allocation2 + $0xd8] sm:$0xff]
      %v325 = vld [vmem:[#allocation2 + $0xe0] sm:$0xff]
      %v326 = vld [vmem:[#allocation2 + $0xe8] sm:$0xff]
      %v327 = vld [vmem:[#allocation2 + $0xf0] sm:$0xff]
      %v328 = vld [vmem:[#allocation2 + $0xf8] sm:$0xff]
      %v329 = vld [vmem:[%s236] sm:$0xf]
      %v330 = vld [vmem:[%s236 + $0x4] sm:$0xf]
      %v331 = vld [vmem:[%s236 + $0x8] sm:$0xf]
      %v332 = vld [vmem:[%s236 + $0xc] sm:$0xf]
      %v333 = vld [vmem:[%s236 + $0x10] sm:$0xf]
      %v334 = vld [vmem:[%s236 + $0x14] sm:$0xf]
      %v335 = vld [vmem:[%s236 + $0x18] sm:$0xf]
      %v336 = vld [vmem:[%s236 + $0x1c] sm:$0xf]
      %v337 = vld [vmem:[%s236 + $0x20] sm:$0xf]
      %v338 = vld [vmem:[%s236 + $0x24] sm:$0xf]
      %v339 = vld [vmem:[%s236 + $0x28] sm:$0xf]
      %v340 = vld [vmem:[%s236 + $0x2c] sm:$0xf]
      %v341 = vld [vmem:[%s236 + $0x30] sm:$0xf]
      %v342 = vld [vmem:[%s236 + $0x34] sm:$0xf]
      %v343 = vld [vmem:[%s236 + $0x38] sm:$0xf]
      %v344 = vld [vmem:[%s236 + $0x3c] sm:$0xf]
      %v345 = vld [vmem:[%s236 + $0x40] sm:$0xf]
      %v346 = vld [vmem:[%s236 + $0x44] sm:$0xf]
      %v347 = vld [vmem:[%s236 + $0x48] sm:$0xf]
      %v348 = vld [vmem:[%s236 + $0x4c] sm:$0xf]
      %v349 = vld [vmem:[%s236 + $0x50] sm:$0xf]
      %v350 = vld [vmem:[%s236 + $0x54] sm:$0xf]
      %v351 = vld [vmem:[%s236 + $0x58] sm:$0xf]
      %v352 = vld [vmem:[%s236 + $0x5c] sm:$0xf]
      %v353 = vld [vmem:[%s236 + $0x60] sm:$0xf]
      %v354 = vld [vmem:[%s236 + $0x64] sm:$0xf]
      %v355 = vld [vmem:[%s236 + $0x68] sm:$0xf]
      %v356 = vld [vmem:[%s236 + $0x6c] sm:$0xf]
      %v357 = vld [vmem:[%s236 + $0x70] sm:$0xf]
      %v358 = vld [vmem:[%s236 + $0x74] sm:$0xf]
      %v359 = vld [vmem:[%s236 + $0x78] sm:$0xf]
      %v360 = vld [vmem:[%s236 + $0x7c] sm:$0xf]
      %v361 = vld [vmem:[%s245] sm:$0xf]
      %v362 = vld [vmem:[%s245 + $0x4] sm:$0xf]
      %v363 = vld [vmem:[%s245 + $0x8] sm:$0xf]
      %v364 = vld [vmem:[%s245 + $0xc] sm:$0xf]
      %v397 = vunpack.c.l.b16 %v329
      %v398 = vunpack.c.l.b16 %v330
      %v399 = vunpack.c.l.b16 %v331
      %v400 = vunpack.c.l.b16 %v332
      %v401 = vunpack.c.l.b16 %v333
      %v402 = vunpack.c.l.b16 %v334
      %v403 = vunpack.c.l.b16 %v335
      %v404 = vunpack.c.l.b16 %v336
      %v405 = vunpack.c.l.b16 %v337
      %v406 = vunpack.c.l.b16 %v338
      %v407 = vunpack.c.l.b16 %v339
      %v408 = vunpack.c.l.b16 %v340
      %v409 = vunpack.c.l.b16 %v341
      %v410 = vunpack.c.l.b16 %v342
      %v411 = vunpack.c.l.b16 %v343
      %v412 = vunpack.c.l.b16 %v344
      %v413 = vunpack.c.l.b16 %v345
      %v414 = vunpack.c.l.b16 %v346
      %v415 = vunpack.c.l.b16 %v347
      %v416 = vunpack.c.l.b16 %v348
      %v417 = vunpack.c.l.b16 %v349
      %v418 = vunpack.c.l.b16 %v350
      %v419 = vunpack.c.l.b16 %v351
      %v420 = vunpack.c.l.b16 %v352
      %v421 = vunpack.c.l.b16 %v353
      %v422 = vunpack.c.l.b16 %v354
      %v423 = vunpack.c.l.b16 %v355
      %v424 = vunpack.c.l.b16 %v356
      %v425 = vunpack.c.l.b16 %v357
      %v426 = vunpack.c.l.b16 %v358
      %v427 = vunpack.c.l.b16 %v359
      %v428 = vunpack.c.l.b16 %v360
      %v429 = vpack.c.b16 %v398, %v397
      %v430 = vpack.c.b16 %v400, %v399
      %v431 = vpack.c.b16 %v402, %v401
      %v432 = vpack.c.b16 %v404, %v403
      %v433 = vpack.c.b16 %v406, %v405
      %v434 = vpack.c.b16 %v408, %v407
      %v435 = vpack.c.b16 %v410, %v409
      %v436 = vpack.c.b16 %v412, %v411
      %v437 = vpack.c.b16 %v414, %v413
      %v438 = vpack.c.b16 %v416, %v415
      %v439 = vpack.c.b16 %v418, %v417
      %v440 = vpack.c.b16 %v420, %v419
      %v441 = vpack.c.b16 %v422, %v421
      %v442 = vpack.c.b16 %v424, %v423
      %v443 = vpack.c.b16 %v426, %v425
      %v444 = vpack.c.b16 %v428, %v427
      %v449 = vunpack.c.l.b16 %v361
      %v450 = vunpack.c.l.b16 %v362
      %v451 = vunpack.c.l.b16 %v363
      %v452 = vunpack.c.l.b16 %v364
      %v453 = vpack.c.b16 %v450, %v449
      %v454 = vpack.c.b16 %v452, %v451
      %vm457 = vcmask 261120
      %v459 = vsel %vm457, %v429, 0
      %v462 = vsel %vm457, %v430, 0
      %v465 = vsel %vm457, %v431, 0
      %v468 = vsel %vm457, %v432, 0
      %v471 = vsel %vm457, %v433, 0
      %v474 = vsel %vm457, %v434, 0
      %v477 = vsel %vm457, %v435, 0
      %v480 = vsel %vm457, %v436, 0
      %v483 = vsel %vm457, %v437, 0
      %v486 = vsel %vm457, %v438, 0
      %v489 = vsel %vm457, %v439, 0
      %v492 = vsel %vm457, %v440, 0
      %v495 = vsel %vm457, %v441, 0
      %v498 = vsel %vm457, %v442, 0
      %v501 = vsel %vm457, %v443, 0
      %v504 = vsel %vm457, %v444, 0
      %506 = vmatprep.subr.bf16.mxu0 0
      %507 = vmatpush1.bf16.msra.mxu0 %v453
      %508 = vmatprep.subr.bf16.mxu0 0
      %509 = vmatpush1.bf16.msra.mxu0 %v454
      %510 = vmatprep.subr.bf16.mxu0 0
      %511 = vmatpush1.bf16.msra.mxu0 0
      %512 = vmatprep.subr.bf16.mxu0 0
      %513 = vmatpush1.bf16.msra.mxu0 0
      %514 = vmatprep.subr.bf16.mxu0 0
      %515 = vmatpush1.bf16.msra.mxu0 0
      %516 = vmatprep.subr.bf16.mxu0 0
      %517 = vmatpush1.bf16.msra.mxu0 0
      %518 = vmatprep.subr.bf16.mxu0 0
      %519 = vmatpush1.bf16.msra.mxu0 0
      %520 = vmatprep.subr.bf16.mxu0 0
      %521 = vmatpush1.bf16.msra.mxu0 0
      %522 = vmatprep.subr.bf16.mxu0 0
      %523 = vmatpush1.bf16.msra.mxu0 0
      %524 = vmatprep.subr.bf16.mxu0 0
      %525 = vmatpush1.bf16.msra.mxu0 0
      %526 = vmatprep.subr.bf16.mxu0 0
      %527 = vmatpush1.bf16.msra.mxu0 0
      %528 = vmatprep.subr.bf16.mxu0 0
      %529 = vmatpush1.bf16.msra.mxu0 0
      %530 = vmatprep.subr.bf16.mxu0 0
      %531 = vmatpush1.bf16.msra.mxu0 0
      %532 = vmatprep.subr.bf16.mxu0 0
      %533 = vmatpush1.bf16.msra.mxu0 0
      %534 = vmatprep.subr.bf16.mxu0 0
      %535 = vmatpush1.bf16.msra.mxu0 0
      %536 = vmatprep.subr.bf16.mxu0 0
      %537 = vmatpush1.bf16.msra.mxu0 0
      %538 = vmatprep.mubr.bf16.mxu0 0
      %539 = vmatmul.mubr.bf16.gmra.mrb[0].mxu0 %v459
      %v540 = vpop.f32.mrb[0].mxu0
      %v541 = vadd.f32 0.0, %v540
      %v542 = vpop.f32.mrb[0].mxu0
      %v543 = vpop.f32.mrb[0].mxu0
      %v544 = vadd.f32 0.0, %v543
      %v545 = vpop.f32.mrb[0].mxu0
      %546 = vmatprep.mubr.bf16.mxu0 0
      %547 = vmatmul.mubr.bf16.gmra.mrb[0].mxu0 %v462
      %v548 = vpop.f32.mrb[0].mxu0
      %v549 = vadd.f32 0.0, %v548
      %v550 = vpop.f32.mrb[0].mxu0
      %v551 = vpop.f32.mrb[0].mxu0
      %v552 = vadd.f32 0.0, %v551
      %v553 = vpop.f32.mrb[0].mxu0
      %554 = vmatprep.mubr.bf16.mxu0 0
      %555 = vmatmul.mubr.bf16.gmra.mrb[0].mxu0 %v465
      %v556 = vpop.f32.mrb[0].mxu0
      %v557 = vadd.f32 0.0, %v556
      %v558 = vpop.f32.mrb[0].mxu0
      %v559 = vpop.f32.mrb[0].mxu0
      %v560 = vadd.f32 0.0, %v559
      %v561 = vpop.f32.mrb[0].mxu0
      %562 = vmatprep.mubr.bf16.mxu0 0
      %563 = vmatmul.mubr.bf16.gmra.mrb[0].mxu0 %v468
      %v564 = vpop.f32.mrb[0].mxu0
      %v565 = vadd.f32 0.0, %v564
      %v566 = vpop.f32.mrb[0].mxu0
      %v567 = vpop.f32.mrb[0].mxu0
      %v568 = vadd.f32 0.0, %v567
      %v569 = vpop.f32.mrb[0].mxu0
      %570 = vmatprep.mubr.bf16.mxu0 0
      %571 = vmatmul.mubr.bf16.gmra.mrb[0].mxu0 %v471
      %v572 = vpop.f32.mrb[0].mxu0
      %v573 = vadd.f32 0.0, %v572
      %v574 = vpop.f32.mrb[0].mxu0
      %v575 = vpop.f32.mrb[0].mxu0
      %v576 = vadd.f32 0.0, %v575
      %v577 = vpop.f32.mrb[0].mxu0
      %578 = vmatprep.mubr.bf16.mxu0 0
      %579 = vmatmul.mubr.bf16.gmra.mrb[0].mxu0 %v474
      %v580 = vpop.f32.mrb[0].mxu0
      %v581 = vadd.f32 0.0, %v580
      %v582 = vpop.f32.mrb[0].mxu0
      %v583 = vpop.f32.mrb[0].mxu0
      %v584 = vadd.f32 0.0, %v583
      %v585 = vpop.f32.mrb[0].mxu0
      %586 = vmatprep.mubr.bf16.mxu0 0
      %587 = vmatmul.mubr.bf16.gmra.mrb[0].mxu0 %v477
      %v588 = vpop.f32.mrb[0].mxu0
      %v589 = vadd.f32 0.0, %v588
      %v590 = vpop.f32.mrb[0].mxu0
      %v591 = vpop.f32.mrb[0].mxu0
      %v592 = vadd.f32 0.0, %v591
      %v593 = vpop.f32.mrb[0].mxu0
      %594 = vmatprep.mubr.bf16.mxu0 0
      %595 = vmatmul.mubr.bf16.gmra.mrb[0].mxu0 %v480
      %v596 = vpop.f32.mrb[0].mxu0
      %v597 = vadd.f32 0.0, %v596
      %v598 = vpop.f32.mrb[0].mxu0
      %v599 = vpop.f32.mrb[0].mxu0
      %v600 = vadd.f32 0.0, %v599
      %v601 = vpop.f32.mrb[0].mxu0
      %602 = vmatprep.mubr.bf16.mxu0 0
      %603 = vmatmul.mubr.bf16.gmra.mrb[0].mxu0 %v483
      %v604 = vpop.f32.mrb[0].mxu0
      %v605 = vadd.f32 0.0, %v604
      %v606 = vpop.f32.mrb[0].mxu0
      %v607 = vpop.f32.mrb[0].mxu0
      %v608 = vadd.f32 0.0, %v607
      %v609 = vpop.f32.mrb[0].mxu0
      %610 = vmatprep.mubr.bf16.mxu0 0
      %611 = vmatmul.mubr.bf16.gmra.mrb[0].mxu0 %v486
      %v612 = vpop.f32.mrb[0].mxu0
      %v613 = vadd.f32 0.0, %v612
      %v614 = vpop.f32.mrb[0].mxu0
      %v615 = vpop.f32.mrb[0].mxu0
      %v616 = vadd.f32 0.0, %v615
      %v617 = vpop.f32.mrb[0].mxu0
      %618 = vmatprep.mubr.bf16.mxu0 0
      %619 = vmatmul.mubr.bf16.gmra.mrb[0].mxu0 %v489
      %v620 = vpop.f32.mrb[0].mxu0
      %v621 = vadd.f32 0.0, %v620
      %v622 = vpop.f32.mrb[0].mxu0
      %v623 = vpop.f32.mrb[0].mxu0
      %v624 = vadd.f32 0.0, %v623
      %v625 = vpop.f32.mrb[0].mxu0
      %626 = vmatprep.mubr.bf16.mxu0 0
      %627 = vmatmul.mubr.bf16.gmra.mrb[0].mxu0 %v492
      %v628 = vpop.f32.mrb[0].mxu0
      %v629 = vadd.f32 0.0, %v628
      %v630 = vpop.f32.mrb[0].mxu0
      %v631 = vpop.f32.mrb[0].mxu0
      %v632 = vadd.f32 0.0, %v631
      %v633 = vpop.f32.mrb[0].mxu0
      %634 = vmatprep.mubr.bf16.mxu0 0
      %635 = vmatmul.mubr.bf16.gmra.mrb[0].mxu0 %v495
      %v636 = vpop.f32.mrb[0].mxu0
      %v637 = vadd.f32 0.0, %v636
      %v638 = vpop.f32.mrb[0].mxu0
      %v639 = vpop.f32.mrb[0].mxu0
      %v640 = vadd.f32 0.0, %v639
      %v641 = vpop.f32.mrb[0].mxu0
      %642 = vmatprep.mubr.bf16.mxu0 0
      %643 = vmatmul.mubr.bf16.gmra.mrb[0].mxu0 %v498
      %v644 = vpop.f32.mrb[0].mxu0
      %v645 = vadd.f32 0.0, %v644
      %v646 = vpop.f32.mrb[0].mxu0
      %v647 = vpop.f32.mrb[0].mxu0
      %v648 = vadd.f32 0.0, %v647
      %v649 = vpop.f32.mrb[0].mxu0
      %650 = vmatprep.mubr.bf16.mxu0 0
      %651 = vmatmul.mubr.bf16.gmra.mrb[0].mxu0 %v501
      %v652 = vpop.f32.mrb[0].mxu0
      %v653 = vadd.f32 0.0, %v652
      %v654 = vpop.f32.mrb[0].mxu0
      %v655 = vpop.f32.mrb[0].mxu0
      %v656 = vadd.f32 0.0, %v655
      %v657 = vpop.f32.mrb[0].mxu0
      %658 = vmatprep.mubr.bf16.mxu0 0
      %659 = vmatmul.mubr.bf16.gmra.mrb[0].mxu0 %v504
      %v660 = vpop.f32.mrb[0].mxu0
      %v661 = vadd.f32 0.0, %v660
      %v662 = vpop.f32.mrb[0].mxu0
      %v663 = vpop.f32.mrb[0].mxu0
      %v664 = vadd.f32 0.0, %v663
      %v665 = vpop.f32.mrb[0].mxu0
      %666 = vdwg.mxu0
      %v667 = vadd.f32 %v297, %v541
      %v668 = vadd.f32 %v298, %v544
      %v669 = vadd.f32 %v299, %v549
      %v670 = vadd.f32 %v300, %v552
      %v671 = vadd.f32 %v301, %v557
      %v672 = vadd.f32 %v302, %v560
      %v673 = vadd.f32 %v303, %v565
      %v674 = vadd.f32 %v304, %v568
      %v675 = vadd.f32 %v305, %v573
      %v676 = vadd.f32 %v306, %v576
      %v677 = vadd.f32 %v307, %v581
      %v678 = vadd.f32 %v308, %v584
      %v679 = vadd.f32 %v309, %v589
      %v680 = vadd.f32 %v310, %v592
      %v681 = vadd.f32 %v311, %v597
      %v682 = vadd.f32 %v312, %v600
      %v683 = vadd.f32 %v313, %v605
      %v684 = vadd.f32 %v314, %v608
      %v685 = vadd.f32 %v315, %v613
      %v686 = vadd.f32 %v316, %v616
      %v687 = vadd.f32 %v317, %v621
      %v688 = vadd.f32 %v318, %v624
      %v689 = vadd.f32 %v319, %v629
      %v690 = vadd.f32 %v320, %v632
      %v691 = vadd.f32 %v321, %v637
      %v692 = vadd.f32 %v322, %v640
      %v693 = vadd.f32 %v323, %v645
      %v694 = vadd.f32 %v324, %v648
      %v695 = vadd.f32 %v325, %v653
      %v696 = vadd.f32 %v326, %v656
      %v697 = vadd.f32 %v327, %v661
      %v698 = vadd.f32 %v328, %v664
      %vm699 = vcmask 850944
      %700 = vst.msk [vmem:[#allocation2] sm:$0xff] %vm699, %v667
      %701 = vst.msk [vmem:[#allocation2 + $0x8] sm:$0xff] %vm699, %v668
      %702 = vst.msk [vmem:[#allocation2 + $0x10] sm:$0xff] %vm699, %v669
      %703 = vst.msk [vmem:[#allocation2 + $0x18] sm:$0xff] %vm699, %v670
      %704 = vst.msk [vmem:[#allocation2 + $0x20] sm:$0xff] %vm699, %v671
      %705 = vst.msk [vmem:[#allocation2 + $0x28] sm:$0xff] %vm699, %v672
      %706 = vst.msk [vmem:[#allocation2 + $0x30] sm:$0xff] %vm699, %v673
      %707 = vst.msk [vmem:[#allocation2 + $0x38] sm:$0xff] %vm699, %v674
      %708 = vst.msk [vmem:[#allocation2 + $0x40] sm:$0xff] %vm699, %v675
      %709 = vst.msk [vmem:[#allocation2 + $0x48] sm:$0xff] %vm699, %v676
      %710 = vst.msk [vmem:[#allocation2 + $0x50] sm:$0xff] %vm699, %v677
      %711 = vst.msk [vmem:[#allocation2 + $0x58] sm:$0xff] %vm699, %v678
      %712 = vst.msk [vmem:[#allocation2 + $0x60] sm:$0xff] %vm699, %v679
      %713 = vst.msk [vmem:[#allocation2 + $0x68] sm:$0xff] %vm699, %v680
      %714 = vst.msk [vmem:[#allocation2 + $0x70] sm:$0xff] %vm699, %v681
      %715 = vst.msk [vmem:[#allocation2 + $0x78] sm:$0xff] %vm699, %v682
      %716 = vst.msk [vmem:[#allocation2 + $0x80] sm:$0xff] %vm699, %v683
      %717 = vst.msk [vmem:[#allocation2 + $0x88] sm:$0xff] %vm699, %v684
      %718 = vst.msk [vmem:[#allocation2 + $0x90] sm:$0xff] %vm699, %v685
      %719 = vst.msk [vmem:[#allocation2 + $0x98] sm:$0xff] %vm699, %v686
      %720 = vst.msk [vmem:[#allocation2 + $0xa0] sm:$0xff] %vm699, %v687
      %721 = vst.msk [vmem:[#allocation2 + $0xa8] sm:$0xff] %vm699, %v688
      %722 = vst.msk [vmem:[#allocation2 + $0xb0] sm:$0xff] %vm699, %v689
      %723 = vst.msk [vmem:[#allocation2 + $0xb8] sm:$0xff] %vm699, %v690
      %724 = vst.msk [vmem:[#allocation2 + $0xc0] sm:$0xff] %vm699, %v691
      %725 = vst.msk [vmem:[#allocation2 + $0xc8] sm:$0xff] %vm699, %v692
      %726 = vst.msk [vmem:[#allocation2 + $0xd0] sm:$0xff] %vm699, %v693
      %727 = vst.msk [vmem:[#allocation2 + $0xd8] sm:$0xff] %vm699, %v694
      %728 = vst.msk [vmem:[#allocation2 + $0xe0] sm:$0xff] %vm699, %v695
      %729 = vst.msk [vmem:[#allocation2 + $0xe8] sm:$0xff] %vm699, %v696
      %730 = vst.msk [vmem:[#allocation2 + $0xf0] sm:$0xff] %vm699, %v697
      %731 = vst.msk [vmem:[#allocation2 + $0xf8] sm:$0xff] %vm699, %v698
      // Predicated region
      $region37: #{conv_lora_qkv_forward.2} parent=31 // pred_check
        %p732 = pneg %p260
      $region38: #{conv_lora_qkv_forward.2} parent=31 // pred_check_branch
        %734 = sbr.rel (%p732) target = $region40
      $region39: #{conv_lora_qkv_forward.2} parent=31 // pred_region
        %v735 = vld [vmem:[#allocation2] sm:$0xff]
        %v736 = vld [vmem:[#allocation2 + $0x8] sm:$0xff]
        %v737 = vld [vmem:[#allocation2 + $0x10] sm:$0xff]
        %v738 = vld [vmem:[#allocation2 + $0x18] sm:$0xff]
        %v739 = vld [vmem:[#allocation2 + $0x20] sm:$0xff]
        %v740 = vld [vmem:[#allocation2 + $0x28] sm:$0xff]
        %v741 = vld [vmem:[#allocation2 + $0x30] sm:$0xff]
        %v742 = vld [vmem:[#allocation2 + $0x38] sm:$0xff]
        %v743 = vld [vmem:[#allocation2 + $0x40] sm:$0xff]
        %v744 = vld [vmem:[#allocation2 + $0x48] sm:$0xff]
        %v745 = vld [vmem:[#allocation2 + $0x50] sm:$0xff]
        %v746 = vld [vmem:[#allocation2 + $0x58] sm:$0xff]
        %v747 = vld [vmem:[#allocation2 + $0x60] sm:$0xff]
        %v748 = vld [vmem:[#allocation2 + $0x68] sm:$0xff]
        %v749 = vld [vmem:[#allocation2 + $0x70] sm:$0xff]
        %v750 = vld [vmem:[#allocation2 + $0x78] sm:$0xff]
        %v751 = vld [vmem:[#allocation2 + $0x80] sm:$0xff]
        %v752 = vld [vmem:[#allocation2 + $0x88] sm:$0xff]
        %v753 = vld [vmem:[#allocation2 + $0x90] sm:$0xff]
        %v754 = vld [vmem:[#allocation2 + $0x98] sm:$0xff]
        %v755 = vld [vmem:[#allocation2 + $0xa0] sm:$0xff]
        %v756 = vld [vmem:[#allocation2 + $0xa8] sm:$0xff]
        %v757 = vld [vmem:[#allocation2 + $0xb0] sm:$0xff]
        %v758 = vld [vmem:[#allocation2 + $0xb8] sm:$0xff]
        %v759 = vld [vmem:[#allocation2 + $0xc0] sm:$0xff]
        %v760 = vld [vmem:[#allocation2 + $0xc8] sm:$0xff]
        %v761 = vld [vmem:[#allocation2 + $0xd0] sm:$0xff]
        %v762 = vld [vmem:[#allocation2 + $0xd8] sm:$0xff]
        %v763 = vld [vmem:[#allocation2 + $0xe0] sm:$0xff]
        %v764 = vld [vmem:[#allocation2 + $0xe8] sm:$0xff]
        %v765 = vld [vmem:[#allocation2 + $0xf0] sm:$0xff]
        %v766 = vld [vmem:[#allocation2 + $0xf8] sm:$0xff]
        %v767 = vld [vmem:[%s249] sm:$0x1]
        %v769 = vlaneseq
        %v770 = vshrl.u32 %v769, 7
        %v771 = vsub.s32 0, %v770
        %v772 = vrot.slane %v767, %v771
        %v774 = vadd.f32 %v735, %v772
        %v775 = vadd.f32 %v736, %v772
        %v776 = vadd.f32 %v737, %v772
        %v777 = vadd.f32 %v738, %v772
        %v778 = vadd.f32 %v739, %v772
        %v779 = vadd.f32 %v740, %v772
        %v780 = vadd.f32 %v741, %v772
        %v781 = vadd.f32 %v742, %v772
        %v782 = vadd.f32 %v743, %v772
        %v783 = vadd.f32 %v744, %v772
        %v784 = vadd.f32 %v745, %v772
        %v785 = vadd.f32 %v746, %v772
        %v786 = vadd.f32 %v747, %v772
        %v787 = vadd.f32 %v748, %v772
        %v788 = vadd.f32 %v749, %v772
        %v789 = vadd.f32 %v750, %v772
        %v790 = vadd.f32 %v751, %v772
        %v791 = vadd.f32 %v752, %v772
        %v792 = vadd.f32 %v753, %v772
        %v793 = vadd.f32 %v754, %v772
        %v794 = vadd.f32 %v755, %v772
        %v795 = vadd.f32 %v756, %v772
        %v796 = vadd.f32 %v757, %v772
        %v797 = vadd.f32 %v758, %v772
        %v798 = vadd.f32 %v759, %v772
        %v799 = vadd.f32 %v760, %v772
        %v800 = vadd.f32 %v761, %v772
        %v801 = vadd.f32 %v762, %v772
        %v802 = vadd.f32 %v763, %v772
        %v803 = vadd.f32 %v764, %v772
        %v804 = vadd.f32 %v765, %v772
        %v805 = vadd.f32 %v766, %v772
        %806 = vst.msk [vmem:[%s257] sm:$0xff] %vm699, %v774
        %807 = vst.msk [vmem:[%s257 + $0x8] sm:$0xff] %vm699, %v775
        %808 = vst.msk [vmem:[%s257 + $0x10] sm:$0xff] %vm699, %v776
        %809 = vst.msk [vmem:[%s257 + $0x18] sm:$0xff] %vm699, %v777
        %810 = vst.msk [vmem:[%s257 + $0x20] sm:$0xff] %vm699, %v778
        %811 = vst.msk [vmem:[%s257 + $0x28] sm:$0xff] %vm699, %v779
        %812 = vst.msk [vmem:[%s257 + $0x30] sm:$0xff] %vm699, %v780
        %813 = vst.msk [vmem:[%s257 + $0x38] sm:$0xff] %vm699, %v781
        %814 = vst.msk [vmem:[%s257 + $0x40] sm:$0xff] %vm699, %v782
        %815 = vst.msk [vmem:[%s257 + $0x48] sm:$0xff] %vm699, %v783
        %816 = vst.msk [vmem:[%s257 + $0x50] sm:$0xff] %vm699, %v784
        %817 = vst.msk [vmem:[%s257 + $0x58] sm:$0xff] %vm699, %v785
        %818 = vst.msk [vmem:[%s257 + $0x60] sm:$0xff] %vm699, %v786
        %819 = vst.msk [vmem:[%s257 + $0x68] sm:$0xff] %vm699, %v787
        %820 = vst.msk [vmem:[%s257 + $0x70] sm:$0xff] %vm699, %v788
        %821 = vst.msk [vmem:[%s257 + $0x78] sm:$0xff] %vm699, %v789
        %822 = vst.msk [vmem:[%s257 + $0x80] sm:$0xff] %vm699, %v790
        %823 = vst.msk [vmem:[%s257 + $0x88] sm:$0xff] %vm699, %v791
        %824 = vst.msk [vmem:[%s257 + $0x90] sm:$0xff] %vm699, %v792
        %825 = vst.msk [vmem:[%s257 + $0x98] sm:$0xff] %vm699, %v793
        %826 = vst.msk [vmem:[%s257 + $0xa0] sm:$0xff] %vm699, %v794
        %827 = vst.msk [vmem:[%s257 + $0xa8] sm:$0xff] %vm699, %v795
        %828 = vst.msk [vmem:[%s257 + $0xb0] sm:$0xff] %vm699, %v796
        %829 = vst.msk [vmem:[%s257 + $0xb8] sm:$0xff] %vm699, %v797
        %830 = vst.msk [vmem:[%s257 + $0xc0] sm:$0xff] %vm699, %v798
        %831 = vst.msk [vmem:[%s257 + $0xc8] sm:$0xff] %vm699, %v799
        %832 = vst.msk [vmem:[%s257 + $0xd0] sm:$0xff] %vm699, %v800
        %833 = vst.msk [vmem:[%s257 + $0xd8] sm:$0xff] %vm699, %v801
        %834 = vst.msk [vmem:[%s257 + $0xe0] sm:$0xff] %vm699, %v802
        %835 = vst.msk [vmem:[%s257 + $0xe8] sm:$0xff] %vm699, %v803
        %836 = vst.msk [vmem:[%s257 + $0xf0] sm:$0xff] %vm699, %v804
        %837 = vst.msk [vmem:[%s257 + $0xf8] sm:$0xff] %vm699, %v805
      $region40: #{conv_lora_qkv_forward.2} parent=31 // pred_fallthru
        _
      %s838 = smul.u32 32, %s19
      %p839 = scmp.lt.s32.totalorder %s838, 63
      %s840 = scalar_select %p839, %s838, 63
      %p841 = scmp.lt.s32.totalorder %s20, 0
      %s842 = scalar_select %p841, %s20, 0
      %s843 = sadd.s32 %s842, %s840
      %s844 = smul.addr %s843, 8
      %s845 = scalar_lea.vmem %s3, %s844
      // Predicated region
      $region41: #{conv_lora_qkv_forward.2} parent=31 // pred_check
        %p846 = pneg %p135
      $region42: #{conv_lora_qkv_forward.2} parent=31 // pred_check_branch
        %848 = sbr.rel (%p846) target = $region44
      $region43: #{conv_lora_qkv_forward.2} parent=31 // pred_region
        %s849 = smul.u32 32, %s19
      $region44: #{conv_lora_qkv_forward.2} parent=31 // pred_fallthru
        _
    $region32: #{conv_lora_qkv_forward.2} parent=5 // pred_fallthru
      _
    %p850 = scmp.le.s32.totalorder 2, %s9
    // Predicated region
    $region45: #{conv_lora_qkv_forward.2} parent=5 // pred_check
      %p851 = pneg %p850
    $region46: #{conv_lora_qkv_forward.2} parent=5 // pred_check_branch
      %853 = sbr.rel (%p851) target = $region48
    $region47: #{conv_lora_qkv_forward.2} parent=5 // pred_region
      %s854 = ssub.s32 %s9, 2
      // Predicated region
      $region49: #{conv_lora_qkv_forward.2} parent=47 // pred_check
        %p855 = pneg %p141
      $region50: #{conv_lora_qkv_forward.2} parent=47 // pred_check_branch
        %857 = sbr.rel (%p855) target = $region52
      $region51: #{conv_lora_qkv_forward.2} parent=47 // pred_region
        %s858 = smul.u32 32, %s22
        %p859 = scmp.lt.s32.totalorder %s858, 63
        %s860 = scalar_select %p859, %s858, 63
        %p861 = scmp.lt.s32.totalorder %s23, 0
        %s862 = scalar_select %p861, %s23, 0
        %s863 = sadd.s32 %s862, %s860
        %s864 = smul.addr %s863, 8
        %s865 = scalar_lea.vmem %s3, %s864
      $region52: #{conv_lora_qkv_forward.2} parent=47 // pred_fallthru
        _
    $region48: #{conv_lora_qkv_forward.2} parent=5 // pred_fallthru
      _
  $region6: #{conv_lora_qkv_forward.2} parent=0 // loop_footer
    %s13 = sadd.s32 1, %s9
  $region7: #{conv_lora_qkv_forward.2} parent=0 // loop_footer_branch
    %8 = sbr.rel target = $region3
  $region8: #{conv_lora_qkv_forward.2} parent=0 // loop_exit
    _

// kernel: conv_lora_qkv_forward.3
$region0: #{conv_lora_qkv_forward.3}
  #allocation0 [shape = 'u32[]', space=smem, size = 0x4, offset = 0x4, fixed_abs, tag = 'smem constant byte address 0x4 - core index']
  #allocation1 [shape = 'u32[144,128]{1,0:T(1,128)}', space=vmem, size = 0x12000, scoped, tag = 'internal scratch']
  %s0 = inlined_call_operand.vmem [shape: bf16[512,72], index: 0, kind: input, shape index: {}]
  %s1 = inlined_call_operand.vmem [shape: bf16[72,16], index: 1, kind: input, shape index: {}]
  %s2 = inlined_call_operand.vmem [shape: f32[1,16], index: 2, kind: input, shape index: {}]
  %s3 = inlined_call_operand.vmem [shape: f32[512,104], index: 3, kind: input, shape index: {}]
  %s4 = inlined_call_operand.vmem [shape: f32[512,4], index: 4, kind: input, shape index: {}]
  %s5 = inlined_call_operand.vmem [shape: bf16[4,32], index: 5, kind: input, shape index: {}]
  %s6 = inlined_call_operand.vmem [shape: bf16[4,32], index: 6, kind: input, shape index: {}]
  %s7 = inlined_call_operand.hbm [shape: f32[512,96], index: 7, kind: output, shape index: {}]
  %s8 = sld [smem:[#allocation0]]
  $region61: #{conv_lora_qkv_forward.3} parent=0
    _
  %s10 = ssub.s32 1, %s8
  %s11 = scalar_select 0, %s10, %s8
  $region1: #{conv_lora_qkv_forward.3} parent=0
    #allocation2 [shape = 'u8[262144]{0}', space=vmem, size = 0x40000, scoped, tag = 'output window, operand 0']
    #allocation3 [shape = 's32[2]{0}', space=sflag, size = 0x8, scoped, tag = 'scoped memory for conv_lora_qkv_forward.3']
    %12 = vsyncpa [#allocation3], 0
    %s13 = scalar_lea.sflag [#allocation3], 1
    %14 = vsyncpa %s13, 0
    loop: start=0, step=1, limit=4
    $region2: #{conv_lora_qkv_forward.3} parent=1 // loop_pre_header
      _
    $region3: #{conv_lora_qkv_forward.3} parent=1 // loop_header
      %s16 = sphi 0, %s20
      %p17 = scmp.ge.s32.totalorder %s16, 4
      %s26 = sphi 0, %s28
      %s29 = sphi 0, %s26
      %s30 = sphi 0, %s29
      %s46 = sphi 0, %s30
      %s50 = sphi 0, %s50
      %s52 = sphi 0, %s50
      %s53 = sphi 0, %s52
      %s67 = sphi 0, %s53
      %s71 = sphi 0, %s71
      %s73 = sphi 0, %s71
      %s74 = sphi 0, %s73
      %s88 = sphi 0, %s74
      %s94 = sphi 0, %s96
      %s97 = sphi 0, %s94
      %s98 = sphi 0, %s97
      %s114 = sphi 0, %s98
      %s120 = sphi 0, %s122
      %s123 = sphi 0, %s120
      %s124 = sphi 0, %s123
      %s140 = sphi 0, %s124
      %s144 = sphi 0, %s144
      %s146 = sphi 0, %s144
      %s147 = sphi 0, %s146
      %s161 = sphi 0, %s147
      %s165 = sphi 0, %s165
      %s167 = sphi 0, %s165
      %s168 = sphi 0, %s167
      %s182 = sphi 0, %s168
      %s188 = sphi 0, %s190
      %s191 = sphi 0, %s188
      %s192 = sphi 0, %s191
      %s208 = sphi 0, %s192
    $region4: #{conv_lora_qkv_forward.3} parent=1 // loop_header_branch
      %19 = sbr.rel (%p17) target = $region8
    $region5: #{conv_lora_qkv_forward.3} parent=1 // loop_body
      %s21 = ssub.s32 %s16, 1
      %s22 = ssub.s32 %s16, 2
      %s23 = sadd.s32 %s16, 1
      %s24 = ssub.s32 %s16, %s23
      %p25 = scmp.eq.s32.totalorder %s24, 0
      %s27 = sadd.s32 %s26, 1
      %s28 = scalar_select %p25, %s26, %s27
      %p31 = pneg %p25
      %p32 = scmp.eq.s32.totalorder %s16, 1
      %p33 = por %p31, %p32
      %p34 = scmp.ne.s32.totalorder %s26, %s29
      %p35 = scmp.eq.s32.totalorder %s16, 0
      %p36 = por %p34, %p35
      %p37 = scmp.ne.s32.totalorder %s26, %s29
      %p38 = scmp.eq.s32.totalorder %s21, 1
      %p39 = por %p37, %p38
      %p40 = scmp.ne.s32.totalorder %s29, %s30
      %p41 = scmp.eq.s32.totalorder %s21, 0
      %p42 = por %p40, %p41
      %p43 = scmp.ne.s32.totalorder %s29, %s30
      %p44 = scmp.eq.s32.totalorder %s22, 1
      %p45 = por %p43, %p44
      %p47 = scmp.ne.s32.totalorder %s30, %s46
      %p48 = scmp.eq.s32.totalorder %s22, 0
      %p49 = por %p47, %p48
      %s51 = sadd.s32 %s50, 1
      %p54 = scmp.eq.s32.totalorder %s16, 1
      %p55 = scmp.ne.s32.totalorder %s50, %s52
      %p56 = scmp.eq.s32.totalorder %s16, 0
      %p57 = por %p55, %p56
      %p58 = scmp.ne.s32.totalorder %s50, %s52
      %p59 = scmp.eq.s32.totalorder %s21, 1
      %p60 = por %p58, %p59
      %p61 = scmp.ne.s32.totalorder %s52, %s53
      %p62 = scmp.eq.s32.totalorder %s21, 0
      %p63 = por %p61, %p62
      %p64 = scmp.ne.s32.totalorder %s52, %s53
      %p65 = scmp.eq.s32.totalorder %s22, 1
      %p66 = por %p64, %p65
      %p68 = scmp.ne.s32.totalorder %s53, %s67
      %p69 = scmp.eq.s32.totalorder %s22, 0
      %p70 = por %p68, %p69
      %s72 = sadd.s32 %s71, 1
      %p75 = scmp.eq.s32.totalorder %s16, 1
      %p76 = scmp.ne.s32.totalorder %s71, %s73
      %p77 = scmp.eq.s32.totalorder %s16, 0
      %p78 = por %p76, %p77
      %p79 = scmp.ne.s32.totalorder %s71, %s73
      %p80 = scmp.eq.s32.totalorder %s21, 1
      %p81 = por %p79, %p80
      %p82 = scmp.ne.s32.totalorder %s73, %s74
      %p83 = scmp.eq.s32.totalorder %s21, 0
      %p84 = por %p82, %p83
      %p85 = scmp.ne.s32.totalorder %s73, %s74
      %p86 = scmp.eq.s32.totalorder %s22, 1
      %p87 = por %p85, %p86
      %p89 = scmp.ne.s32.totalorder %s74, %s88
      %p90 = scmp.eq.s32.totalorder %s22, 0
      %p91 = por %p89, %p90
      %s92 = ssub.s32 %s16, %s23
      %p93 = scmp.eq.s32.totalorder %s92, 0
      %s95 = sadd.s32 %s94, 1
      %s96 = scalar_select %p93, %s94, %s95
      %p99 = pneg %p93
      %p100 = scmp.eq.s32.totalorder %s16, 1
      %p101 = por %p99, %p100
      %p102 = scmp.ne.s32.totalorder %s94, %s97
      %p103 = scmp.eq.s32.totalorder %s16, 0
      %p104 = por %p102, %p103
      %p105 = scmp.ne.s32.totalorder %s94, %s97
      %p106 = scmp.eq.s32.totalorder %s21, 1
      %p107 = por %p105, %p106
      %p108 = scmp.ne.s32.totalorder %s97, %s98
      %p109 = scmp.eq.s32.totalorder %s21, 0
      %p110 = por %p108, %p109
      %p111 = scmp.ne.s32.totalorder %s97, %s98
      %p112 = scmp.eq.s32.totalorder %s22, 1
      %p113 = por %p111, %p112
      %p115 = scmp.ne.s32.totalorder %s98, %s114
      %p116 = scmp.eq.s32.totalorder %s22, 0
      %p117 = por %p115, %p116
      %s118 = ssub.s32 %s16, %s23
      %p119 = scmp.eq.s32.totalorder %s118, 0
      %s121 = sadd.s32 %s120, 1
      %s122 = scalar_select %p119, %s120, %s121
      %p125 = pneg %p119
      %p126 = scmp.eq.s32.totalorder %s16, 1
      %p127 = por %p125, %p126
      %p128 = scmp.ne.s32.totalorder %s120, %s123
      %p129 = scmp.eq.s32.totalorder %s16, 0
      %p130 = por %p128, %p129
      %p131 = scmp.ne.s32.totalorder %s120, %s123
      %p132 = scmp.eq.s32.totalorder %s21, 1
      %p133 = por %p131, %p132
      %p134 = scmp.ne.s32.totalorder %s123, %s124
      %p135 = scmp.eq.s32.totalorder %s21, 0
      %p136 = por %p134, %p135
      %p137 = scmp.ne.s32.totalorder %s123, %s124
      %p138 = scmp.eq.s32.totalorder %s22, 1
      %p139 = por %p137, %p138
      %p141 = scmp.ne.s32.totalorder %s124, %s140
      %p142 = scmp.eq.s32.totalorder %s22, 0
      %p143 = por %p141, %p142
      %s145 = sadd.s32 %s144, 1
      %p148 = scmp.eq.s32.totalorder %s16, 1
      %p149 = scmp.ne.s32.totalorder %s144, %s146
      %p150 = scmp.eq.s32.totalorder %s16, 0
      %p151 = por %p149, %p150
      %p152 = scmp.ne.s32.totalorder %s144, %s146
      %p153 = scmp.eq.s32.totalorder %s21, 1
      %p154 = por %p152, %p153
      %p155 = scmp.ne.s32.totalorder %s146, %s147
      %p156 = scmp.eq.s32.totalorder %s21, 0
      %p157 = por %p155, %p156
      %p158 = scmp.ne.s32.totalorder %s146, %s147
      %p159 = scmp.eq.s32.totalorder %s22, 1
      %p160 = por %p158, %p159
      %p162 = scmp.ne.s32.totalorder %s147, %s161
      %p163 = scmp.eq.s32.totalorder %s22, 0
      %p164 = por %p162, %p163
      %s166 = sadd.s32 %s165, 1
      %p169 = scmp.eq.s32.totalorder %s16, 1
      %p170 = scmp.ne.s32.totalorder %s165, %s167
      %p171 = scmp.eq.s32.totalorder %s16, 0
      %p172 = por %p170, %p171
      %p173 = scmp.ne.s32.totalorder %s165, %s167
      %p174 = scmp.eq.s32.totalorder %s21, 1
      %p175 = por %p173, %p174
      %p176 = scmp.ne.s32.totalorder %s167, %s168
      %p177 = scmp.eq.s32.totalorder %s21, 0
      %p178 = por %p176, %p177
      %p179 = scmp.ne.s32.totalorder %s167, %s168
      %p180 = scmp.eq.s32.totalorder %s22, 1
      %p181 = por %p179, %p180
      %p183 = scmp.ne.s32.totalorder %s168, %s182
      %p184 = scmp.eq.s32.totalorder %s22, 0
      %p185 = por %p183, %p184
      %s186 = ssub.s32 %s16, %s23
      %p187 = scmp.eq.s32.totalorder %s186, 0
      %s189 = sadd.s32 %s188, 1
      %s190 = scalar_select %p187, %s188, %s189
      %p193 = pneg %p187
      %p194 = scmp.eq.s32.totalorder %s16, 1
      %p195 = por %p193, %p194
      %p196 = scmp.ne.s32.totalorder %s188, %s191
      %p197 = scmp.eq.s32.totalorder %s16, 0
      %p198 = por %p196, %p197
      %p199 = scmp.ne.s32.totalorder %s188, %s191
      %p200 = scmp.eq.s32.totalorder %s21, 1
      %p201 = por %p199, %p200
      %p202 = scmp.ne.s32.totalorder %s191, %s192
      %p203 = scmp.eq.s32.totalorder %s21, 0
      %p204 = por %p202, %p203
      %p205 = scmp.ne.s32.totalorder %s191, %s192
      %p206 = scmp.eq.s32.totalorder %s22, 1
      %p207 = por %p205, %p206
      %p209 = scmp.ne.s32.totalorder %s192, %s208
      %p210 = scmp.eq.s32.totalorder %s22, 0
      %p211 = por %p209, %p210
      %p212 = scmp.le.s32.totalorder 1, %s16
      %p213 = scmp.lt.s32.totalorder %s16, 3
      %p214 = pnand %p212, %p213
      %p215 = pneg %p214
      // Predicated region
      $region9: #{conv_lora_qkv_forward.3} parent=5 // pred_check
        _
      $region10: #{conv_lora_qkv_forward.3} parent=5 // pred_check_branch
        %217 = sbr.rel (%p214) target = $region12
      $region11: #{conv_lora_qkv_forward.3} parent=5 // pred_region
        %s218 = ssub.s32 %s16, 1
        // Predicated region
        $region13: #{conv_lora_qkv_forward.3} parent=11 // pred_check
          %p219 = pneg %p63
        $region14: #{conv_lora_qkv_forward.3} parent=11 // pred_check_branch
          %221 = sbr.rel (%p219) target = $region16
        $region15: #{conv_lora_qkv_forward.3} parent=11 // pred_region
          _
        $region16: #{conv_lora_qkv_forward.3} parent=11 // pred_fallthru
          _
        // Predicated region
        $region17: #{conv_lora_qkv_forward.3} parent=11 // pred_check
          %p222 = pneg %p84
        $region18: #{conv_lora_qkv_forward.3} parent=11 // pred_check_branch
          %224 = sbr.rel (%p222) target = $region20
        $region19: #{conv_lora_qkv_forward.3} parent=11 // pred_region
          _
        $region20: #{conv_lora_qkv_forward.3} parent=11 // pred_fallthru
          _
        // Predicated region
        $region21: #{conv_lora_qkv_forward.3} parent=11 // pred_check
          %p225 = pneg %p157
        $region22: #{conv_lora_qkv_forward.3} parent=11 // pred_check_branch
          %227 = sbr.rel (%p225) target = $region24
        $region23: #{conv_lora_qkv_forward.3} parent=11 // pred_region
          _
        $region24: #{conv_lora_qkv_forward.3} parent=11 // pred_fallthru
          _
        // Predicated region
        $region25: #{conv_lora_qkv_forward.3} parent=11 // pred_check
          %p228 = pneg %p178
        $region26: #{conv_lora_qkv_forward.3} parent=11 // pred_check_branch
          %230 = sbr.rel (%p228) target = $region28
        $region27: #{conv_lora_qkv_forward.3} parent=11 // pred_region
          _
        $region28: #{conv_lora_qkv_forward.3} parent=11 // pred_fallthru
          _
      $region12: #{conv_lora_qkv_forward.3} parent=5 // pred_fallthru
        _
      %p231 = scmp.lt.s32.totalorder %s16, 2
      // Predicated region
      $region29: #{conv_lora_qkv_forward.3} parent=5 // pred_check
        %p232 = pneg %p231
      $region30: #{conv_lora_qkv_forward.3} parent=5 // pred_check_branch
        %234 = sbr.rel (%p232) target = $region32
      $region31: #{conv_lora_qkv_forward.3} parent=5 // pred_region
        // Predicated region
        $region33: #{conv_lora_qkv_forward.3} parent=31 // pred_check
          %p235 = pneg %p36
        $region34: #{conv_lora_qkv_forward.3} parent=31 // pred_check_branch
          %237 = sbr.rel (%p235) target = $region36
        $region35: #{conv_lora_qkv_forward.3} parent=31 // pred_region
          %s238 = smul.u32 32, %s16
          %p239 = scmp.lt.s32.totalorder %s238, 63
          %s240 = scalar_select %p239, %s238, 63
          %s241 = smul.addr %s240, 4
          %s242 = scalar_lea.vmem %s0, %s241
          %s243 = smul.u32 32, %s16
        $region36: #{conv_lora_qkv_forward.3} parent=31 // pred_fallthru
          _
        // Predicated region
        $region37: #{conv_lora_qkv_forward.3} parent=31 // pred_check
          %p244 = pneg %p104
        $region38: #{conv_lora_qkv_forward.3} parent=31 // pred_check_branch
          %246 = sbr.rel (%p244) target = $region40
        $region39: #{conv_lora_qkv_forward.3} parent=31 // pred_region
          %s247 = smul.u32 32, %s16
          %p248 = scmp.lt.s32.totalorder %s247, 63
          %s249 = scalar_select %p248, %s247, 63
          %s250 = smul.addr %s249, 8
          %s251 = scalar_lea.vmem %s3, %s250
          %s252 = smul.u32 32, %s16
        $region40: #{conv_lora_qkv_forward.3} parent=31 // pred_fallthru
          _
        // Predicated region
        $region41: #{conv_lora_qkv_forward.3} parent=31 // pred_check
          %p253 = pneg %p130
        $region42: #{conv_lora_qkv_forward.3} parent=31 // pred_check_branch
          %255 = sbr.rel (%p253) target = $region44
        $region43: #{conv_lora_qkv_forward.3} parent=31 // pred_region
          %s256 = smul.u32 32, %s16
          %p257 = scmp.lt.s32.totalorder %s256, 63
          %s258 = scalar_select %p257, %s256, 63
          %s259 = smul.addr %s258, 8
          %s260 = scalar_lea.vmem %s4, %s259
          %s261 = smul.u32 32, %s16
        $region44: #{conv_lora_qkv_forward.3} parent=31 // pred_fallthru
          _
      $region32: #{conv_lora_qkv_forward.3} parent=5 // pred_fallthru
        _
      %p262 = scmp.le.s32.totalorder 1, %s16
      %p263 = scmp.lt.s32.totalorder %s16, 3
      %p264 = pnand %p262, %p263
      %p265 = pneg %p264
      // Predicated region
      $region45: #{conv_lora_qkv_forward.3} parent=5 // pred_check
        _
      $region46: #{conv_lora_qkv_forward.3} parent=5 // pred_check_branch
        %267 = sbr.rel (%p264) target = $region48
      $region47: #{conv_lora_qkv_forward.3} parent=5 // pred_region
        %s268 = ssub.s32 %s16, 1
        %s269 = smul.u32 32, %s21
        %p270 = scmp.lt.s32.totalorder %s269, 63
        %s271 = scalar_select %p270, %s269, 63
        %s272 = smul.addr %s271, 4
        %s273 = scalar_lea.vmem %s0, %s272
        %p274 = pneg %p42
        %p275 = pneg %p39
        %p276 = pneg %p63
        %p277 = pneg %p60
        %p278 = pneg %p84
        %p279 = pneg %p81
        %s280 = smul.u32 32, %s21
        %p281 = scmp.lt.s32.totalorder %s280, 63
        %s282 = scalar_select %p281, %s280, 63
        %s283 = smul.addr %s282, 8
        %s284 = scalar_lea.vmem %s3, %s283
        %p285 = pneg %p110
        %p286 = pneg %p107
        %s287 = smul.u32 32, %s21
        %p288 = scmp.lt.s32.totalorder %s287, 63
        %s289 = scalar_select %p288, %s287, 63
        %s290 = smul.addr %s289, 8
        %s291 = scalar_lea.vmem %s4, %s290
        %p292 = pneg %p136
        %p293 = pneg %p133
        %p294 = pneg %p157
        %p295 = pneg %p154
        %p296 = pneg %p178
        %p297 = pneg %p175
        %p298 = pneg %p204
        %p299 = pneg %p201
        %s300 = sand.u32 %s191, 1
        %s301 = scalar_lea.sflag [#allocation3], %s300
        %s302 = sand.u32 %s191, 1
        %s303 = smul.addr %s302, 256
        %s304 = scalar_lea.vmem [#allocation2], %s303
        %s305 = smul.u32 32, %s21
        %p306 = scmp.lt.s32.totalorder %s305, 63
        %s307 = scalar_select %p306, %s305, 63
        %s308 = smul.addr %s307, 4
        %s309 = scalar_lea.vmem %s0, %s308
        %s310 = smul.u32 32, %s21
        %s311 = smul.u32 32, %s21
        %p312 = scmp.lt.s32.totalorder %s311, 63
        %s313 = scalar_select %p312, %s311, 63
        %s314 = smul.addr %s313, 8
        %s315 = scalar_lea.vmem %s3, %s314
        %s316 = smul.u32 32, %s21
        %s317 = smul.u32 32, %s21
        %p318 = scmp.lt.s32.totalorder %s317, 63
        %s319 = scalar_select %p318, %s317, 63
        %s320 = smul.addr %s319, 8
        %s321 = scalar_lea.vmem %s4, %s320
        %s322 = smul.u32 32, %s21
        %s323 = smul.u32 32, %s21
        %v325 = vld [vmem:[%s309] sm:$0xf]
        %v326 = vld [vmem:[%s309 + $0x4] sm:$0xf]
        %v327 = vld [vmem:[%s309 + $0x8] sm:$0xf]
        %v328 = vld [vmem:[%s309 + $0xc] sm:$0xf]
        %v329 = vld [vmem:[%s309 + $0x10] sm:$0xf]
        %v330 = vld [vmem:[%s309 + $0x14] sm:$0xf]
        %v331 = vld [vmem:[%s309 + $0x18] sm:$0xf]
        %v332 = vld [vmem:[%s309 + $0x1c] sm:$0xf]
        %v333 = vld [vmem:[%s309 + $0x20] sm:$0xf]
        %v334 = vld [vmem:[%s309 + $0x24] sm:$0xf]
        %v335 = vld [vmem:[%s309 + $0x28] sm:$0xf]
        %v336 = vld [vmem:[%s309 + $0x2c] sm:$0xf]
        %v337 = vld [vmem:[%s309 + $0x30] sm:$0xf]
        %v338 = vld [vmem:[%s309 + $0x34] sm:$0xf]
        %v339 = vld [vmem:[%s309 + $0x38] sm:$0xf]
        %v340 = vld [vmem:[%s309 + $0x3c] sm:$0xf]
        %v341 = vld [vmem:[%s309 + $0x40] sm:$0xf]
        %v342 = vld [vmem:[%s309 + $0x44] sm:$0xf]
        %v343 = vld [vmem:[%s309 + $0x48] sm:$0xf]
        %v344 = vld [vmem:[%s309 + $0x4c] sm:$0xf]
        %v345 = vld [vmem:[%s309 + $0x50] sm:$0xf]
        %v346 = vld [vmem:[%s309 + $0x54] sm:$0xf]
        %v347 = vld [vmem:[%s309 + $0x58] sm:$0xf]
        %v348 = vld [vmem:[%s309 + $0x5c] sm:$0xf]
        %v349 = vld [vmem:[%s309 + $0x60] sm:$0xf]
        %v350 = vld [vmem:[%s309 + $0x64] sm:$0xf]
        %v351 = vld [vmem:[%s309 + $0x68] sm:$0xf]
        %v352 = vld [vmem:[%s309 + $0x6c] sm:$0xf]
        %v353 = vld [vmem:[%s309 + $0x70] sm:$0xf]
        %v354 = vld [vmem:[%s309 + $0x74] sm:$0xf]
        %v355 = vld [vmem:[%s309 + $0x78] sm:$0xf]
        %v356 = vld [vmem:[%s309 + $0x7c] sm:$0xf]
        %v357 = vld [vmem:[%s1] sm:$0xf]
        %v358 = vld [vmem:[%s1 + $0x4] sm:$0xf]
        %v359 = vld [vmem:[%s1 + $0x8] sm:$0xf]
        %v360 = vld [vmem:[%s1 + $0xc] sm:$0xf]
        %v361 = vld [vmem:[%s1 + $0x10] sm:$0xf]
        %v362 = vld [vmem:[%s1 + $0x14] sm:$0xf]
        %v363 = vld [vmem:[%s1 + $0x18] sm:$0xf]
        %v364 = vld [vmem:[%s1 + $0x1c] sm:$0xf]
        %v365 = vld [vmem:[%s1 + $0x20] sm:$0xf]
        %v366 = vld [vmem:[%s2] sm:$0x1]
        %v368 = vlaneseq
        %v369 = vshrl.u32 %v368, 7
        %v370 = vsub.s32 0, %v369
        %v371 = vrot.slane %v366, %v370
        %v405 = vunpack.c.l.b16 %v325
        %v406 = vunpack.c.l.b16 %v326
        %v407 = vunpack.c.l.b16 %v327
        %v408 = vunpack.c.l.b16 %v328
        %v409 = vunpack.c.l.b16 %v329
        %v410 = vunpack.c.l.b16 %v330
        %v411 = vunpack.c.l.b16 %v331
        %v412 = vunpack.c.l.b16 %v332
        %v413 = vunpack.c.l.b16 %v333
        %v414 = vunpack.c.l.b16 %v334
        %v415 = vunpack.c.l.b16 %v335
        %v416 = vunpack.c.l.b16 %v336
        %v417 = vunpack.c.l.b16 %v337
        %v418 = vunpack.c.l.b16 %v338
        %v419 = vunpack.c.l.b16 %v339
        %v420 = vunpack.c.l.b16 %v340
        %v421 = vunpack.c.l.b16 %v341
        %v422 = vunpack.c.l.b16 %v342
        %v423 = vunpack.c.l.b16 %v343
        %v424 = vunpack.c.l.b16 %v344
        %v425 = vunpack.c.l.b16 %v345
        %v426 = vunpack.c.l.b16 %v346
        %v427 = vunpack.c.l.b16 %v347
        %v428 = vunpack.c.l.b16 %v348
        %v429 = vunpack.c.l.b16 %v349
        %v430 = vunpack.c.l.b16 %v350
        %v431 = vunpack.c.l.b16 %v351
        %v432 = vunpack.c.l.b16 %v352
        %v433 = vunpack.c.l.b16 %v353
        %v434 = vunpack.c.l.b16 %v354
        %v435 = vunpack.c.l.b16 %v355
        %v436 = vunpack.c.l.b16 %v356
        %v437 = vpack.c.b16 %v406, %v405
        %v438 = vpack.c.b16 %v408, %v407
        %v439 = vpack.c.b16 %v410, %v409
        %v440 = vpack.c.b16 %v412, %v411
        %v441 = vpack.c.b16 %v414, %v413
        %v442 = vpack.c.b16 %v416, %v415
        %v443 = vpack.c.b16 %v418, %v417
        %v444 = vpack.c.b16 %v420, %v419
        %v445 = vpack.c.b16 %v422, %v421
        %v446 = vpack.c.b16 %v424, %v423
        %v447 = vpack.c.b16 %v426, %v425
        %v448 = vpack.c.b16 %v428, %v427
        %v449 = vpack.c.b16 %v430, %v429
        %v450 = vpack.c.b16 %v432, %v431
        %v451 = vpack.c.b16 %v434, %v433
        %v452 = vpack.c.b16 %v436, %v435
        %v462 = vunpack.c.l.b16 %v357
        %v463 = vunpack.c.l.b16 %v358
        %v464 = vunpack.c.l.b16 %v359
        %v465 = vunpack.c.l.b16 %v360
        %v466 = vunpack.c.l.b16 %v361
        %v467 = vunpack.c.l.b16 %v362
        %v468 = vunpack.c.l.b16 %v363
        %v469 = vunpack.c.l.b16 %v364
        %v470 = vunpack.c.l.b16 %v365
        %v471 = vpack.c.b16 %v463, %v462
        %v472 = vpack.c.b16 %v465, %v464
        %v473 = vpack.c.b16 %v467, %v466
        %v474 = vpack.c.b16 %v469, %v468
        %v475 = vpack.c.b16 %v470, %v470
        %vm480 = vcmask 588800
        %v482 = vsel %vm480, %v437, 0
        %v485 = vsel %vm480, %v438, 0
        %v488 = vsel %vm480, %v439, 0
        %v491 = vsel %vm480, %v440, 0
        %v494 = vsel %vm480, %v441, 0
        %v497 = vsel %vm480, %v442, 0
        %v500 = vsel %vm480, %v443, 0
        %v503 = vsel %vm480, %v444, 0
        %v506 = vsel %vm480, %v445, 0
        %v509 = vsel %vm480, %v446, 0
        %v512 = vsel %vm480, %v447, 0
        %v515 = vsel %vm480, %v448, 0
        %v518 = vsel %vm480, %v449, 0
        %v521 = vsel %vm480, %v450, 0
        %v524 = vsel %vm480, %v451, 0
        %v527 = vsel %vm480, %v452, 0
        %vm529 = vcmask 1043456
        %v531 = vsel %vm529, %v475, 0
        %533 = vmatprep.subr.bf16.mxu0 0
        %534 = vmatpush1.bf16.msra.mxu0 %v471
        %535 = vmatprep.subr.bf16.mxu0 0
        %536 = vmatpush1.bf16.msra.mxu0 %v472
        %537 = vmatprep.subr.bf16.mxu0 0
        %538 = vmatpush1.bf16.msra.mxu0 %v473
        %539 = vmatprep.subr.bf16.mxu0 0
        %540 = vmatpush1.bf16.msra.mxu0 %v474
        %541 = vmatprep.subr.bf16.mxu0 0
        %542 = vmatpush1.bf16.msra.mxu0 %v531
        %543 = vmatprep.subr.bf16.mxu0 0
        %544 = vmatpush1.bf16.msra.mxu0 0
        %545 = vmatprep.subr.bf16.mxu0 0
        %546 = vmatpush1.bf16.msra.mxu0 0
        %547 = vmatprep.subr.bf16.mxu0 0
        %548 = vmatpush1.bf16.msra.mxu0 0
        %549 = vmatprep.subr.bf16.mxu0 0
        %550 = vmatpush1.bf16.msra.mxu0 0
        %551 = vmatprep.subr.bf16.mxu0 0
        %552 = vmatpush1.bf16.msra.mxu0 0
        %553 = vmatprep.subr.bf16.mxu0 0
        %554 = vmatpush1.bf16.msra.mxu0 0
        %555 = vmatprep.subr.bf16.mxu0 0
        %556 = vmatpush1.bf16.msra.mxu0 0
        %557 = vmatprep.subr.bf16.mxu0 0
        %558 = vmatpush1.bf16.msra.mxu0 0
        %559 = vmatprep.subr.bf16.mxu0 0
        %560 = vmatpush1.bf16.msra.mxu0 0
        %561 = vmatprep.subr.bf16.mxu0 0
        %562 = vmatpush1.bf16.msra.mxu0 0
        %563 = vmatprep.subr.bf16.mxu0 0
        %564 = vmatpush1.bf16.msra.mxu0 0
        %565 = vmatprep.mubr.bf16.mxu0 0
        %566 = vmatmul.mubr.bf16.gmra.mrb[0].mxu0 %v482
        %v567 = vpop.f32.mrb[0].mxu0
        %v568 = vadd.f32 %v371, %v567
        %v569 = vpop.f32.mrb[0].mxu0
        %v570 = vpop.f32.mrb[0].mxu0
        %v571 = vadd.f32 %v371, %v570
        %v572 = vpop.f32.mrb[0].mxu0
        %573 = vmatprep.mubr.bf16.mxu0 0
        %574 = vmatmul.mubr.bf16.gmra.mrb[0].mxu0 %v485
        %v575 = vpop.f32.mrb[0].mxu0
        %v576 = vadd.f32 %v371, %v575
        %v577 = vpop.f32.mrb[0].mxu0
        %v578 = vpop.f32.mrb[0].mxu0
        %v579 = vadd.f32 %v371, %v578
        %v580 = vpop.f32.mrb[0].mxu0
        %581 = vmatprep.mubr.bf16.mxu0 0
        %582 = vmatmul.mubr.bf16.gmra.mrb[0].mxu0 %v488
        %v583 = vpop.f32.mrb[0].mxu0
        %v584 = vadd.f32 %v371, %v583
        %v585 = vpop.f32.mrb[0].mxu0
        %v586 = vpop.f32.mrb[0].mxu0
        %v587 = vadd.f32 %v371, %v586
        %v588 = vpop.f32.mrb[0].mxu0
        %589 = vmatprep.mubr.bf16.mxu0 0
        %590 = vmatmul.mubr.bf16.gmra.mrb[0].mxu0 %v491
        %v591 = vpop.f32.mrb[0].mxu0
        %v592 = vadd.f32 %v371, %v591
        %v593 = vpop.f32.mrb[0].mxu0
        %v594 = vpop.f32.mrb[0].mxu0
        %v595 = vadd.f32 %v371, %v594
        %v596 = vpop.f32.mrb[0].mxu0
        %597 = vmatprep.mubr.bf16.mxu0 0
        %598 = vmatmul.mubr.bf16.gmra.mrb[0].mxu0 %v494
        %v599 = vpop.f32.mrb[0].mxu0
        %v600 = vadd.f32 %v371, %v599
        %v601 = vpop.f32.mrb[0].mxu0
        %v602 = vpop.f32.mrb[0].mxu0
        %v603 = vadd.f32 %v371, %v602
        %v604 = vpop.f32.mrb[0].mxu0
        %605 = vmatprep.mubr.bf16.mxu0 0
        %606 = vmatmul.mubr.bf16.gmra.mrb[0].mxu0 %v497
        %v607 = vpop.f32.mrb[0].mxu0
        %v608 = vadd.f32 %v371, %v607
        %v609 = vpop.f32.mrb[0].mxu0
        %v610 = vpop.f32.mrb[0].mxu0
        %v611 = vadd.f32 %v371, %v610
        %v612 = vpop.f32.mrb[0].mxu0
        %613 = vmatprep.mubr.bf16.mxu0 0
        %614 = vmatmul.mubr.bf16.gmra.mrb[0].mxu0 %v500
        %v615 = vpop.f32.mrb[0].mxu0
        %v616 = vadd.f32 %v371, %v615
        %v617 = vpop.f32.mrb[0].mxu0
        %v618 = vpop.f32.mrb[0].mxu0
        %v619 = vadd.f32 %v371, %v618
        %v620 = vpop.f32.mrb[0].mxu0
        %621 = vmatprep.mubr.bf16.mxu0 0
        %622 = vmatmul.mubr.bf16.gmra.mrb[0].mxu0 %v503
        %v623 = vpop.f32.mrb[0].mxu0
        %v624 = vadd.f32 %v371, %v623
        %v625 = vpop.f32.mrb[0].mxu0
        %v626 = vpop.f32.mrb[0].mxu0
        %v627 = vadd.f32 %v371, %v626
        %v628 = vpop.f32.mrb[0].mxu0
        %629 = vmatprep.mubr.bf16.mxu0 0
        %630 = vmatmul.mubr.bf16.gmra.mrb[0].mxu0 %v506
        %v631 = vpop.f32.mrb[0].mxu0
        %v632 = vadd.f32 %v371, %v631
        %v633 = vpop.f32.mrb[0].mxu0
        %v634 = vpop.f32.mrb[0].mxu0
        %v635 = vadd.f32 %v371, %v634
        %v636 = vpop.f32.mrb[0].mxu0
        %637 = vmatprep.mubr.bf16.mxu0 0
        %638 = vmatmul.mubr.bf16.gmra.mrb[0].mxu0 %v509
        %v639 = vpop.f32.mrb[0].mxu0
        %v640 = vadd.f32 %v371, %v639
        %v641 = vpop.f32.mrb[0].mxu0
        %v642 = vpop.f32.mrb[0].mxu0
        %v643 = vadd.f32 %v371, %v642
        %v644 = vpop.f32.mrb[0].mxu0
        %645 = vmatprep.mubr.bf16.mxu0 0
        %646 = vmatmul.mubr.bf16.gmra.mrb[0].mxu0 %v512
        %v647 = vpop.f32.mrb[0].mxu0
        %v648 = vadd.f32 %v371, %v647
        %v649 = vpop.f32.mrb[0].mxu0
        %v650 = vpop.f32.mrb[0].mxu0
        %v651 = vadd.f32 %v371, %v650
        %v652 = vpop.f32.mrb[0].mxu0
        %653 = vmatprep.mubr.bf16.mxu0 0
        %654 = vmatmul.mubr.bf16.gmra.mrb[0].mxu0 %v515
        %v655 = vpop.f32.mrb[0].mxu0
        %v656 = vadd.f32 %v371, %v655
        %v657 = vpop.f32.mrb[0].mxu0
        %v658 = vpop.f32.mrb[0].mxu0
        %v659 = vadd.f32 %v371, %v658
        %v660 = vpop.f32.mrb[0].mxu0
        %661 = vmatprep.mubr.bf16.mxu0 0
        %662 = vmatmul.mubr.bf16.gmra.mrb[0].mxu0 %v518
        %v663 = vpop.f32.mrb[0].mxu0
        %v664 = vadd.f32 %v371, %v663
        %v665 = vpop.f32.mrb[0].mxu0
        %v666 = vpop.f32.mrb[0].mxu0
        %v667 = vadd.f32 %v371, %v666
        %v668 = vpop.f32.mrb[0].mxu0
        %669 = vmatprep.mubr.bf16.mxu0 0
        %670 = vmatmul.mubr.bf16.gmra.mrb[0].mxu0 %v521
        %v671 = vpop.f32.mrb[0].mxu0
        %v672 = vadd.f32 %v371, %v671
        %v673 = vpop.f32.mrb[0].mxu0
        %v674 = vpop.f32.mrb[0].mxu0
        %v675 = vadd.f32 %v371, %v674
        %v676 = vpop.f32.mrb[0].mxu0
        %677 = vmatprep.mubr.bf16.mxu0 0
        %678 = vmatmul.mubr.bf16.gmra.mrb[0].mxu0 %v524
        %v679 = vpop.f32.mrb[0].mxu0
        %v680 = vadd.f32 %v371, %v679
        %v681 = vpop.f32.mrb[0].mxu0
        %v682 = vpop.f32.mrb[0].mxu0
        %v683 = vadd.f32 %v371, %v682
        %v684 = vpop.f32.mrb[0].mxu0
        %685 = vmatprep.mubr.bf16.mxu0 0
        %686 = vmatmul.mubr.bf16.gmra.mrb[0].mxu0 %v527
        %v687 = vpop.f32.mrb[0].mxu0
        %v688 = vadd.f32 %v371, %v687
        %v689 = vpop.f32.mrb[0].mxu0
        %v690 = vpop.f32.mrb[0].mxu0
        %v691 = vadd.f32 %v371, %v690
        %v692 = vpop.f32.mrb[0].mxu0
        %693 = vdwg.mxu0
        %v694 = vld [vmem:[%s315] sm:$0xff]
        %v695 = vld [vmem:[%s315 + $0x8] sm:$0xff]
        %v696 = vld [vmem:[%s315 + $0x10] sm:$0xff]
        %v697 = vld [vmem:[%s315 + $0x18] sm:$0xff]
        %v698 = vld [vmem:[%s315 + $0x20] sm:$0xff]
        %v699 = vld [vmem:[%s315 + $0x28] sm:$0xff]
        %v700 = vld [vmem:[%s315 + $0x30] sm:$0xff]
        %v701 = vld [vmem:[%s315 + $0x38] sm:$0xff]
        %v702 = vld [vmem:[%s315 + $0x40] sm:$0xff]
        %v703 = vld [vmem:[%s315 + $0x48] sm:$0xff]
        %v704 = vld [vmem:[%s315 + $0x50] sm:$0xff]
        %v705 = vld [vmem:[%s315 + $0x58] sm:$0xff]
        %v706 = vld [vmem:[%s315 + $0x60] sm:$0xff]
        %v707 = vld [vmem:[%s315 + $0x68] sm:$0xff]
        %v708 = vld [vmem:[%s315 + $0x70] sm:$0xff]
        %v709 = vld [vmem:[%s315 + $0x78] sm:$0xff]
        %v710 = vld [vmem:[%s315 + $0x80] sm:$0xff]
        %v711 = vld [vmem:[%s315 + $0x88] sm:$0xff]
        %v712 = vld [vmem:[%s315 + $0x90] sm:$0xff]
        %v713 = vld [vmem:[%s315 + $0x98] sm:$0xff]
        %v714 = vld [vmem:[%s315 + $0xa0] sm:$0xff]
        %v715 = vld [vmem:[%s315 + $0xa8] sm:$0xff]
        %v716 = vld [vmem:[%s315 + $0xb0] sm:$0xff]
        %v717 = vld [vmem:[%s315 + $0xb8] sm:$0xff]
        %v718 = vld [vmem:[%s315 + $0xc0] sm:$0xff]
        %v719 = vld [vmem:[%s315 + $0xc8] sm:$0xff]
        %v720 = vld [vmem:[%s315 + $0xd0] sm:$0xff]
        %v721 = vld [vmem:[%s315 + $0xd8] sm:$0xff]
        %v722 = vld [vmem:[%s315 + $0xe0] sm:$0xff]
        %v723 = vld [vmem:[%s315 + $0xe8] sm:$0xff]
        %v724 = vld [vmem:[%s315 + $0xf0] sm:$0xff]
        %v725 = vld [vmem:[%s315 + $0xf8] sm:$0xff]
        %v726 = vld [vmem:[%s321] sm:$0xff]
        %v727 = vld [vmem:[%s321 + $0x8] sm:$0xff]
        %v728 = vld [vmem:[%s321 + $0x10] sm:$0xff]
        %v729 = vld [vmem:[%s321 + $0x18] sm:$0xff]
        %v730 = vld [vmem:[%s321 + $0x20] sm:$0xff]
        %v731 = vld [vmem:[%s321 + $0x28] sm:$0xff]
        %v732 = vld [vmem:[%s321 + $0x30] sm:$0xff]
        %v733 = vld [vmem:[%s321 + $0x38] sm:$0xff]
        %v734 = vld [vmem:[%s321 + $0x40] sm:$0xff]
        %v735 = vld [vmem:[%s321 + $0x48] sm:$0xff]
        %v736 = vld [vmem:[%s321 + $0x50] sm:$0xff]
        %v737 = vld [vmem:[%s321 + $0x58] sm:$0xff]
        %v738 = vld [vmem:[%s321 + $0x60] sm:$0xff]
        %v739 = vld [vmem:[%s321 + $0x68] sm:$0xff]
        %v740 = vld [vmem:[%s321 + $0x70] sm:$0xff]
        %v741 = vld [vmem:[%s321 + $0x78] sm:$0xff]
        %v742 = vld [vmem:[%s321 + $0x80] sm:$0xff]
        %v743 = vld [vmem:[%s321 + $0x88] sm:$0xff]
        %v744 = vld [vmem:[%s321 + $0x90] sm:$0xff]
        %v745 = vld [vmem:[%s321 + $0x98] sm:$0xff]
        %v746 = vld [vmem:[%s321 + $0xa0] sm:$0xff]
        %v747 = vld [vmem:[%s321 + $0xa8] sm:$0xff]
        %v748 = vld [vmem:[%s321 + $0xb0] sm:$0xff]
        %v749 = vld [vmem:[%s321 + $0xb8] sm:$0xff]
        %v750 = vld [vmem:[%s321 + $0xc0] sm:$0xff]
        %v751 = vld [vmem:[%s321 + $0xc8] sm:$0xff]
        %v752 = vld [vmem:[%s321 + $0xd0] sm:$0xff]
        %v753 = vld [vmem:[%s321 + $0xd8] sm:$0xff]
        %v754 = vld [vmem:[%s321 + $0xe0] sm:$0xff]
        %v755 = vld [vmem:[%s321 + $0xe8] sm:$0xff]
        %v756 = vld [vmem:[%s321 + $0xf0] sm:$0xff]
        %v757 = vld [vmem:[%s321 + $0xf8] sm:$0xff]
        %790 = vrot.lane.b32.xlu0 %v568, 124
        %v791 = vpop.permute.xlu0 %790
        %792 = vrot.lane.b32.xlu0 %v571, 124
        %v793 = vpop.permute.xlu0 %792
        %794 = vrot.lane.b32.xlu0 %v576, 124
        %v795 = vpop.permute.xlu0 %794
        %796 = vrot.lane.b32.xlu0 %v579, 124
        %v797 = vpop.permute.xlu0 %796
        %798 = vrot.lane.b32.xlu0 %v584, 124
        %v799 = vpop.permute.xlu0 %798
        %800 = vrot.lane.b32.xlu0 %v587, 124
        %v801 = vpop.permute.xlu0 %800
        %802 = vrot.lane.b32.xlu0 %v592, 124
        %v803 = vpop.permute.xlu0 %802
        %804 = vrot.lane.b32.xlu0 %v595, 124
        %v805 = vpop.permute.xlu0 %804
        %806 = vrot.lane.b32.xlu0 %v600, 124
        %v807 = vpop.permute.xlu0 %806
        %808 = vrot.lane.b32.xlu0 %v603, 124
        %v809 = vpop.permute.xlu0 %808
        %810 = vrot.lane.b32.xlu0 %v608, 124
        %v811 = vpop.permute.xlu0 %810
        %812 = vrot.lane.b32.xlu0 %v611, 124
        %v813 = vpop.permute.xlu0 %812
        %814 = vrot.lane.b32.xlu0 %v616, 124
        %v815 = vpop.permute.xlu0 %814
        %816 = vrot.lane.b32.xlu0 %v619, 124
        %v817 = vpop.permute.xlu0 %816
        %818 = vrot.lane.b32.xlu0 %v624, 124
        %v819 = vpop.permute.xlu0 %818
        %820 = vrot.lane.b32.xlu0 %v627, 124
        %v821 = vpop.permute.xlu0 %820
        %822 = vrot.lane.b32.xlu0 %v632, 124
        %v823 = vpop.permute.xlu0 %822
        %824 = vrot.lane.b32.xlu0 %v635, 124
        %v825 = vpop.permute.xlu0 %824
        %826 = vrot.lane.b32.xlu0 %v640, 124
        %v827 = vpop.permute.xlu0 %826
        %828 = vrot.lane.b32.xlu0 %v643, 124
        %v829 = vpop.permute.xlu0 %828
        %830 = vrot.lane.b32.xlu0 %v648, 124
        %v831 = vpop.permute.xlu0 %830
        %832 = vrot.lane.b32.xlu0 %v651, 124
        %v833 = vpop.permute.xlu0 %832
        %834 = vrot.lane.b32.xlu0 %v656, 124
        %v835 = vpop.permute.xlu0 %834
        %836 = vrot.lane.b32.xlu0 %v659, 124
        %v837 = vpop.permute.xlu0 %836
        %838 = vrot.lane.b32.xlu0 %v664, 124
        %v839 = vpop.permute.xlu0 %838
        %840 = vrot.lane.b32.xlu0 %v667, 124
        %v841 = vpop.permute.xlu0 %840
        %842 = vrot.lane.b32.xlu0 %v672, 124
        %v843 = vpop.permute.xlu0 %842
        %844 = vrot.lane.b32.xlu0 %v675, 124
        %v845 = vpop.permute.xlu0 %844
        %846 = vrot.lane.b32.xlu0 %v680, 124
        %v847 = vpop.permute.xlu0 %846
        %848 = vrot.lane.b32.xlu0 %v683, 124
        %v849 = vpop.permute.xlu0 %848
        %850 = vrot.lane.b32.xlu0 %v688, 124
        %v851 = vpop.permute.xlu0 %850
        %852 = vrot.lane.b32.xlu0 %v691, 124
        %v853 = vpop.permute.xlu0 %852
        %v886 = vmax.f32 %v568, %v791
        %v887 = vmax.f32 %v571, %v793
        %v888 = vmax.f32 %v576, %v795
        %v889 = vmax.f32 %v579, %v797
        %v890 = vmax.f32 %v584, %v799
        %v891 = vmax.f32 %v587, %v801
        %v892 = vmax.f32 %v592, %v803
        %v893 = vmax.f32 %v595, %v805
        %v894 = vmax.f32 %v600, %v807
        %v895 = vmax.f32 %v603, %v809
        %v896 = vmax.f32 %v608, %v811
        %v897 = vmax.f32 %v611, %v813
        %v898 = vmax.f32 %v616, %v815
        %v899 = vmax.f32 %v619, %v817
        %v900 = vmax.f32 %v624, %v819
        %v901 = vmax.f32 %v627, %v821
        %v902 = vmax.f32 %v632, %v823
        %v903 = vmax.f32 %v635, %v825
        %v904 = vmax.f32 %v640, %v827
        %v905 = vmax.f32 %v643, %v829
        %v906 = vmax.f32 %v648, %v831
        %v907 = vmax.f32 %v651, %v833
        %v908 = vmax.f32 %v656, %v835
        %v909 = vmax.f32 %v659, %v837
        %v910 = vmax.f32 %v664, %v839
        %v911 = vmax.f32 %v667, %v841
        %v912 = vmax.f32 %v672, %v843
        %v913 = vmax.f32 %v675, %v845
        %v914 = vmax.f32 %v680, %v847
        %v915 = vmax.f32 %v683, %v849
        %v916 = vmax.f32 %v688, %v851
        %v917 = vmax.f32 %v691, %v853
        %v918 = vsub.f32 %v568, %v886
        %v919 = vsub.f32 %v571, %v887
        %v920 = vsub.f32 %v576, %v888
        %v921 = vsub.f32 %v579, %v889
        %v922 = vsub.f32 %v584, %v890
        %v923 = vsub.f32 %v587, %v891
        %v924 = vsub.f32 %v592, %v892
        %v925 = vsub.f32 %v595, %v893
        %v926 = vsub.f32 %v600, %v894
        %v927 = vsub.f32 %v603, %v895
        %v928 = vsub.f32 %v608, %v896
        %v929 = vsub.f32 %v611, %v897
        %v930 = vsub.f32 %v616, %v898
        %v931 = vsub.f32 %v619, %v899
        %v932 = vsub.f32 %v624, %v900
        %v933 = vsub.f32 %v627, %v901
        %v934 = vsub.f32 %v632, %v902
        %v935 = vsub.f32 %v635, %v903
        %v936 = vsub.f32 %v640, %v904
        %v937 = vsub.f32 %v643, %v905
        %v938 = vsub.f32 %v648, %v906
        %v939 = vsub.f32 %v651, %v907
        %v940 = vsub.f32 %v656, %v908
        %v941 = vsub.f32 %v659, %v909
        %v942 = vsub.f32 %v664, %v910
        %v943 = vsub.f32 %v667, %v911
        %v944 = vsub.f32 %v672, %v912
        %v945 = vsub.f32 %v675, %v913
        %v946 = vsub.f32 %v680, %v914
        %v947 = vsub.f32 %v683, %v915
        %v948 = vsub.f32 %v688, %v916
        %v949 = vsub.f32 %v691, %v917
        %v950 = vmul.f32 %v918, 1.442695
        %v951 = vpow.pop %v950
        %v952 = vmul.f32 %v919, 1.442695
        %v953 = vpow.pop %v952
        %v954 = vmul.f32 %v920, 1.442695
        %v955 = vpow.pop %v954
        %v956 = vmul.f32 %v921, 1.442695
        %v957 = vpow.pop %v956
        %v958 = vmul.f32 %v922, 1.442695
        %v959 = vpow.pop %v958
        %v960 = vmul.f32 %v923, 1.442695
        %v961 = vpow.pop %v960
        %v962 = vmul.f32 %v924, 1.442695
        %v963 = vpow.pop %v962
        %v964 = vmul.f32 %v925, 1.442695
        %v965 = vpow.pop %v964
        %v966 = vmul.f32 %v926, 1.442695
        %v967 = vpow.pop %v966
        %v968 = vmul.f32 %v927, 1.442695
        %v969 = vpow.pop %v968
        %v970 = vmul.f32 %v928, 1.442695
        %v971 = vpow.pop %v970
        %v972 = vmul.f32 %v929, 1.442695
        %v973 = vpow.pop %v972
        %v974 = vmul.f32 %v930, 1.442695
        %v975 = vpow.pop %v974
        %v976 = vmul.f32 %v931, 1.442695
        %v977 = vpow.pop %v976
        %v978 = vmul.f32 %v932, 1.442695
        %v979 = vpow.pop %v978
        %v980 = vmul.f32 %v933, 1.442695
        %v981 = vpow.pop %v980
        %v982 = vmul.f32 %v934, 1.442695
        %v983 = vpow.pop %v982
        %v984 = vmul.f32 %v935, 1.442695
        %v985 = vpow.pop %v984
        %v986 = vmul.f32 %v936, 1.442695
        %v987 = vpow.pop %v986
        %v988 = vmul.f32 %v937, 1.442695
        %v989 = vpow.pop %v988
        %v990 = vmul.f32 %v938, 1.442695
        %v991 = vpow.pop %v990
        %v992 = vmul.f32 %v939, 1.442695
        %v993 = vpow.pop %v992
        %v994 = vmul.f32 %v940, 1.442695
        %v995 = vpow.pop %v994
        %v996 = vmul.f32 %v941, 1.442695
        %v997 = vpow.pop %v996
        %v998 = vmul.f32 %v942, 1.442695
        %v999 = vpow.pop %v998
        %v1000 = vmul.f32 %v943, 1.442695
        %v1001 = vpow.pop %v1000
        %v1002 = vmul.f32 %v944, 1.442695
        %v1003 = vpow.pop %v1002
        %v1004 = vmul.f32 %v945, 1.442695
        %v1005 = vpow.pop %v1004
        %v1006 = vmul.f32 %v946, 1.442695
        %v1007 = vpow.pop %v1006
        %v1008 = vmul.f32 %v947, 1.442695
        %v1009 = vpow.pop %v1008
        %v1010 = vmul.f32 %v948, 1.442695
        %v1011 = vpow.pop %v1010
        %v1012 = vmul.f32 %v949, 1.442695
        %v1013 = vpow.pop %v1012
        %1015 = vset.pattern.permute.xlu0 0
        %1016 = vperm.xlu0 %1015, %v726
        %v1017 = vpop.permute.xlu0 %1016
        %1020 = vset.pattern.permute.xlu0 0
        %1021 = vperm.xlu0 %1020, %v727
        %v1022 = vpop.permute.xlu0 %1021
        %1025 = vset.pattern.permute.xlu0 0
        %1026 = vperm.xlu0 %1025, %v728
        %v1027 = vpop.permute.xlu0 %1026
        %1030 = vset.pattern.permute.xlu0 0
        %1031 = vperm.xlu0 %1030, %v729
        %v1032 = vpop.permute.xlu0 %1031
        %1035 = vset.pattern.permute.xlu0 0
        %1036 = vperm.xlu0 %1035, %v730
        %v1037 = vpop.permute.xlu0 %1036
        %1040 = vset.pattern.permute.xlu0 0
        %1041 = vperm.xlu0 %1040, %v731
        %v1042 = vpop.permute.xlu0 %1041
        %1045 = vset.pattern.permute.xlu0 0
        %1046 = vperm.xlu0 %1045, %v732
        %v1047 = vpop.permute.xlu0 %1046
        %1050 = vset.pattern.permute.xlu0 0
        %1051 = vperm.xlu0 %1050, %v733
        %v1052 = vpop.permute.xlu0 %1051
        %1055 = vset.pattern.permute.xlu0 0
        %1056 = vperm.xlu0 %1055, %v734
        %v1057 = vpop.permute.xlu0 %1056
        %1060 = vset.pattern.permute.xlu0 0
        %1061 = vperm.xlu0 %1060, %v735
        %v1062 = vpop.permute.xlu0 %1061
        %1065 = vset.pattern.permute.xlu0 0
        %1066 = vperm.xlu0 %1065, %v736
        %v1067 = vpop.permute.xlu0 %1066
        %1070 = vset.pattern.permute.xlu0 0
        %1071 = vperm.xlu0 %1070, %v737
        %v1072 = vpop.permute.xlu0 %1071
        %1075 = vset.pattern.permute.xlu0 0
        %1076 = vperm.xlu0 %1075, %v738
        %v1077 = vpop.permute.xlu0 %1076
        %1080 = vset.pattern.permute.xlu0 0
        %1081 = vperm.xlu0 %1080, %v739
        %v1082 = vpop.permute.xlu0 %1081
        %1085 = vset.pattern.permute.xlu0 0
        %1086 = vperm.xlu0 %1085, %v740
        %v1087 = vpop.permute.xlu0 %1086
        %1090 = vset.pattern.permute.xlu0 0
        %1091 = vperm.xlu0 %1090, %v741
        %v1092 = vpop.permute.xlu0 %1091
        %1095 = vset.pattern.permute.xlu0 0
        %1096 = vperm.xlu0 %1095, %v742
        %v1097 = vpop.permute.xlu0 %1096
        %1100 = vset.pattern.permute.xlu0 0
        %1101 = vperm.xlu0 %1100, %v743
        %v1102 = vpop.permute.xlu0 %1101
        %1105 = vset.pattern.permute.xlu0 0
        %1106 = vperm.xlu0 %1105, %v744
        %v1107 = vpop.permute.xlu0 %1106
        %1110 = vset.pattern.permute.xlu0 0
        %1111 = vperm.xlu0 %1110, %v745
        %v1112 = vpop.permute.xlu0 %1111
        %1115 = vset.pattern.permute.xlu0 0
        %1116 = vperm.xlu0 %1115, %v746
        %v1117 = vpop.permute.xlu0 %1116
        %1120 = vset.pattern.permute.xlu0 0
        %1121 = vperm.xlu0 %1120, %v747
        %v1122 = vpop.permute.xlu0 %1121
        %1125 = vset.pattern.permute.xlu0 0
        %1126 = vperm.xlu0 %1125, %v748
        %v1127 = vpop.permute.xlu0 %1126
        %1130 = vset.pattern.permute.xlu0 0
        %1131 = vperm.xlu0 %1130, %v749
        %v1132 = vpop.permute.xlu0 %1131
        %1135 = vset.pattern.permute.xlu0 0
        %1136 = vperm.xlu0 %1135, %v750
        %v1137 = vpop.permute.xlu0 %1136
        %1140 = vset.pattern.permute.xlu0 0
        %1141 = vperm.xlu0 %1140, %v751
        %v1142 = vpop.permute.xlu0 %1141
        %1145 = vset.pattern.permute.xlu0 0
        %1146 = vperm.xlu0 %1145, %v752
        %v1147 = vpop.permute.xlu0 %1146
        %1150 = vset.pattern.permute.xlu0 0
        %1151 = vperm.xlu0 %1150, %v753
        %v1152 = vpop.permute.xlu0 %1151
        %1155 = vset.pattern.permute.xlu0 0
        %1156 = vperm.xlu0 %1155, %v754
        %v1157 = vpop.permute.xlu0 %1156
        %1160 = vset.pattern.permute.xlu0 0
        %1161 = vperm.xlu0 %1160, %v755
        %v1162 = vpop.permute.xlu0 %1161
        %1165 = vset.pattern.permute.xlu0 0
        %1166 = vperm.xlu0 %1165, %v756
        %v1167 = vpop.permute.xlu0 %1166
        %1170 = vset.pattern.permute.xlu0 0
        %1171 = vperm.xlu0 %1170, %v757
        %v1172 = vpop.permute.xlu0 %1171
        %v1174 = vmul.f32 %v1017, %v951
        %v1175 = vmul.f32 %v1022, %v953
        %v1176 = vmul.f32 %v1027, %v955
        %v1177 = vmul.f32 %v1032, %v957
        %v1178 = vmul.f32 %v1037, %v959
        %v1179 = vmul.f32 %v1042, %v961
        %v1180 = vmul.f32 %v1047, %v963
        %v1181 = vmul.f32 %v1052, %v965
        %v1182 = vmul.f32 %v1057, %v967
        %v1183 = vmul.f32 %v1062, %v969
        %v1184 = vmul.f32 %v1067, %v971
        %v1185 = vmul.f32 %v1072, %v973
        %v1186 = vmul.f32 %v1077, %v975
        %v1187 = vmul.f32 %v1082, %v977
        %v1188 = vmul.f32 %v1087, %v979
        %v1189 = vmul.f32 %v1092, %v981
        %v1190 = vmul.f32 %v1097, %v983
        %v1191 = vmul.f32 %v1102, %v985
        %v1192 = vmul.f32 %v1107, %v987
        %v1193 = vmul.f32 %v1112, %v989
        %v1194 = vmul.f32 %v1117, %v991
        %v1195 = vmul.f32 %v1122, %v993
        %v1196 = vmul.f32 %v1127, %v995
        %v1197 = vmul.f32 %v1132, %v997
        %v1198 = vmul.f32 %v1137, %v999
        %v1199 = vmul.f32 %v1142, %v1001
        %v1200 = vmul.f32 %v1147, %v1003
        %v1201 = vmul.f32 %v1152, %v1005
        %v1202 = vmul.f32 %v1157, %v1007
        %v1203 = vmul.f32 %v1162, %v1009
        %v1204 = vmul.f32 %v1167, %v1011
        %v1205 = vmul.f32 %v1172, %v1013
        %v1206 = vadd.f32 %v1174, 0.0
        %v1207 = vadd.f32 %v1175, 0.0
        %v1208 = vadd.f32 %v1176, 0.0
        %v1209 = vadd.f32 %v1177, 0.0
        %v1210 = vadd.f32 %v1178, 0.0
        %v1211 = vadd.f32 %v1179, 0.0
        %v1212 = vadd.f32 %v1180, 0.0
        %v1213 = vadd.f32 %v1181, 0.0
        %v1214 = vadd.f32 %v1182, 0.0
        %v1215 = vadd.f32 %v1183, 0.0
        %v1216 = vadd.f32 %v1184, 0.0
        %v1217 = vadd.f32 %v1185, 0.0
        %v1218 = vadd.f32 %v1186, 0.0
        %v1219 = vadd.f32 %v1187, 0.0
        %v1220 = vadd.f32 %v1188, 0.0
        %v1221 = vadd.f32 %v1189, 0.0
        %v1222 = vadd.f32 %v1190, 0.0
        %v1223 = vadd.f32 %v1191, 0.0
        %v1224 = vadd.f32 %v1192, 0.0
        %v1225 = vadd.f32 %v1193, 0.0
        %v1226 = vadd.f32 %v1194, 0.0
        %v1227 = vadd.f32 %v1195, 0.0
        %v1228 = vadd.f32 %v1196, 0.0
        %v1229 = vadd.f32 %v1197, 0.0
        %v1230 = vadd.f32 %v1198, 0.0
        %v1231 = vadd.f32 %v1199, 0.0
        %v1232 = vadd.f32 %v1200, 0.0
        %v1233 = vadd.f32 %v1201, 0.0
        %v1234 = vadd.f32 %v1202, 0.0
        %v1235 = vadd.f32 %v1203, 0.0
        %v1236 = vadd.f32 %v1204, 0.0
        %v1237 = vadd.f32 %v1205, 0.0
        %1270 = vrot.lane.b32.xlu0 %v886, 4
        %v1271 = vpop.permute.xlu0 %1270
        %1272 = vrot.lane.b32.xlu0 %v887, 4
        %v1273 = vpop.permute.xlu0 %1272
        %1274 = vrot.lane.b32.xlu0 %v888, 4
        %v1275 = vpop.permute.xlu0 %1274
        %1276 = vrot.lane.b32.xlu0 %v889, 4
        %v1277 = vpop.permute.xlu0 %1276
        %1278 = vrot.lane.b32.xlu0 %v890, 4
        %v1279 = vpop.permute.xlu0 %1278
        %1280 = vrot.lane.b32.xlu0 %v891, 4
        %v1281 = vpop.permute.xlu0 %1280
        %1282 = vrot.lane.b32.xlu0 %v892, 4
        %v1283 = vpop.permute.xlu0 %1282
        %1284 = vrot.lane.b32.xlu0 %v893, 4
        %v1285 = vpop.permute.xlu0 %1284
        %1286 = vrot.lane.b32.xlu0 %v894, 4
        %v1287 = vpop.permute.xlu0 %1286
        %1288 = vrot.lane.b32.xlu0 %v895, 4
        %v1289 = vpop.permute.xlu0 %1288
        %1290 = vrot.lane.b32.xlu0 %v896, 4
        %v1291 = vpop.permute.xlu0 %1290
        %1292 = vrot.lane.b32.xlu0 %v897, 4
        %v1293 = vpop.permute.xlu0 %1292
        %1294 = vrot.lane.b32.xlu0 %v898, 4
        %v1295 = vpop.permute.xlu0 %1294
        %1296 = vrot.lane.b32.xlu0 %v899, 4
        %v1297 = vpop.permute.xlu0 %1296
        %1298 = vrot.lane.b32.xlu0 %v900, 4
        %v1299 = vpop.permute.xlu0 %1298
        %1300 = vrot.lane.b32.xlu0 %v901, 4
        %v1301 = vpop.permute.xlu0 %1300
        %1302 = vrot.lane.b32.xlu0 %v902, 4
        %v1303 = vpop.permute.xlu0 %1302
        %1304 = vrot.lane.b32.xlu0 %v903, 4
        %v1305 = vpop.permute.xlu0 %1304
        %1306 = vrot.lane.b32.xlu0 %v904, 4
        %v1307 = vpop.permute.xlu0 %1306
        %1308 = vrot.lane.b32.xlu0 %v905, 4
        %v1309 = vpop.permute.xlu0 %1308
        %1310 = vrot.lane.b32.xlu0 %v906, 4
        %v1311 = vpop.permute.xlu0 %1310
        %1312 = vrot.lane.b32.xlu0 %v907, 4
        %v1313 = vpop.permute.xlu0 %1312
        %1314 = vrot.lane.b32.xlu0 %v908, 4
        %v1315 = vpop.permute.xlu0 %1314
        %1316 = vrot.lane.b32.xlu0 %v909, 4
        %v1317 = vpop.permute.xlu0 %1316
        %1318 = vrot.lane.b32.xlu0 %v910, 4
        %v1319 = vpop.permute.xlu0 %1318
        %1320 = vrot.lane.b32.xlu0 %v911, 4
        %v1321 = vpop.permute.xlu0 %1320
        %1322 = vrot.lane.b32.xlu0 %v912, 4
        %v1323 = vpop.permute.xlu0 %1322
        %1324 = vrot.lane.b32.xlu0 %v913, 4
        %v1325 = vpop.permute.xlu0 %1324
        %1326 = vrot.lane.b32.xlu0 %v914, 4
        %v1327 = vpop.permute.xlu0 %1326
        %1328 = vrot.lane.b32.xlu0 %v915, 4
        %v1329 = vpop.permute.xlu0 %1328
        %1330 = vrot.lane.b32.xlu0 %v916, 4
        %v1331 = vpop.permute.xlu0 %1330
        %1332 = vrot.lane.b32.xlu0 %v917, 4
        %v1333 = vpop.permute.xlu0 %1332
        %v1366 = vsub.f32 %v568, %v1271
        %v1367 = vsub.f32 %v571, %v1273
        %v1368 = vsub.f32 %v576, %v1275
        %v1369 = vsub.f32 %v579, %v1277
        %v1370 = vsub.f32 %v584, %v1279
        %v1371 = vsub.f32 %v587, %v1281
        %v1372 = vsub.f32 %v592, %v1283
        %v1373 = vsub.f32 %v595, %v1285
        %v1374 = vsub.f32 %v600, %v1287
        %v1375 = vsub.f32 %v603, %v1289
        %v1376 = vsub.f32 %v608, %v1291
        %v1377 = vsub.f32 %v611, %v1293
        %v1378 = vsub.f32 %v616, %v1295
        %v1379 = vsub.f32 %v619, %v1297
        %v1380 = vsub.f32 %v624, %v1299
        %v1381 = vsub.f32 %v627, %v1301
        %v1382 = vsub.f32 %v632, %v1303
        %v1383 = vsub.f32 %v635, %v1305
        %v1384 = vsub.f32 %v640, %v1307
        %v1385 = vsub.f32 %v643, %v1309
        %v1386 = vsub.f32 %v648, %v1311
        %v1387 = vsub.f32 %v651, %v1313
        %v1388 = vsub.f32 %v656, %v1315
        %v1389 = vsub.f32 %v659, %v1317
        %v1390 = vsub.f32 %v664, %v1319
        %v1391 = vsub.f32 %v667, %v1321
        %v1392 = vsub.f32 %v672, %v1323
        %v1393 = vsub.f32 %v675, %v1325
        %v1394 = vsub.f32 %v680, %v1327
        %v1395 = vsub.f32 %v683, %v1329
        %v1396 = vsub.f32 %v688, %v1331
        %v1397 = vsub.f32 %v691, %v1333
        %v1398 = vmul.f32 %v1366, 1.442695
        %v1399 = vpow.pop %v1398
        %v1400 = vmul.f32 %v1367, 1.442695
        %v1401 = vpow.pop %v1400
        %v1402 = vmul.f32 %v1368, 1.442695
        %v1403 = vpow.pop %v1402
        %v1404 = vmul.f32 %v1369, 1.442695
        %v1405 = vpow.pop %v1404
        %v1406 = vmul.f32 %v1370, 1.442695
        %v1407 = vpow.pop %v1406
        %v1408 = vmul.f32 %v1371, 1.442695
        %v1409 = vpow.pop %v1408
        %v1410 = vmul.f32 %v1372, 1.442695
        %v1411 = vpow.pop %v1410
        %v1412 = vmul.f32 %v1373, 1.442695
        %v1413 = vpow.pop %v1412
        %v1414 = vmul.f32 %v1374, 1.442695
        %v1415 = vpow.pop %v1414
        %v1416 = vmul.f32 %v1375, 1.442695
        %v1417 = vpow.pop %v1416
        %v1418 = vmul.f32 %v1376, 1.442695
        %v1419 = vpow.pop %v1418
        %v1420 = vmul.f32 %v1377, 1.442695
        %v1421 = vpow.pop %v1420
        %v1422 = vmul.f32 %v1378, 1.442695
        %v1423 = vpow.pop %v1422
        %v1424 = vmul.f32 %v1379, 1.442695
        %v1425 = vpow.pop %v1424
        %v1426 = vmul.f32 %v1380, 1.442695
        %v1427 = vpow.pop %v1426
        %v1428 = vmul.f32 %v1381, 1.442695
        %v1429 = vpow.pop %v1428
        %v1430 = vmul.f32 %v1382, 1.442695
        %v1431 = vpow.pop %v1430
        %v1432 = vmul.f32 %v1383, 1.442695
        %v1433 = vpow.pop %v1432
        %v1434 = vmul.f32 %v1384, 1.442695
        %v1435 = vpow.pop %v1434
        %v1436 = vmul.f32 %v1385, 1.442695
        %v1437 = vpow.pop %v1436
        %v1438 = vmul.f32 %v1386, 1.442695
        %v1439 = vpow.pop %v1438
        %v1440 = vmul.f32 %v1387, 1.442695
        %v1441 = vpow.pop %v1440
        %v1442 = vmul.f32 %v1388, 1.442695
        %v1443 = vpow.pop %v1442
        %v1444 = vmul.f32 %v1389, 1.442695
        %v1445 = vpow.pop %v1444
        %v1446 = vmul.f32 %v1390, 1.442695
        %v1447 = vpow.pop %v1446
        %v1448 = vmul.f32 %v1391, 1.442695
        %v1449 = vpow.pop %v1448
        %v1450 = vmul.f32 %v1392, 1.442695
        %v1451 = vpow.pop %v1450
        %v1452 = vmul.f32 %v1393, 1.442695
        %v1453 = vpow.pop %v1452
        %v1454 = vmul.f32 %v1394, 1.442695
        %v1455 = vpow.pop %v1454
        %v1456 = vmul.f32 %v1395, 1.442695
        %v1457 = vpow.pop %v1456
        %v1458 = vmul.f32 %v1396, 1.442695
        %v1459 = vpow.pop %v1458
        %v1460 = vmul.f32 %v1397, 1.442695
        %v1461 = vpow.pop %v1460
        %1462 = vset.pattern.permute.xlu0 1
        %1463 = vperm.xlu0 %1462, %v726
        %v1464 = vpop.permute.xlu0 %1463
        %1466 = vset.pattern.permute.xlu0 1
        %1467 = vperm.xlu0 %1466, %v727
        %v1468 = vpop.permute.xlu0 %1467
        %1470 = vset.pattern.permute.xlu0 1
        %1471 = vperm.xlu0 %1470, %v728
        %v1472 = vpop.permute.xlu0 %1471
        %1474 = vset.pattern.permute.xlu0 1
        %1475 = vperm.xlu0 %1474, %v729
        %v1476 = vpop.permute.xlu0 %1475
        %1478 = vset.pattern.permute.xlu0 1
        %1479 = vperm.xlu0 %1478, %v730
        %v1480 = vpop.permute.xlu0 %1479
        %1482 = vset.pattern.permute.xlu0 1
        %1483 = vperm.xlu0 %1482, %v731
        %v1484 = vpop.permute.xlu0 %1483
        %1486 = vset.pattern.permute.xlu0 1
        %1487 = vperm.xlu0 %1486, %v732
        %v1488 = vpop.permute.xlu0 %1487
        %1490 = vset.pattern.permute.xlu0 1
        %1491 = vperm.xlu0 %1490, %v733
        %v1492 = vpop.permute.xlu0 %1491
        %1494 = vset.pattern.permute.xlu0 1
        %1495 = vperm.xlu0 %1494, %v734
        %v1496 = vpop.permute.xlu0 %1495
        %1498 = vset.pattern.permute.xlu0 1
        %1499 = vperm.xlu0 %1498, %v735
        %v1500 = vpop.permute.xlu0 %1499
        %1502 = vset.pattern.permute.xlu0 1
        %1503 = vperm.xlu0 %1502, %v736
        %v1504 = vpop.permute.xlu0 %1503
        %1506 = vset.pattern.permute.xlu0 1
        %1507 = vperm.xlu0 %1506, %v737
        %v1508 = vpop.permute.xlu0 %1507
        %1510 = vset.pattern.permute.xlu0 1
        %1511 = vperm.xlu0 %1510, %v738
        %v1512 = vpop.permute.xlu0 %1511
        %1514 = vset.pattern.permute.xlu0 1
        %1515 = vperm.xlu0 %1514, %v739
        %v1516 = vpop.permute.xlu0 %1515
        %1518 = vset.pattern.permute.xlu0 1
        %1519 = vperm.xlu0 %1518, %v740
        %v1520 = vpop.permute.xlu0 %1519
        %1522 = vset.pattern.permute.xlu0 1
        %1523 = vperm.xlu0 %1522, %v741
        %v1524 = vpop.permute.xlu0 %1523
        %1526 = vset.pattern.permute.xlu0 1
        %1527 = vperm.xlu0 %1526, %v742
        %v1528 = vpop.permute.xlu0 %1527
        %1530 = vset.pattern.permute.xlu0 1
        %1531 = vperm.xlu0 %1530, %v743
        %v1532 = vpop.permute.xlu0 %1531
        %1534 = vset.pattern.permute.xlu0 1
        %1535 = vperm.xlu0 %1534, %v744
        %v1536 = vpop.permute.xlu0 %1535
        %1538 = vset.pattern.permute.xlu0 1
        %1539 = vperm.xlu0 %1538, %v745
        %v1540 = vpop.permute.xlu0 %1539
        %1542 = vset.pattern.permute.xlu0 1
        %1543 = vperm.xlu0 %1542, %v746
        %v1544 = vpop.permute.xlu0 %1543
        %1546 = vset.pattern.permute.xlu0 1
        %1547 = vperm.xlu0 %1546, %v747
        %v1548 = vpop.permute.xlu0 %1547
        %1550 = vset.pattern.permute.xlu0 1
        %1551 = vperm.xlu0 %1550, %v748
        %v1552 = vpop.permute.xlu0 %1551
        %1554 = vset.pattern.permute.xlu0 1
        %1555 = vperm.xlu0 %1554, %v749
        %v1556 = vpop.permute.xlu0 %1555
        %1558 = vset.pattern.permute.xlu0 1
        %1559 = vperm.xlu0 %1558, %v750
        %v1560 = vpop.permute.xlu0 %1559
        %1562 = vset.pattern.permute.xlu0 1
        %1563 = vperm.xlu0 %1562, %v751
        %v1564 = vpop.permute.xlu0 %1563
        %1566 = vset.pattern.permute.xlu0 1
        %1567 = vperm.xlu0 %1566, %v752
        %v1568 = vpop.permute.xlu0 %1567
        %1570 = vset.pattern.permute.xlu0 1
        %1571 = vperm.xlu0 %1570, %v753
        %v1572 = vpop.permute.xlu0 %1571
        %1574 = vset.pattern.permute.xlu0 1
        %1575 = vperm.xlu0 %1574, %v754
        %v1576 = vpop.permute.xlu0 %1575
        %1578 = vset.pattern.permute.xlu0 1
        %1579 = vperm.xlu0 %1578, %v755
        %v1580 = vpop.permute.xlu0 %1579
        %1582 = vset.pattern.permute.xlu0 1
        %1583 = vperm.xlu0 %1582, %v756
        %v1584 = vpop.permute.xlu0 %1583
        %1586 = vset.pattern.permute.xlu0 1
        %1587 = vperm.xlu0 %1586, %v757
        %v1588 = vpop.permute.xlu0 %1587
        %v1590 = vmul.f32 %v1464, %v1399
        %v1591 = vmul.f32 %v1468, %v1401
        %v1592 = vmul.f32 %v1472, %v1403
        %v1593 = vmul.f32 %v1476, %v1405
        %v1594 = vmul.f32 %v1480, %v1407
        %v1595 = vmul.f32 %v1484, %v1409
        %v1596 = vmul.f32 %v1488, %v1411
        %v1597 = vmul.f32 %v1492, %v1413
        %v1598 = vmul.f32 %v1496, %v1415
        %v1599 = vmul.f32 %v1500, %v1417
        %v1600 = vmul.f32 %v1504, %v1419
        %v1601 = vmul.f32 %v1508, %v1421
        %v1602 = vmul.f32 %v1512, %v1423
        %v1603 = vmul.f32 %v1516, %v1425
        %v1604 = vmul.f32 %v1520, %v1427
        %v1605 = vmul.f32 %v1524, %v1429
        %v1606 = vmul.f32 %v1528, %v1431
        %v1607 = vmul.f32 %v1532, %v1433
        %v1608 = vmul.f32 %v1536, %v1435
        %v1609 = vmul.f32 %v1540, %v1437
        %v1610 = vmul.f32 %v1544, %v1439
        %v1611 = vmul.f32 %v1548, %v1441
        %v1612 = vmul.f32 %v1552, %v1443
        %v1613 = vmul.f32 %v1556, %v1445
        %v1614 = vmul.f32 %v1560, %v1447
        %v1615 = vmul.f32 %v1564, %v1449
        %v1616 = vmul.f32 %v1568, %v1451
        %v1617 = vmul.f32 %v1572, %v1453
        %v1618 = vmul.f32 %v1576, %v1455
        %v1619 = vmul.f32 %v1580, %v1457
        %v1620 = vmul.f32 %v1584, %v1459
        %v1621 = vmul.f32 %v1588, %v1461
        %1654 = vrot.lane.b32.xlu0 %v1590, 124
        %v1655 = vpop.permute.xlu0 %1654
        %1656 = vrot.lane.b32.xlu0 %v1591, 124
        %v1657 = vpop.permute.xlu0 %1656
        %1658 = vrot.lane.b32.xlu0 %v1592, 124
        %v1659 = vpop.permute.xlu0 %1658
        %1660 = vrot.lane.b32.xlu0 %v1593, 124
        %v1661 = vpop.permute.xlu0 %1660
        %1662 = vrot.lane.b32.xlu0 %v1594, 124
        %v1663 = vpop.permute.xlu0 %1662
        %1664 = vrot.lane.b32.xlu0 %v1595, 124
        %v1665 = vpop.permute.xlu0 %1664
        %1666 = vrot.lane.b32.xlu0 %v1596, 124
        %v1667 = vpop.permute.xlu0 %1666
        %1668 = vrot.lane.b32.xlu0 %v1597, 124
        %v1669 = vpop.permute.xlu0 %1668
        %1670 = vrot.lane.b32.xlu0 %v1598, 124
        %v1671 = vpop.permute.xlu0 %1670
        %1672 = vrot.lane.b32.xlu0 %v1599, 124
        %v1673 = vpop.permute.xlu0 %1672
        %1674 = vrot.lane.b32.xlu0 %v1600, 124
        %v1675 = vpop.permute.xlu0 %1674
        %1676 = vrot.lane.b32.xlu0 %v1601, 124
        %v1677 = vpop.permute.xlu0 %1676
        %1678 = vrot.lane.b32.xlu0 %v1602, 124
        %v1679 = vpop.permute.xlu0 %1678
        %1680 = vrot.lane.b32.xlu0 %v1603, 124
        %v1681 = vpop.permute.xlu0 %1680
        %1682 = vrot.lane.b32.xlu0 %v1604, 124
        %v1683 = vpop.permute.xlu0 %1682
        %1684 = vrot.lane.b32.xlu0 %v1605, 124
        %v1685 = vpop.permute.xlu0 %1684
        %1686 = vrot.lane.b32.xlu0 %v1606, 124
        %v1687 = vpop.permute.xlu0 %1686
        %1688 = vrot.lane.b32.xlu0 %v1607, 124
        %v1689 = vpop.permute.xlu0 %1688
        %1690 = vrot.lane.b32.xlu0 %v1608, 124
        %v1691 = vpop.permute.xlu0 %1690
        %1692 = vrot.lane.b32.xlu0 %v1609, 124
        %v1693 = vpop.permute.xlu0 %1692
        %1694 = vrot.lane.b32.xlu0 %v1610, 124
        %v1695 = vpop.permute.xlu0 %1694
        %1696 = vrot.lane.b32.xlu0 %v1611, 124
        %v1697 = vpop.permute.xlu0 %1696
        %1698 = vrot.lane.b32.xlu0 %v1612, 124
        %v1699 = vpop.permute.xlu0 %1698
        %1700 = vrot.lane.b32.xlu0 %v1613, 124
        %v1701 = vpop.permute.xlu0 %1700
        %1702 = vrot.lane.b32.xlu0 %v1614, 124
        %v1703 = vpop.permute.xlu0 %1702
        %1704 = vrot.lane.b32.xlu0 %v1615, 124
        %v1705 = vpop.permute.xlu0 %1704
        %1706 = vrot.lane.b32.xlu0 %v1616, 124
        %v1707 = vpop.permute.xlu0 %1706
        %1708 = vrot.lane.b32.xlu0 %v1617, 124
        %v1709 = vpop.permute.xlu0 %1708
        %1710 = vrot.lane.b32.xlu0 %v1618, 124
        %v1711 = vpop.permute.xlu0 %1710
        %1712 = vrot.lane.b32.xlu0 %v1619, 124
        %v1713 = vpop.permute.xlu0 %1712
        %1714 = vrot.lane.b32.xlu0 %v1620, 124
        %v1715 = vpop.permute.xlu0 %1714
        %1716 = vrot.lane.b32.xlu0 %v1621, 124
        %v1717 = vpop.permute.xlu0 %1716
        %v1750 = vadd.f32 %v1206, %v1655
        %v1751 = vadd.f32 %v1207, %v1657
        %v1752 = vadd.f32 %v1208, %v1659
        %v1753 = vadd.f32 %v1209, %v1661
        %v1754 = vadd.f32 %v1210, %v1663
        %v1755 = vadd.f32 %v1211, %v1665
        %v1756 = vadd.f32 %v1212, %v1667
        %v1757 = vadd.f32 %v1213, %v1669
        %v1758 = vadd.f32 %v1214, %v1671
        %v1759 = vadd.f32 %v1215, %v1673
        %v1760 = vadd.f32 %v1216, %v1675
        %v1761 = vadd.f32 %v1217, %v1677
        %v1762 = vadd.f32 %v1218, %v1679
        %v1763 = vadd.f32 %v1219, %v1681
        %v1764 = vadd.f32 %v1220, %v1683
        %v1765 = vadd.f32 %v1221, %v1685
        %v1766 = vadd.f32 %v1222, %v1687
        %v1767 = vadd.f32 %v1223, %v1689
        %v1768 = vadd.f32 %v1224, %v1691
        %v1769 = vadd.f32 %v1225, %v1693
        %v1770 = vadd.f32 %v1226, %v1695
        %v1771 = vadd.f32 %v1227, %v1697
        %v1772 = vadd.f32 %v1228, %v1699
        %v1773 = vadd.f32 %v1229, %v1701
        %v1774 = vadd.f32 %v1230, %v1703
        %v1775 = vadd.f32 %v1231, %v1705
        %v1776 = vadd.f32 %v1232, %v1707
        %v1777 = vadd.f32 %v1233, %v1709
        %v1778 = vadd.f32 %v1234, %v1711
        %v1779 = vadd.f32 %v1235, %v1713
        %v1780 = vadd.f32 %v1236, %v1715
        %v1781 = vadd.f32 %v1237, %v1717
        %vm1782 = vcmp.eq.f32.partialorder %v1750, 0.0
        %vm1783 = vcmp.eq.f32.partialorder %v1751, 0.0
        %vm1784 = vcmp.eq.f32.partialorder %v1752, 0.0
        %vm1785 = vcmp.eq.f32.partialorder %v1753, 0.0
        %vm1786 = vcmp.eq.f32.partialorder %v1754, 0.0
        %vm1787 = vcmp.eq.f32.partialorder %v1755, 0.0
        %vm1788 = vcmp.eq.f32.partialorder %v1756, 0.0
        %vm1789 = vcmp.eq.f32.partialorder %v1757, 0.0
        %vm1790 = vcmp.eq.f32.partialorder %v1758, 0.0
        %vm1791 = vcmp.eq.f32.partialorder %v1759, 0.0
        %vm1792 = vcmp.eq.f32.partialorder %v1760, 0.0
        %vm1793 = vcmp.eq.f32.partialorder %v1761, 0.0
        %vm1794 = vcmp.eq.f32.partialorder %v1762, 0.0
        %vm1795 = vcmp.eq.f32.partialorder %v1763, 0.0
        %vm1796 = vcmp.eq.f32.partialorder %v1764, 0.0
        %vm1797 = vcmp.eq.f32.partialorder %v1765, 0.0
        %vm1798 = vcmp.eq.f32.partialorder %v1766, 0.0
        %vm1799 = vcmp.eq.f32.partialorder %v1767, 0.0
        %vm1800 = vcmp.eq.f32.partialorder %v1768, 0.0
        %vm1801 = vcmp.eq.f32.partialorder %v1769, 0.0
        %vm1802 = vcmp.eq.f32.partialorder %v1770, 0.0
        %vm1803 = vcmp.eq.f32.partialorder %v1771, 0.0
        %vm1804 = vcmp.eq.f32.partialorder %v1772, 0.0
        %vm1805 = vcmp.eq.f32.partialorder %v1773, 0.0
        %vm1806 = vcmp.eq.f32.partialorder %v1774, 0.0
        %vm1807 = vcmp.eq.f32.partialorder %v1775, 0.0
        %vm1808 = vcmp.eq.f32.partialorder %v1776, 0.0
        %vm1809 = vcmp.eq.f32.partialorder %v1777, 0.0
        %vm1810 = vcmp.eq.f32.partialorder %v1778, 0.0
        %vm1811 = vcmp.eq.f32.partialorder %v1779, 0.0
        %vm1812 = vcmp.eq.f32.partialorder %v1780, 0.0
        %vm1813 = vcmp.eq.f32.partialorder %v1781, 0.0
        %v1814 = vsel %vm1782, 2.220446e-16, %v1750
        %v1815 = vsel %vm1783, 2.220446e-16, %v1751
        %v1816 = vsel %vm1784, 2.220446e-16, %v1752
        %v1817 = vsel %vm1785, 2.220446e-16, %v1753
        %v1818 = vsel %vm1786, 2.220446e-16, %v1754
        %v1819 = vsel %vm1787, 2.220446e-16, %v1755
        %v1820 = vsel %vm1788, 2.220446e-16, %v1756
        %v1821 = vsel %vm1789, 2.220446e-16, %v1757
        %v1822 = vsel %vm1790, 2.220446e-16, %v1758
        %v1823 = vsel %vm1791, 2.220446e-16, %v1759
        %v1824 = vsel %vm1792, 2.220446e-16, %v1760
        %v1825 = vsel %vm1793, 2.220446e-16, %v1761
        %v1826 = vsel %vm1794, 2.220446e-16, %v1762
        %v1827 = vsel %vm1795, 2.220446e-16, %v1763
        %v1828 = vsel %vm1796, 2.220446e-16, %v1764
        %v1829 = vsel %vm1797, 2.220446e-16, %v1765
        %v1830 = vsel %vm1798, 2.220446e-16, %v1766
        %v1831 = vsel %vm1799, 2.220446e-16, %v1767
        %v1832 = vsel %vm1800, 2.220446e-16, %v1768
        %v1833 = vsel %vm1801, 2.220446e-16, %v1769
        %v1834 = vsel %vm1802, 2.220446e-16, %v1770
        %v1835 = vsel %vm1803, 2.220446e-16, %v1771
        %v1836 = vsel %vm1804, 2.220446e-16, %v1772
        %v1837 = vsel %vm1805, 2.220446e-16, %v1773
        %v1838 = vsel %vm1806, 2.220446e-16, %v1774
        %v1839 = vsel %vm1807, 2.220446e-16, %v1775
        %v1840 = vsel %vm1808, 2.220446e-16, %v1776
        %v1841 = vsel %vm1809, 2.220446e-16, %v1777
        %v1842 = vsel %vm1810, 2.220446e-16, %v1778
        %v1843 = vsel %vm1811, 2.220446e-16, %v1779
        %v1844 = vsel %vm1812, 2.220446e-16, %v1780
        %v1845 = vsel %vm1813, 2.220446e-16, %v1781
        %1846 = vrot.lane.b32.xlu0 %v886, 96
        %v1847 = vpop.permute.xlu0 %1846
        %1848 = vrot.lane.b32.xlu0 %v887, 96
        %v1849 = vpop.permute.xlu0 %1848
        %1850 = vrot.lane.b32.xlu0 %v888, 96
        %v1851 = vpop.permute.xlu0 %1850
        %1852 = vrot.lane.b32.xlu0 %v889, 96
        %v1853 = vpop.permute.xlu0 %1852
        %1854 = vrot.lane.b32.xlu0 %v890, 96
        %v1855 = vpop.permute.xlu0 %1854
        %1856 = vrot.lane.b32.xlu0 %v891, 96
        %v1857 = vpop.permute.xlu0 %1856
        %1858 = vrot.lane.b32.xlu0 %v892, 96
        %v1859 = vpop.permute.xlu0 %1858
        %1860 = vrot.lane.b32.xlu0 %v893, 96
        %v1861 = vpop.permute.xlu0 %1860
        %1862 = vrot.lane.b32.xlu0 %v894, 96
        %v1863 = vpop.permute.xlu0 %1862
        %1864 = vrot.lane.b32.xlu0 %v895, 96
        %v1865 = vpop.permute.xlu0 %1864
        %1866 = vrot.lane.b32.xlu0 %v896, 96
        %v1867 = vpop.permute.xlu0 %1866
        %1868 = vrot.lane.b32.xlu0 %v897, 96
        %v1869 = vpop.permute.xlu0 %1868
        %1870 = vrot.lane.b32.xlu0 %v898, 96
        %v1871 = vpop.permute.xlu0 %1870
        %1872 = vrot.lane.b32.xlu0 %v899, 96
        %v1873 = vpop.permute.xlu0 %1872
        %1874 = vrot.lane.b32.xlu0 %v900, 96
        %v1875 = vpop.permute.xlu0 %1874
        %1876 = vrot.lane.b32.xlu0 %v901, 96
        %v1877 = vpop.permute.xlu0 %1876
        %1878 = vrot.lane.b32.xlu0 %v902, 96
        %v1879 = vpop.permute.xlu0 %1878
        %1880 = vrot.lane.b32.xlu0 %v903, 96
        %v1881 = vpop.permute.xlu0 %1880
        %1882 = vrot.lane.b32.xlu0 %v904, 96
        %v1883 = vpop.permute.xlu0 %1882
        %1884 = vrot.lane.b32.xlu0 %v905, 96
        %v1885 = vpop.permute.xlu0 %1884
        %1886 = vrot.lane.b32.xlu0 %v906, 96
        %v1887 = vpop.permute.xlu0 %1886
        %1888 = vrot.lane.b32.xlu0 %v907, 96
        %v1889 = vpop.permute.xlu0 %1888
        %1890 = vrot.lane.b32.xlu0 %v908, 96
        %v1891 = vpop.permute.xlu0 %1890
        %1892 = vrot.lane.b32.xlu0 %v909, 96
        %v1893 = vpop.permute.xlu0 %1892
        %1894 = vrot.lane.b32.xlu0 %v910, 96
        %v1895 = vpop.permute.xlu0 %1894
        %1896 = vrot.lane.b32.xlu0 %v911, 96
        %v1897 = vpop.permute.xlu0 %1896
        %1898 = vrot.lane.b32.xlu0 %v912, 96
        %v1899 = vpop.permute.xlu0 %1898
        %1900 = vrot.lane.b32.xlu0 %v913, 96
        %v1901 = vpop.permute.xlu0 %1900
        %1902 = vrot.lane.b32.xlu0 %v914, 96
        %v1903 = vpop.permute.xlu0 %1902
        %1904 = vrot.lane.b32.xlu0 %v915, 96
        %v1905 = vpop.permute.xlu0 %1904
        %1906 = vrot.lane.b32.xlu0 %v916, 96
        %v1907 = vpop.permute.xlu0 %1906
        %1908 = vrot.lane.b32.xlu0 %v917, 96
        %v1909 = vpop.permute.xlu0 %1908
        %v1942 = vadd.f32 %v694, %v1847
        %v1943 = vadd.f32 %v695, %v1849
        %v1944 = vadd.f32 %v696, %v1851
        %v1945 = vadd.f32 %v697, %v1853
        %v1946 = vadd.f32 %v698, %v1855
        %v1947 = vadd.f32 %v699, %v1857
        %v1948 = vadd.f32 %v700, %v1859
        %v1949 = vadd.f32 %v701, %v1861
        %v1950 = vadd.f32 %v702, %v1863
        %v1951 = vadd.f32 %v703, %v1865
        %v1952 = vadd.f32 %v704, %v1867
        %v1953 = vadd.f32 %v705, %v1869
        %v1954 = vadd.f32 %v706, %v1871
        %v1955 = vadd.f32 %v707, %v1873
        %v1956 = vadd.f32 %v708, %v1875
        %v1957 = vadd.f32 %v709, %v1877
        %v1958 = vadd.f32 %v710, %v1879
        %v1959 = vadd.f32 %v711, %v1881
        %v1960 = vadd.f32 %v712, %v1883
        %v1961 = vadd.f32 %v713, %v1885
        %v1962 = vadd.f32 %v714, %v1887
        %v1963 = vadd.f32 %v715, %v1889
        %v1964 = vadd.f32 %v716, %v1891
        %v1965 = vadd.f32 %v717, %v1893
        %v1966 = vadd.f32 %v718, %v1895
        %v1967 = vadd.f32 %v719, %v1897
        %v1968 = vadd.f32 %v720, %v1899
        %v1969 = vadd.f32 %v721, %v1901
        %v1970 = vadd.f32 %v722, %v1903
        %v1971 = vadd.f32 %v723, %v1905
        %v1972 = vadd.f32 %v724, %v1907
        %v1973 = vadd.f32 %v725, %v1909
        %v1974 = vlog2.pop %v1814
        %v1975 = vmul.f32 %v1974, 0.6931472
        %v1976 = vlog2.pop %v1815
        %v1977 = vmul.f32 %v1976, 0.6931472
        %v1978 = vlog2.pop %v1816
        %v1979 = vmul.f32 %v1978, 0.6931472
        %v1980 = vlog2.pop %v1817
        %v1981 = vmul.f32 %v1980, 0.6931472
        %v1982 = vlog2.pop %v1818
        %v1983 = vmul.f32 %v1982, 0.6931472
        %v1984 = vlog2.pop %v1819
        %v1985 = vmul.f32 %v1984, 0.6931472
        %v1986 = vlog2.pop %v1820
        %v1987 = vmul.f32 %v1986, 0.6931472
        %v1988 = vlog2.pop %v1821
        %v1989 = vmul.f32 %v1988, 0.6931472
        %v1990 = vlog2.pop %v1822
        %v1991 = vmul.f32 %v1990, 0.6931472
        %v1992 = vlog2.pop %v1823
        %v1993 = vmul.f32 %v1992, 0.6931472
        %v1994 = vlog2.pop %v1824
        %v1995 = vmul.f32 %v1994, 0.6931472
        %v1996 = vlog2.pop %v1825
        %v1997 = vmul.f32 %v1996, 0.6931472
        %v1998 = vlog2.pop %v1826
        %v1999 = vmul.f32 %v1998, 0.6931472
        %v2000 = vlog2.pop %v1827
        %v2001 = vmul.f32 %v2000, 0.6931472
        %v2002 = vlog2.pop %v1828
        %v2003 = vmul.f32 %v2002, 0.6931472
        %v2004 = vlog2.pop %v1829
        %v2005 = vmul.f32 %v2004, 0.6931472
        %v2006 = vlog2.pop %v1830
        %v2007 = vmul.f32 %v2006, 0.6931472
        %v2008 = vlog2.pop %v1831
        %v2009 = vmul.f32 %v2008, 0.6931472
        %v2010 = vlog2.pop %v1832
        %v2011 = vmul.f32 %v2010, 0.6931472
        %v2012 = vlog2.pop %v1833
        %v2013 = vmul.f32 %v2012, 0.6931472
        %v2014 = vlog2.pop %v1834
        %v2015 = vmul.f32 %v2014, 0.6931472
        %v2016 = vlog2.pop %v1835
        %v2017 = vmul.f32 %v2016, 0.6931472
        %v2018 = vlog2.pop %v1836
        %v2019 = vmul.f32 %v2018, 0.6931472
        %v2020 = vlog2.pop %v1837
        %v2021 = vmul.f32 %v2020, 0.6931472
        %v2022 = vlog2.pop %v1838
        %v2023 = vmul.f32 %v2022, 0.6931472
        %v2024 = vlog2.pop %v1839
        %v2025 = vmul.f32 %v2024, 0.6931472
        %v2026 = vlog2.pop %v1840
        %v2027 = vmul.f32 %v2026, 0.6931472
        %v2028 = vlog2.pop %v1841
        %v2029 = vmul.f32 %v2028, 0.6931472
        %v2030 = vlog2.pop %v1842
        %v2031 = vmul.f32 %v2030, 0.6931472
        %v2032 = vlog2.pop %v1843
        %v2033 = vmul.f32 %v2032, 0.6931472
        %v2034 = vlog2.pop %v1844
        %v2035 = vmul.f32 %v2034, 0.6931472
        %v2036 = vlog2.pop %v1845
        %v2037 = vmul.f32 %v2036, 0.6931472
        %2070 = vrot.lane.b32.xlu0 %v1975, 96
        %v2071 = vpop.permute.xlu0 %2070
        %2072 = vrot.lane.b32.xlu0 %v1977, 96
        %v2073 = vpop.permute.xlu0 %2072
        %2074 = vrot.lane.b32.xlu0 %v1979, 96
        %v2075 = vpop.permute.xlu0 %2074
        %2076 = vrot.lane.b32.xlu0 %v1981, 96
        %v2077 = vpop.permute.xlu0 %2076
        %2078 = vrot.lane.b32.xlu0 %v1983, 96
        %v2079 = vpop.permute.xlu0 %2078
        %2080 = vrot.lane.b32.xlu0 %v1985, 96
        %v2081 = vpop.permute.xlu0 %2080
        %2082 = vrot.lane.b32.xlu0 %v1987, 96
        %v2083 = vpop.permute.xlu0 %2082
        %2084 = vrot.lane.b32.xlu0 %v1989, 96
        %v2085 = vpop.permute.xlu0 %2084
        %2086 = vrot.lane.b32.xlu0 %v1991, 96
        %v2087 = vpop.permute.xlu0 %2086
        %2088 = vrot.lane.b32.xlu0 %v1993, 96
        %v2089 = vpop.permute.xlu0 %2088
        %2090 = vrot.lane.b32.xlu0 %v1995, 96
        %v2091 = vpop.permute.xlu0 %2090
        %2092 = vrot.lane.b32.xlu0 %v1997, 96
        %v2093 = vpop.permute.xlu0 %2092
        %2094 = vrot.lane.b32.xlu0 %v1999, 96
        %v2095 = vpop.permute.xlu0 %2094
        %2096 = vrot.lane.b32.xlu0 %v2001, 96
        %v2097 = vpop.permute.xlu0 %2096
        %2098 = vrot.lane.b32.xlu0 %v2003, 96
        %v2099 = vpop.permute.xlu0 %2098
        %2100 = vrot.lane.b32.xlu0 %v2005, 96
        %v2101 = vpop.permute.xlu0 %2100
        %2102 = vrot.lane.b32.xlu0 %v2007, 96
        %v2103 = vpop.permute.xlu0 %2102
        %2104 = vrot.lane.b32.xlu0 %v2009, 96
        %v2105 = vpop.permute.xlu0 %2104
        %2106 = vrot.lane.b32.xlu0 %v2011, 96
        %v2107 = vpop.permute.xlu0 %2106
        %2108 = vrot.lane.b32.xlu0 %v2013, 96
        %v2109 = vpop.permute.xlu0 %2108
        %2110 = vrot.lane.b32.xlu0 %v2015, 96
        %v2111 = vpop.permute.xlu0 %2110
        %2112 = vrot.lane.b32.xlu0 %v2017, 96
        %v2113 = vpop.permute.xlu0 %2112
        %2114 = vrot.lane.b32.xlu0 %v2019, 96
        %v2115 = vpop.permute.xlu0 %2114
        %2116 = vrot.lane.b32.xlu0 %v2021, 96
        %v2117 = vpop.permute.xlu0 %2116
        %2118 = vrot.lane.b32.xlu0 %v2023, 96
        %v2119 = vpop.permute.xlu0 %2118
        %2120 = vrot.lane.b32.xlu0 %v2025, 96
        %v2121 = vpop.permute.xlu0 %2120
        %2122 = vrot.lane.b32.xlu0 %v2027, 96
        %v2123 = vpop.permute.xlu0 %2122
        %2124 = vrot.lane.b32.xlu0 %v2029, 96
        %v2125 = vpop.permute.xlu0 %2124
        %2126 = vrot.lane.b32.xlu0 %v2031, 96
        %v2127 = vpop.permute.xlu0 %2126
        %2128 = vrot.lane.b32.xlu0 %v2033, 96
        %v2129 = vpop.permute.xlu0 %2128
        %2130 = vrot.lane.b32.xlu0 %v2035, 96
        %v2131 = vpop.permute.xlu0 %2130
        %2132 = vrot.lane.b32.xlu0 %v2037, 96
        %v2133 = vpop.permute.xlu0 %2132
        %v2166 = vadd.f32 %v1942, %v2071
        %v2167 = vadd.f32 %v1943, %v2073
        %v2168 = vadd.f32 %v1944, %v2075
        %v2169 = vadd.f32 %v1945, %v2077
        %v2170 = vadd.f32 %v1946, %v2079
        %v2171 = vadd.f32 %v1947, %v2081
        %v2172 = vadd.f32 %v1948, %v2083
        %v2173 = vadd.f32 %v1949, %v2085
        %v2174 = vadd.f32 %v1950, %v2087
        %v2175 = vadd.f32 %v1951, %v2089
        %v2176 = vadd.f32 %v1952, %v2091
        %v2177 = vadd.f32 %v1953, %v2093
        %v2178 = vadd.f32 %v1954, %v2095
        %v2179 = vadd.f32 %v1955, %v2097
        %v2180 = vadd.f32 %v1956, %v2099
        %v2181 = vadd.f32 %v1957, %v2101
        %v2182 = vadd.f32 %v1958, %v2103
        %v2183 = vadd.f32 %v1959, %v2105
        %v2184 = vadd.f32 %v1960, %v2107
        %v2185 = vadd.f32 %v1961, %v2109
        %v2186 = vadd.f32 %v1962, %v2111
        %v2187 = vadd.f32 %v1963, %v2113
        %v2188 = vadd.f32 %v1964, %v2115
        %v2189 = vadd.f32 %v1965, %v2117
        %v2190 = vadd.f32 %v1966, %v2119
        %v2191 = vadd.f32 %v1967, %v2121
        %v2192 = vadd.f32 %v1968, %v2123
        %v2193 = vadd.f32 %v1969, %v2125
        %v2194 = vadd.f32 %v1970, %v2127
        %v2195 = vadd.f32 %v1971, %v2129
        %v2196 = vadd.f32 %v1972, %v2131
        %v2197 = vadd.f32 %v1973, %v2133
        %2198 = vset.pattern.permute.xlu0 2
        %2199 = vperm.xlu0 %2198, %v726
        %v2200 = vpop.permute.xlu0 %2199
        %2202 = vset.pattern.permute.xlu0 2
        %2203 = vperm.xlu0 %2202, %v727
        %v2204 = vpop.permute.xlu0 %2203
        %2206 = vset.pattern.permute.xlu0 2
        %2207 = vperm.xlu0 %2206, %v728
        %v2208 = vpop.permute.xlu0 %2207
        %2210 = vset.pattern.permute.xlu0 2
        %2211 = vperm.xlu0 %2210, %v729
        %v2212 = vpop.permute.xlu0 %2211
        %2214 = vset.pattern.permute.xlu0 2
        %2215 = vperm.xlu0 %2214, %v730
        %v2216 = vpop.permute.xlu0 %2215
        %2218 = vset.pattern.permute.xlu0 2
        %2219 = vperm.xlu0 %2218, %v731
        %v2220 = vpop.permute.xlu0 %2219
        %2222 = vset.pattern.permute.xlu0 2
        %2223 = vperm.xlu0 %2222, %v732
        %v2224 = vpop.permute.xlu0 %2223
        %2226 = vset.pattern.permute.xlu0 2
        %2227 = vperm.xlu0 %2226, %v733
        %v2228 = vpop.permute.xlu0 %2227
        %2230 = vset.pattern.permute.xlu0 2
        %2231 = vperm.xlu0 %2230, %v734
        %v2232 = vpop.permute.xlu0 %2231
        %2234 = vset.pattern.permute.xlu0 2
        %2235 = vperm.xlu0 %2234, %v735
        %v2236 = vpop.permute.xlu0 %2235
        %2238 = vset.pattern.permute.xlu0 2
        %2239 = vperm.xlu0 %2238, %v736
        %v2240 = vpop.permute.xlu0 %2239
        %2242 = vset.pattern.permute.xlu0 2
        %2243 = vperm.xlu0 %2242, %v737
        %v2244 = vpop.permute.xlu0 %2243
        %2246 = vset.pattern.permute.xlu0 2
        %2247 = vperm.xlu0 %2246, %v738
        %v2248 = vpop.permute.xlu0 %2247
        %2250 = vset.pattern.permute.xlu0 2
        %2251 = vperm.xlu0 %2250, %v739
        %v2252 = vpop.permute.xlu0 %2251
        %2254 = vset.pattern.permute.xlu0 2
        %2255 = vperm.xlu0 %2254, %v740
        %v2256 = vpop.permute.xlu0 %2255
        %2258 = vset.pattern.permute.xlu0 2
        %2259 = vperm.xlu0 %2258, %v741
        %v2260 = vpop.permute.xlu0 %2259
        %2262 = vset.pattern.permute.xlu0 2
        %2263 = vperm.xlu0 %2262, %v742
        %v2264 = vpop.permute.xlu0 %2263
        %2266 = vset.pattern.permute.xlu0 2
        %2267 = vperm.xlu0 %2266, %v743
        %v2268 = vpop.permute.xlu0 %2267
        %2270 = vset.pattern.permute.xlu0 2
        %2271 = vperm.xlu0 %2270, %v744
        %v2272 = vpop.permute.xlu0 %2271
        %2274 = vset.pattern.permute.xlu0 2
        %2275 = vperm.xlu0 %2274, %v745
        %v2276 = vpop.permute.xlu0 %2275
        %2278 = vset.pattern.permute.xlu0 2
        %2279 = vperm.xlu0 %2278, %v746
        %v2280 = vpop.permute.xlu0 %2279
        %2282 = vset.pattern.permute.xlu0 2
        %2283 = vperm.xlu0 %2282, %v747
        %v2284 = vpop.permute.xlu0 %2283
        %2286 = vset.pattern.permute.xlu0 2
        %2287 = vperm.xlu0 %2286, %v748
        %v2288 = vpop.permute.xlu0 %2287
        %2290 = vset.pattern.permute.xlu0 2
        %2291 = vperm.xlu0 %2290, %v749
        %v2292 = vpop.permute.xlu0 %2291
        %2294 = vset.pattern.permute.xlu0 2
        %2295 = vperm.xlu0 %2294, %v750
        %v2296 = vpop.permute.xlu0 %2295
        %2298 = vset.pattern.permute.xlu0 2
        %2299 = vperm.xlu0 %2298, %v751
        %v2300 = vpop.permute.xlu0 %2299
        %2302 = vset.pattern.permute.xlu0 2
        %2303 = vperm.xlu0 %2302, %v752
        %v2304 = vpop.permute.xlu0 %2303
        %2306 = vset.pattern.permute.xlu0 2
        %2307 = vperm.xlu0 %2306, %v753
        %v2308 = vpop.permute.xlu0 %2307
        %2310 = vset.pattern.permute.xlu0 2
        %2311 = vperm.xlu0 %2310, %v754
        %v2312 = vpop.permute.xlu0 %2311
        %2314 = vset.pattern.permute.xlu0 2
        %2315 = vperm.xlu0 %2314, %v755
        %v2316 = vpop.permute.xlu0 %2315
        %2318 = vset.pattern.permute.xlu0 2
        %2319 = vperm.xlu0 %2318, %v756
        %v2320 = vpop.permute.xlu0 %2319
        %2322 = vset.pattern.permute.xlu0 2
        %2323 = vperm.xlu0 %2322, %v757
        %v2324 = vpop.permute.xlu0 %2323
        %v2326 = vmul.f32 %v2200, %v951
        %v2327 = vmul.f32 %v2204, %v953
        %v2328 = vmul.f32 %v2208, %v955
        %v2329 = vmul.f32 %v2212, %v957
        %v2330 = vmul.f32 %v2216, %v959
        %v2331 = vmul.f32 %v2220, %v961
        %v2332 = vmul.f32 %v2224, %v963
        %v2333 = vmul.f32 %v2228, %v965
        %v2334 = vmul.f32 %v2232, %v967
        %v2335 = vmul.f32 %v2236, %v969
        %v2336 = vmul.f32 %v2240, %v971
        %v2337 = vmul.f32 %v2244, %v973
        %v2338 = vmul.f32 %v2248, %v975
        %v2339 = vmul.f32 %v2252, %v977
        %v2340 = vmul.f32 %v2256, %v979
        %v2341 = vmul.f32 %v2260, %v981
        %v2342 = vmul.f32 %v2264, %v983
        %v2343 = vmul.f32 %v2268, %v985
        %v2344 = vmul.f32 %v2272, %v987
        %v2345 = vmul.f32 %v2276, %v989
        %v2346 = vmul.f32 %v2280, %v991
        %v2347 = vmul.f32 %v2284, %v993
        %v2348 = vmul.f32 %v2288, %v995
        %v2349 = vmul.f32 %v2292, %v997
        %v2350 = vmul.f32 %v2296, %v999
        %v2351 = vmul.f32 %v2300, %v1001
        %v2352 = vmul.f32 %v2304, %v1003
        %v2353 = vmul.f32 %v2308, %v1005
        %v2354 = vmul.f32 %v2312, %v1007
        %v2355 = vmul.f32 %v2316, %v1009
        %v2356 = vmul.f32 %v2320, %v1011
        %v2357 = vmul.f32 %v2324, %v1013
        %v2358 = vadd.f32 %v2326, 0.0
        %v2359 = vadd.f32 %v2327, 0.0
        %v2360 = vadd.f32 %v2328, 0.0
        %v2361 = vadd.f32 %v2329, 0.0
        %v2362 = vadd.f32 %v2330, 0.0
        %v2363 = vadd.f32 %v2331, 0.0
        %v2364 = vadd.f32 %v2332, 0.0
        %v2365 = vadd.f32 %v2333, 0.0
        %v2366 = vadd.f32 %v2334, 0.0
        %v2367 = vadd.f32 %v2335, 0.0
        %v2368 = vadd.f32 %v2336, 0.0
        %v2369 = vadd.f32 %v2337, 0.0
        %v2370 = vadd.f32 %v2338, 0.0
        %v2371 = vadd.f32 %v2339, 0.0
        %v2372 = vadd.f32 %v2340, 0.0
        %v2373 = vadd.f32 %v2341, 0.0
        %v2374 = vadd.f32 %v2342, 0.0
        %v2375 = vadd.f32 %v2343, 0.0
        %v2376 = vadd.f32 %v2344, 0.0
        %v2377 = vadd.f32 %v2345, 0.0
        %v2378 = vadd.f32 %v2346, 0.0
        %v2379 = vadd.f32 %v2347, 0.0
        %v2380 = vadd.f32 %v2348, 0.0
        %v2381 = vadd.f32 %v2349, 0.0
        %v2382 = vadd.f32 %v2350, 0.0
        %v2383 = vadd.f32 %v2351, 0.0
        %v2384 = vadd.f32 %v2352, 0.0
        %v2385 = vadd.f32 %v2353, 0.0
        %v2386 = vadd.f32 %v2354, 0.0
        %v2387 = vadd.f32 %v2355, 0.0
        %v2388 = vadd.f32 %v2356, 0.0
        %v2389 = vadd.f32 %v2357, 0.0
        %2390 = vset.pattern.permute.xlu0 3
        %2391 = vperm.xlu0 %2390, %v726
        %v2392 = vpop.permute.xlu0 %2391
        %2394 = vset.pattern.permute.xlu0 3
        %2395 = vperm.xlu0 %2394, %v727
        %v2396 = vpop.permute.xlu0 %2395
        %2398 = vset.pattern.permute.xlu0 3
        %2399 = vperm.xlu0 %2398, %v728
        %v2400 = vpop.permute.xlu0 %2399
        %2402 = vset.pattern.permute.xlu0 3
        %2403 = vperm.xlu0 %2402, %v729
        %v2404 = vpop.permute.xlu0 %2403
        %2406 = vset.pattern.permute.xlu0 3
        %2407 = vperm.xlu0 %2406, %v730
        %v2408 = vpop.permute.xlu0 %2407
        %2410 = vset.pattern.permute.xlu0 3
        %2411 = vperm.xlu0 %2410, %v731
        %v2412 = vpop.permute.xlu0 %2411
        %2414 = vset.pattern.permute.xlu0 3
        %2415 = vperm.xlu0 %2414, %v732
        %v2416 = vpop.permute.xlu0 %2415
        %2418 = vset.pattern.permute.xlu0 3
        %2419 = vperm.xlu0 %2418, %v733
        %v2420 = vpop.permute.xlu0 %2419
        %2422 = vset.pattern.permute.xlu0 3
        %2423 = vperm.xlu0 %2422, %v734
        %v2424 = vpop.permute.xlu0 %2423
        %2426 = vset.pattern.permute.xlu0 3
        %2427 = vperm.xlu0 %2426, %v735
        %v2428 = vpop.permute.xlu0 %2427
        %2430 = vset.pattern.permute.xlu0 3
        %2431 = vperm.xlu0 %2430, %v736
        %v2432 = vpop.permute.xlu0 %2431
        %2434 = vset.pattern.permute.xlu0 3
        %2435 = vperm.xlu0 %2434, %v737
        %v2436 = vpop.permute.xlu0 %2435
        %2438 = vset.pattern.permute.xlu0 3
        %2439 = vperm.xlu0 %2438, %v738
        %v2440 = vpop.permute.xlu0 %2439
        %2442 = vset.pattern.permute.xlu0 3
        %2443 = vperm.xlu0 %2442, %v739
        %v2444 = vpop.permute.xlu0 %2443
        %2446 = vset.pattern.permute.xlu0 3
        %2447 = vperm.xlu0 %2446, %v740
        %v2448 = vpop.permute.xlu0 %2447
        %2450 = vset.pattern.permute.xlu0 3
        %2451 = vperm.xlu0 %2450, %v741
        %v2452 = vpop.permute.xlu0 %2451
        %2454 = vset.pattern.permute.xlu0 3
        %2455 = vperm.xlu0 %2454, %v742
        %v2456 = vpop.permute.xlu0 %2455
        %2458 = vset.pattern.permute.xlu0 3
        %2459 = vperm.xlu0 %2458, %v743
        %v2460 = vpop.permute.xlu0 %2459
        %2462 = vset.pattern.permute.xlu0 3
        %2463 = vperm.xlu0 %2462, %v744
        %v2464 = vpop.permute.xlu0 %2463
        %2466 = vset.pattern.permute.xlu0 3
        %2467 = vperm.xlu0 %2466, %v745
        %v2468 = vpop.permute.xlu0 %2467
        %2470 = vset.pattern.permute.xlu0 3
        %2471 = vperm.xlu0 %2470, %v746
        %v2472 = vpop.permute.xlu0 %2471
        %2474 = vset.pattern.permute.xlu0 3
        %2475 = vperm.xlu0 %2474, %v747
        %v2476 = vpop.permute.xlu0 %2475
        %2478 = vset.pattern.permute.xlu0 3
        %2479 = vperm.xlu0 %2478, %v748
        %v2480 = vpop.permute.xlu0 %2479
        %2482 = vset.pattern.permute.xlu0 3
        %2483 = vperm.xlu0 %2482, %v749
        %v2484 = vpop.permute.xlu0 %2483
        %2486 = vset.pattern.permute.xlu0 3
        %2487 = vperm.xlu0 %2486, %v750
        %v2488 = vpop.permute.xlu0 %2487
        %2490 = vset.pattern.permute.xlu0 3
        %2491 = vperm.xlu0 %2490, %v751
        %v2492 = vpop.permute.xlu0 %2491
        %2494 = vset.pattern.permute.xlu0 3
        %2495 = vperm.xlu0 %2494, %v752
        %v2496 = vpop.permute.xlu0 %2495
        %2498 = vset.pattern.permute.xlu0 3
        %2499 = vperm.xlu0 %2498, %v753
        %v2500 = vpop.permute.xlu0 %2499
        %2502 = vset.pattern.permute.xlu0 3
        %2503 = vperm.xlu0 %2502, %v754
        %v2504 = vpop.permute.xlu0 %2503
        %2506 = vset.pattern.permute.xlu0 3
        %2507 = vperm.xlu0 %2506, %v755
        %v2508 = vpop.permute.xlu0 %2507
        %2510 = vset.pattern.permute.xlu0 3
        %2511 = vperm.xlu0 %2510, %v756
        %v2512 = vpop.permute.xlu0 %2511
        %2514 = vset.pattern.permute.xlu0 3
        %2515 = vperm.xlu0 %2514, %v757
        %v2516 = vpop.permute.xlu0 %2515
        %v2518 = vmul.f32 %v2392, %v1399
        %v2519 = vmul.f32 %v2396, %v1401
        %v2520 = vmul.f32 %v2400, %v1403
        %v2521 = vmul.f32 %v2404, %v1405
        %v2522 = vmul.f32 %v2408, %v1407
        %v2523 = vmul.f32 %v2412, %v1409
        %v2524 = vmul.f32 %v2416, %v1411
        %v2525 = vmul.f32 %v2420, %v1413
        %v2526 = vmul.f32 %v2424, %v1415
        %v2527 = vmul.f32 %v2428, %v1417
        %v2528 = vmul.f32 %v2432, %v1419
        %v2529 = vmul.f32 %v2436, %v1421
        %v2530 = vmul.f32 %v2440, %v1423
        %v2531 = vmul.f32 %v2444, %v1425
        %v2532 = vmul.f32 %v2448, %v1427
        %v2533 = vmul.f32 %v2452, %v1429
        %v2534 = vmul.f32 %v2456, %v1431
        %v2535 = vmul.f32 %v2460, %v1433
        %v2536 = vmul.f32 %v2464, %v1435
        %v2537 = vmul.f32 %v2468, %v1437
        %v2538 = vmul.f32 %v2472, %v1439
        %v2539 = vmul.f32 %v2476, %v1441
        %v2540 = vmul.f32 %v2480, %v1443
        %v2541 = vmul.f32 %v2484, %v1445
        %v2542 = vmul.f32 %v2488, %v1447
        %v2543 = vmul.f32 %v2492, %v1449
        %v2544 = vmul.f32 %v2496, %v1451
        %v2545 = vmul.f32 %v2500, %v1453
        %v2546 = vmul.f32 %v2504, %v1455
        %v2547 = vmul.f32 %v2508, %v1457
        %v2548 = vmul.f32 %v2512, %v1459
        %v2549 = vmul.f32 %v2516, %v1461
        %2582 = vrot.lane.b32.xlu0 %v2518, 124
        %v2583 = vpop.permute.xlu0 %2582
        %2584 = vrot.lane.b32.xlu0 %v2519, 124
        %v2585 = vpop.permute.xlu0 %2584
        %2586 = vrot.lane.b32.xlu0 %v2520, 124
        %v2587 = vpop.permute.xlu0 %2586
        %2588 = vrot.lane.b32.xlu0 %v2521, 124
        %v2589 = vpop.permute.xlu0 %2588
        %2590 = vrot.lane.b32.xlu0 %v2522, 124
        %v2591 = vpop.permute.xlu0 %2590
        %2592 = vrot.lane.b32.xlu0 %v2523, 124
        %v2593 = vpop.permute.xlu0 %2592
        %2594 = vrot.lane.b32.xlu0 %v2524, 124
        %v2595 = vpop.permute.xlu0 %2594
        %2596 = vrot.lane.b32.xlu0 %v2525, 124
        %v2597 = vpop.permute.xlu0 %2596
        %2598 = vrot.lane.b32.xlu0 %v2526, 124
        %v2599 = vpop.permute.xlu0 %2598
        %2600 = vrot.lane.b32.xlu0 %v2527, 124
        %v2601 = vpop.permute.xlu0 %2600
        %2602 = vrot.lane.b32.xlu0 %v2528, 124
        %v2603 = vpop.permute.xlu0 %2602
        %2604 = vrot.lane.b32.xlu0 %v2529, 124
        %v2605 = vpop.permute.xlu0 %2604
        %2606 = vrot.lane.b32.xlu0 %v2530, 124
        %v2607 = vpop.permute.xlu0 %2606
        %2608 = vrot.lane.b32.xlu0 %v2531, 124
        %v2609 = vpop.permute.xlu0 %2608
        %2610 = vrot.lane.b32.xlu0 %v2532, 124
        %v2611 = vpop.permute.xlu0 %2610
        %2612 = vrot.lane.b32.xlu0 %v2533, 124
        %v2613 = vpop.permute.xlu0 %2612
        %2614 = vrot.lane.b32.xlu0 %v2534, 124
        %v2615 = vpop.permute.xlu0 %2614
        %2616 = vrot.lane.b32.xlu0 %v2535, 124
        %v2617 = vpop.permute.xlu0 %2616
        %2618 = vrot.lane.b32.xlu0 %v2536, 124
        %v2619 = vpop.permute.xlu0 %2618
        %2620 = vrot.lane.b32.xlu0 %v2537, 124
        %v2621 = vpop.permute.xlu0 %2620
        %2622 = vrot.lane.b32.xlu0 %v2538, 124
        %v2623 = vpop.permute.xlu0 %2622
        %2624 = vrot.lane.b32.xlu0 %v2539, 124
        %v2625 = vpop.permute.xlu0 %2624
        %2626 = vrot.lane.b32.xlu0 %v2540, 124
        %v2627 = vpop.permute.xlu0 %2626
        %2628 = vrot.lane.b32.xlu0 %v2541, 124
        %v2629 = vpop.permute.xlu0 %2628
        %2630 = vrot.lane.b32.xlu0 %v2542, 124
        %v2631 = vpop.permute.xlu0 %2630
        %2632 = vrot.lane.b32.xlu0 %v2543, 124
        %v2633 = vpop.permute.xlu0 %2632
        %2634 = vrot.lane.b32.xlu0 %v2544, 124
        %v2635 = vpop.permute.xlu0 %2634
        %2636 = vrot.lane.b32.xlu0 %v2545, 124
        %v2637 = vpop.permute.xlu0 %2636
        %2638 = vrot.lane.b32.xlu0 %v2546, 124
        %v2639 = vpop.permute.xlu0 %2638
        %2640 = vrot.lane.b32.xlu0 %v2547, 124
        %v2641 = vpop.permute.xlu0 %2640
        %2642 = vrot.lane.b32.xlu0 %v2548, 124
        %v2643 = vpop.permute.xlu0 %2642
        %2644 = vrot.lane.b32.xlu0 %v2549, 124
        %v2645 = vpop.permute.xlu0 %2644
        %v2678 = vadd.f32 %v2358, %v2583
        %v2679 = vadd.f32 %v2359, %v2585
        %v2680 = vadd.f32 %v2360, %v2587
        %v2681 = vadd.f32 %v2361, %v2589
        %v2682 = vadd.f32 %v2362, %v2591
        %v2683 = vadd.f32 %v2363, %v2593
        %v2684 = vadd.f32 %v2364, %v2595
        %v2685 = vadd.f32 %v2365, %v2597
        %v2686 = vadd.f32 %v2366, %v2599
        %v2687 = vadd.f32 %v2367, %v2601
        %v2688 = vadd.f32 %v2368, %v2603
        %v2689 = vadd.f32 %v2369, %v2605
        %v2690 = vadd.f32 %v2370, %v2607
        %v2691 = vadd.f32 %v2371, %v2609
        %v2692 = vadd.f32 %v2372, %v2611
        %v2693 = vadd.f32 %v2373, %v2613
        %v2694 = vadd.f32 %v2374, %v2615
        %v2695 = vadd.f32 %v2375, %v2617
        %v2696 = vadd.f32 %v2376, %v2619
        %v2697 = vadd.f32 %v2377, %v2621
        %v2698 = vadd.f32 %v2378, %v2623
        %v2699 = vadd.f32 %v2379, %v2625
        %v2700 = vadd.f32 %v2380, %v2627
        %v2701 = vadd.f32 %v2381, %v2629
        %v2702 = vadd.f32 %v2382, %v2631
        %v2703 = vadd.f32 %v2383, %v2633
        %v2704 = vadd.f32 %v2384, %v2635
        %v2705 = vadd.f32 %v2385, %v2637
        %v2706 = vadd.f32 %v2386, %v2639
        %v2707 = vadd.f32 %v2387, %v2641
        %v2708 = vadd.f32 %v2388, %v2643
        %v2709 = vadd.f32 %v2389, %v2645
        %vm2710 = vcmp.eq.f32.partialorder %v2678, 0.0
        %vm2711 = vcmp.eq.f32.partialorder %v2679, 0.0
        %vm2712 = vcmp.eq.f32.partialorder %v2680, 0.0
        %vm2713 = vcmp.eq.f32.partialorder %v2681, 0.0
        %vm2714 = vcmp.eq.f32.partialorder %v2682, 0.0
        %vm2715 = vcmp.eq.f32.partialorder %v2683, 0.0
        %vm2716 = vcmp.eq.f32.partialorder %v2684, 0.0
        %vm2717 = vcmp.eq.f32.partialorder %v2685, 0.0
        %vm2718 = vcmp.eq.f32.partialorder %v2686, 0.0
        %vm2719 = vcmp.eq.f32.partialorder %v2687, 0.0
        %vm2720 = vcmp.eq.f32.partialorder %v2688, 0.0
        %vm2721 = vcmp.eq.f32.partialorder %v2689, 0.0
        %vm2722 = vcmp.eq.f32.partialorder %v2690, 0.0
        %vm2723 = vcmp.eq.f32.partialorder %v2691, 0.0
        %vm2724 = vcmp.eq.f32.partialorder %v2692, 0.0
        %vm2725 = vcmp.eq.f32.partialorder %v2693, 0.0
        %vm2726 = vcmp.eq.f32.partialorder %v2694, 0.0
        %vm2727 = vcmp.eq.f32.partialorder %v2695, 0.0
        %vm2728 = vcmp.eq.f32.partialorder %v2696, 0.0
        %vm2729 = vcmp.eq.f32.partialorder %v2697, 0.0
        %vm2730 = vcmp.eq.f32.partialorder %v2698, 0.0
        %vm2731 = vcmp.eq.f32.partialorder %v2699, 0.0
        %vm2732 = vcmp.eq.f32.partialorder %v2700, 0.0
        %vm2733 = vcmp.eq.f32.partialorder %v2701, 0.0
        %vm2734 = vcmp.eq.f32.partialorder %v2702, 0.0
        %vm2735 = vcmp.eq.f32.partialorder %v2703, 0.0
        %vm2736 = vcmp.eq.f32.partialorder %v2704, 0.0
        %vm2737 = vcmp.eq.f32.partialorder %v2705, 0.0
        %vm2738 = vcmp.eq.f32.partialorder %v2706, 0.0
        %vm2739 = vcmp.eq.f32.partialorder %v2707, 0.0
        %vm2740 = vcmp.eq.f32.partialorder %v2708, 0.0
        %vm2741 = vcmp.eq.f32.partialorder %v2709, 0.0
        %v2742 = vsel %vm2710, 2.220446e-16, %v2678
        %v2743 = vsel %vm2711, 2.220446e-16, %v2679
        %v2744 = vsel %vm2712, 2.220446e-16, %v2680
        %v2745 = vsel %vm2713, 2.220446e-16, %v2681
        %v2746 = vsel %vm2714, 2.220446e-16, %v2682
        %v2747 = vsel %vm2715, 2.220446e-16, %v2683
        %v2748 = vsel %vm2716, 2.220446e-16, %v2684
        %v2749 = vsel %vm2717, 2.220446e-16, %v2685
        %v2750 = vsel %vm2718, 2.220446e-16, %v2686
        %v2751 = vsel %vm2719, 2.220446e-16, %v2687
        %v2752 = vsel %vm2720, 2.220446e-16, %v2688
        %v2753 = vsel %vm2721, 2.220446e-16, %v2689
        %v2754 = vsel %vm2722, 2.220446e-16, %v2690
        %v2755 = vsel %vm2723, 2.220446e-16, %v2691
        %v2756 = vsel %vm2724, 2.220446e-16, %v2692
        %v2757 = vsel %vm2725, 2.220446e-16, %v2693
        %v2758 = vsel %vm2726, 2.220446e-16, %v2694
        %v2759 = vsel %vm2727, 2.220446e-16, %v2695
        %v2760 = vsel %vm2728, 2.220446e-16, %v2696
        %v2761 = vsel %vm2729, 2.220446e-16, %v2697
        %v2762 = vsel %vm2730, 2.220446e-16, %v2698
        %v2763 = vsel %vm2731, 2.220446e-16, %v2699
        %v2764 = vsel %vm2732, 2.220446e-16, %v2700
        %v2765 = vsel %vm2733, 2.220446e-16, %v2701
        %v2766 = vsel %vm2734, 2.220446e-16, %v2702
        %v2767 = vsel %vm2735, 2.220446e-16, %v2703
        %v2768 = vsel %vm2736, 2.220446e-16, %v2704
        %v2769 = vsel %vm2737, 2.220446e-16, %v2705
        %v2770 = vsel %vm2738, 2.220446e-16, %v2706
        %v2771 = vsel %vm2739, 2.220446e-16, %v2707
        %v2772 = vsel %vm2740, 2.220446e-16, %v2708
        %v2773 = vsel %vm2741, 2.220446e-16, %v2709
        %2774 = vrot.lane.b32.xlu0 %v886, 92
        %v2775 = vpop.permute.xlu0 %2774
        %2776 = vrot.lane.b32.xlu0 %v887, 92
        %v2777 = vpop.permute.xlu0 %2776
        %2778 = vrot.lane.b32.xlu0 %v888, 92
        %v2779 = vpop.permute.xlu0 %2778
        %2780 = vrot.lane.b32.xlu0 %v889, 92
        %v2781 = vpop.permute.xlu0 %2780
        %2782 = vrot.lane.b32.xlu0 %v890, 92
        %v2783 = vpop.permute.xlu0 %2782
        %2784 = vrot.lane.b32.xlu0 %v891, 92
        %v2785 = vpop.permute.xlu0 %2784
        %2786 = vrot.lane.b32.xlu0 %v892, 92
        %v2787 = vpop.permute.xlu0 %2786
        %2788 = vrot.lane.b32.xlu0 %v893, 92
        %v2789 = vpop.permute.xlu0 %2788
        %2790 = vrot.lane.b32.xlu0 %v894, 92
        %v2791 = vpop.permute.xlu0 %2790
        %2792 = vrot.lane.b32.xlu0 %v895, 92
        %v2793 = vpop.permute.xlu0 %2792
        %2794 = vrot.lane.b32.xlu0 %v896, 92
        %v2795 = vpop.permute.xlu0 %2794
        %2796 = vrot.lane.b32.xlu0 %v897, 92
        %v2797 = vpop.permute.xlu0 %2796
        %2798 = vrot.lane.b32.xlu0 %v898, 92
        %v2799 = vpop.permute.xlu0 %2798
        %2800 = vrot.lane.b32.xlu0 %v899, 92
        %v2801 = vpop.permute.xlu0 %2800
        %2802 = vrot.lane.b32.xlu0 %v900, 92
        %v2803 = vpop.permute.xlu0 %2802
        %2804 = vrot.lane.b32.xlu0 %v901, 92
        %v2805 = vpop.permute.xlu0 %2804
        %2806 = vrot.lane.b32.xlu0 %v902, 92
        %v2807 = vpop.permute.xlu0 %2806
        %2808 = vrot.lane.b32.xlu0 %v903, 92
        %v2809 = vpop.permute.xlu0 %2808
        %2810 = vrot.lane.b32.xlu0 %v904, 92
        %v2811 = vpop.permute.xlu0 %2810
        %2812 = vrot.lane.b32.xlu0 %v905, 92
        %v2813 = vpop.permute.xlu0 %2812
        %2814 = vrot.lane.b32.xlu0 %v906, 92
        %v2815 = vpop.permute.xlu0 %2814
        %2816 = vrot.lane.b32.xlu0 %v907, 92
        %v2817 = vpop.permute.xlu0 %2816
        %2818 = vrot.lane.b32.xlu0 %v908, 92
        %v2819 = vpop.permute.xlu0 %2818
        %2820 = vrot.lane.b32.xlu0 %v909, 92
        %v2821 = vpop.permute.xlu0 %2820
        %2822 = vrot.lane.b32.xlu0 %v910, 92
        %v2823 = vpop.permute.xlu0 %2822
        %2824 = vrot.lane.b32.xlu0 %v911, 92
        %v2825 = vpop.permute.xlu0 %2824
        %2826 = vrot.lane.b32.xlu0 %v912, 92
        %v2827 = vpop.permute.xlu0 %2826
        %2828 = vrot.lane.b32.xlu0 %v913, 92
        %v2829 = vpop.permute.xlu0 %2828
        %2830 = vrot.lane.b32.xlu0 %v914, 92
        %v2831 = vpop.permute.xlu0 %2830
        %2832 = vrot.lane.b32.xlu0 %v915, 92
        %v2833 = vpop.permute.xlu0 %2832
        %2834 = vrot.lane.b32.xlu0 %v916, 92
        %v2835 = vpop.permute.xlu0 %2834
        %2836 = vrot.lane.b32.xlu0 %v917, 92
        %v2837 = vpop.permute.xlu0 %2836
        %v2870 = vadd.f32 %v694, %v2775
        %v2871 = vadd.f32 %v695, %v2777
        %v2872 = vadd.f32 %v696, %v2779
        %v2873 = vadd.f32 %v697, %v2781
        %v2874 = vadd.f32 %v698, %v2783
        %v2875 = vadd.f32 %v699, %v2785
        %v2876 = vadd.f32 %v700, %v2787
        %v2877 = vadd.f32 %v701, %v2789
        %v2878 = vadd.f32 %v702, %v2791
        %v2879 = vadd.f32 %v703, %v2793
        %v2880 = vadd.f32 %v704, %v2795
        %v2881 = vadd.f32 %v705, %v2797
        %v2882 = vadd.f32 %v706, %v2799
        %v2883 = vadd.f32 %v707, %v2801
        %v2884 = vadd.f32 %v708, %v2803
        %v2885 = vadd.f32 %v709, %v2805
        %v2886 = vadd.f32 %v710, %v2807
        %v2887 = vadd.f32 %v711, %v2809
        %v2888 = vadd.f32 %v712, %v2811
        %v2889 = vadd.f32 %v713, %v2813
        %v2890 = vadd.f32 %v714, %v2815
        %v2891 = vadd.f32 %v715, %v2817
        %v2892 = vadd.f32 %v716, %v2819
        %v2893 = vadd.f32 %v717, %v2821
        %v2894 = vadd.f32 %v718, %v2823
        %v2895 = vadd.f32 %v719, %v2825
        %v2896 = vadd.f32 %v720, %v2827
        %v2897 = vadd.f32 %v721, %v2829
        %v2898 = vadd.f32 %v722, %v2831
        %v2899 = vadd.f32 %v723, %v2833
        %v2900 = vadd.f32 %v724, %v2835
        %v2901 = vadd.f32 %v725, %v2837
        %v2902 = vlog2.pop %v2742
        %v2903 = vmul.f32 %v2902, 0.6931472
        %v2904 = vlog2.pop %v2743
        %v2905 = vmul.f32 %v2904, 0.6931472
        %v2906 = vlog2.pop %v2744
        %v2907 = vmul.f32 %v2906, 0.6931472
        %v2908 = vlog2.pop %v2745
        %v2909 = vmul.f32 %v2908, 0.6931472
        %v2910 = vlog2.pop %v2746
        %v2911 = vmul.f32 %v2910, 0.6931472
        %v2912 = vlog2.pop %v2747
        %v2913 = vmul.f32 %v2912, 0.6931472
        %v2914 = vlog2.pop %v2748
        %v2915 = vmul.f32 %v2914, 0.6931472
        %v2916 = vlog2.pop %v2749
        %v2917 = vmul.f32 %v2916, 0.6931472
        %v2918 = vlog2.pop %v2750
        %v2919 = vmul.f32 %v2918, 0.6931472
        %v2920 = vlog2.pop %v2751
        %v2921 = vmul.f32 %v2920, 0.6931472
        %v2922 = vlog2.pop %v2752
        %v2923 = vmul.f32 %v2922, 0.6931472
        %v2924 = vlog2.pop %v2753
        %v2925 = vmul.f32 %v2924, 0.6931472
        %v2926 = vlog2.pop %v2754
        %v2927 = vmul.f32 %v2926, 0.6931472
        %v2928 = vlog2.pop %v2755
        %v2929 = vmul.f32 %v2928, 0.6931472
        %v2930 = vlog2.pop %v2756
        %v2931 = vmul.f32 %v2930, 0.6931472
        %v2932 = vlog2.pop %v2757
        %v2933 = vmul.f32 %v2932, 0.6931472
        %v2934 = vlog2.pop %v2758
        %v2935 = vmul.f32 %v2934, 0.6931472
        %v2936 = vlog2.pop %v2759
        %v2937 = vmul.f32 %v2936, 0.6931472
        %v2938 = vlog2.pop %v2760
        %v2939 = vmul.f32 %v2938, 0.6931472
        %v2940 = vlog2.pop %v2761
        %v2941 = vmul.f32 %v2940, 0.6931472
        %v2942 = vlog2.pop %v2762
        %v2943 = vmul.f32 %v2942, 0.6931472
        %v2944 = vlog2.pop %v2763
        %v2945 = vmul.f32 %v2944, 0.6931472
        %v2946 = vlog2.pop %v2764
        %v2947 = vmul.f32 %v2946, 0.6931472
        %v2948 = vlog2.pop %v2765
        %v2949 = vmul.f32 %v2948, 0.6931472
        %v2950 = vlog2.pop %v2766
        %v2951 = vmul.f32 %v2950, 0.6931472
        %v2952 = vlog2.pop %v2767
        %v2953 = vmul.f32 %v2952, 0.6931472
        %v2954 = vlog2.pop %v2768
        %v2955 = vmul.f32 %v2954, 0.6931472
        %v2956 = vlog2.pop %v2769
        %v2957 = vmul.f32 %v2956, 0.6931472
        %v2958 = vlog2.pop %v2770
        %v2959 = vmul.f32 %v2958, 0.6931472
        %v2960 = vlog2.pop %v2771
        %v2961 = vmul.f32 %v2960, 0.6931472
        %v2962 = vlog2.pop %v2772
        %v2963 = vmul.f32 %v2962, 0.6931472
        %v2964 = vlog2.pop %v2773
        %v2965 = vmul.f32 %v2964, 0.6931472
        %2998 = vrot.lane.b32.xlu0 %v2903, 92
        %v2999 = vpop.permute.xlu0 %2998
        %3000 = vrot.lane.b32.xlu0 %v2905, 92
        %v3001 = vpop.permute.xlu0 %3000
        %3002 = vrot.lane.b32.xlu0 %v2907, 92
        %v3003 = vpop.permute.xlu0 %3002
        %3004 = vrot.lane.b32.xlu0 %v2909, 92
        %v3005 = vpop.permute.xlu0 %3004
        %3006 = vrot.lane.b32.xlu0 %v2911, 92
        %v3007 = vpop.permute.xlu0 %3006
        %3008 = vrot.lane.b32.xlu0 %v2913, 92
        %v3009 = vpop.permute.xlu0 %3008
        %3010 = vrot.lane.b32.xlu0 %v2915, 92
        %v3011 = vpop.permute.xlu0 %3010
        %3012 = vrot.lane.b32.xlu0 %v2917, 92
        %v3013 = vpop.permute.xlu0 %3012
        %3014 = vrot.lane.b32.xlu0 %v2919, 92
        %v3015 = vpop.permute.xlu0 %3014
        %3016 = vrot.lane.b32.xlu0 %v2921, 92
        %v3017 = vpop.permute.xlu0 %3016
        %3018 = vrot.lane.b32.xlu0 %v2923, 92
        %v3019 = vpop.permute.xlu0 %3018
        %3020 = vrot.lane.b32.xlu0 %v2925, 92
        %v3021 = vpop.permute.xlu0 %3020
        %3022 = vrot.lane.b32.xlu0 %v2927, 92
        %v3023 = vpop.permute.xlu0 %3022
        %3024 = vrot.lane.b32.xlu0 %v2929, 92
        %v3025 = vpop.permute.xlu0 %3024
        %3026 = vrot.lane.b32.xlu0 %v2931, 92
        %v3027 = vpop.permute.xlu0 %3026
        %3028 = vrot.lane.b32.xlu0 %v2933, 92
        %v3029 = vpop.permute.xlu0 %3028
        %3030 = vrot.lane.b32.xlu0 %v2935, 92
        %v3031 = vpop.permute.xlu0 %3030
        %3032 = vrot.lane.b32.xlu0 %v2937, 92
        %v3033 = vpop.permute.xlu0 %3032
        %3034 = vrot.lane.b32.xlu0 %v2939, 92
        %v3035 = vpop.permute.xlu0 %3034
        %3036 = vrot.lane.b32.xlu0 %v2941, 92
        %v3037 = vpop.permute.xlu0 %3036
        %3038 = vrot.lane.b32.xlu0 %v2943, 92
        %v3039 = vpop.permute.xlu0 %3038
        %3040 = vrot.lane.b32.xlu0 %v2945, 92
        %v3041 = vpop.permute.xlu0 %3040
        %3042 = vrot.lane.b32.xlu0 %v2947, 92
        %v3043 = vpop.permute.xlu0 %3042
        %3044 = vrot.lane.b32.xlu0 %v2949, 92
        %v3045 = vpop.permute.xlu0 %3044
        %3046 = vrot.lane.b32.xlu0 %v2951, 92
        %v3047 = vpop.permute.xlu0 %3046
        %3048 = vrot.lane.b32.xlu0 %v2953, 92
        %v3049 = vpop.permute.xlu0 %3048
        %3050 = vrot.lane.b32.xlu0 %v2955, 92
        %v3051 = vpop.permute.xlu0 %3050
        %3052 = vrot.lane.b32.xlu0 %v2957, 92
        %v3053 = vpop.permute.xlu0 %3052
        %3054 = vrot.lane.b32.xlu0 %v2959, 92
        %v3055 = vpop.permute.xlu0 %3054
        %3056 = vrot.lane.b32.xlu0 %v2961, 92
        %v3057 = vpop.permute.xlu0 %3056
        %3058 = vrot.lane.b32.xlu0 %v2963, 92
        %v3059 = vpop.permute.xlu0 %3058
        %3060 = vrot.lane.b32.xlu0 %v2965, 92
        %v3061 = vpop.permute.xlu0 %3060
        %v3094 = vadd.f32 %v2870, %v2999
        %v3095 = vadd.f32 %v2871, %v3001
        %v3096 = vadd.f32 %v2872, %v3003
        %v3097 = vadd.f32 %v2873, %v3005
        %v3098 = vadd.f32 %v2874, %v3007
        %v3099 = vadd.f32 %v2875, %v3009
        %v3100 = vadd.f32 %v2876, %v3011
        %v3101 = vadd.f32 %v2877, %v3013
        %v3102 = vadd.f32 %v2878, %v3015
        %v3103 = vadd.f32 %v2879, %v3017
        %v3104 = vadd.f32 %v2880, %v3019
        %v3105 = vadd.f32 %v2881, %v3021
        %v3106 = vadd.f32 %v2882, %v3023
        %v3107 = vadd.f32 %v2883, %v3025
        %v3108 = vadd.f32 %v2884, %v3027
        %v3109 = vadd.f32 %v2885, %v3029
        %v3110 = vadd.f32 %v2886, %v3031
        %v3111 = vadd.f32 %v2887, %v3033
        %v3112 = vadd.f32 %v2888, %v3035
        %v3113 = vadd.f32 %v2889, %v3037
        %v3114 = vadd.f32 %v2890, %v3039
        %v3115 = vadd.f32 %v2891, %v3041
        %v3116 = vadd.f32 %v2892, %v3043
        %v3117 = vadd.f32 %v2893, %v3045
        %v3118 = vadd.f32 %v2894, %v3047
        %v3119 = vadd.f32 %v2895, %v3049
        %v3120 = vadd.f32 %v2896, %v3051
        %v3121 = vadd.f32 %v2897, %v3053
        %v3122 = vadd.f32 %v2898, %v3055
        %v3123 = vadd.f32 %v2899, %v3057
        %v3124 = vadd.f32 %v2900, %v3059
        %v3125 = vadd.f32 %v2901, %v3061
        %v3126 = vpack.c.bf16 %v2167, %v2166
        %v3127 = vpack.c.bf16 %v2169, %v2168
        %v3128 = vpack.c.bf16 %v2171, %v2170
        %v3129 = vpack.c.bf16 %v2173, %v2172
        %v3130 = vpack.c.bf16 %v2175, %v2174
        %v3131 = vpack.c.bf16 %v2177, %v2176
        %v3132 = vpack.c.bf16 %v2179, %v2178
        %v3133 = vpack.c.bf16 %v2181, %v2180
        %v3134 = vpack.c.bf16 %v2183, %v2182
        %v3135 = vpack.c.bf16 %v2185, %v2184
        %v3136 = vpack.c.bf16 %v2187, %v2186
        %v3137 = vpack.c.bf16 %v2189, %v2188
        %v3138 = vpack.c.bf16 %v2191, %v2190
        %v3139 = vpack.c.bf16 %v2193, %v2192
        %v3140 = vpack.c.bf16 %v2195, %v2194
        %v3141 = vpack.c.bf16 %v2197, %v2196
        %v3142 = vld [vmem:[%s5] sm:$0x3]
        %3159 = vrot.lane.b32.xlu0 %v3126, 32
        %v3160 = vpop.permute.xlu0 %3159
        %3161 = vrot.lane.b32.xlu0 %v3127, 32
        %v3162 = vpop.permute.xlu0 %3161
        %3163 = vrot.lane.b32.xlu0 %v3128, 32
        %v3164 = vpop.permute.xlu0 %3163
        %3165 = vrot.lane.b32.xlu0 %v3129, 32
        %v3166 = vpop.permute.xlu0 %3165
        %3167 = vrot.lane.b32.xlu0 %v3130, 32
        %v3168 = vpop.permute.xlu0 %3167
        %3169 = vrot.lane.b32.xlu0 %v3131, 32
        %v3170 = vpop.permute.xlu0 %3169
        %3171 = vrot.lane.b32.xlu0 %v3132, 32
        %v3172 = vpop.permute.xlu0 %3171
        %3173 = vrot.lane.b32.xlu0 %v3133, 32
        %v3174 = vpop.permute.xlu0 %3173
        %3175 = vrot.lane.b32.xlu0 %v3134, 32
        %v3176 = vpop.permute.xlu0 %3175
        %3177 = vrot.lane.b32.xlu0 %v3135, 32
        %v3178 = vpop.permute.xlu0 %3177
        %3179 = vrot.lane.b32.xlu0 %v3136, 32
        %v3180 = vpop.permute.xlu0 %3179
        %3181 = vrot.lane.b32.xlu0 %v3137, 32
        %v3182 = vpop.permute.xlu0 %3181
        %3183 = vrot.lane.b32.xlu0 %v3138, 32
        %v3184 = vpop.permute.xlu0 %3183
        %3185 = vrot.lane.b32.xlu0 %v3139, 32
        %v3186 = vpop.permute.xlu0 %3185
        %3187 = vrot.lane.b32.xlu0 %v3140, 32
        %v3188 = vpop.permute.xlu0 %3187
        %3189 = vrot.lane.b32.xlu0 %v3141, 32
        %v3190 = vpop.permute.xlu0 %3189
        %vm3191 = vcmask 31744
        %v3193 = vsel %vm3191, %v3160, 0
        %v3196 = vsel %vm3191, %v3162, 0
        %v3199 = vsel %vm3191, %v3164, 0
        %v3202 = vsel %vm3191, %v3166, 0
        %v3205 = vsel %vm3191, %v3168, 0
        %v3208 = vsel %vm3191, %v3170, 0
        %v3211 = vsel %vm3191, %v3172, 0
        %v3214 = vsel %vm3191, %v3174, 0
        %v3217 = vsel %vm3191, %v3176, 0
        %v3220 = vsel %vm3191, %v3178, 0
        %v3223 = vsel %vm3191, %v3180, 0
        %v3226 = vsel %vm3191, %v3182, 0
        %v3229 = vsel %vm3191, %v3184, 0
        %v3232 = vsel %vm3191, %v3186, 0
        %v3235 = vsel %vm3191, %v3188, 0
        %v3238 = vsel %vm3191, %v3190, 0
        %vm3240 = vcmask 1041408
        %v3242 = vsel %vm3240, %v3142, 0
        %3244 = vmatprep.subr.bf16.mxu0 0
        %3245 = vmatpush1.bf16.msra.mxu0 %v3242
        %3246 = vmatprep.subr.bf16.mxu0 0
        %3247 = vmatpush1.bf16.msra.mxu0 0
        %3248 = vmatprep.subr.bf16.mxu0 0
        %3249 = vmatpush1.bf16.msra.mxu0 0
        %3250 = vmatprep.subr.bf16.mxu0 0
        %3251 = vmatpush1.bf16.msra.mxu0 0
        %3252 = vmatprep.subr.bf16.mxu0 0
        %3253 = vmatpush1.bf16.msra.mxu0 0
        %3254 = vmatprep.subr.bf16.mxu0 0
        %3255 = vmatpush1.bf16.msra.mxu0 0
        %3256 = vmatprep.subr.bf16.mxu0 0
        %3257 = vmatpush1.bf16.msra.mxu0 0
        %3258 = vmatprep.subr.bf16.mxu0 0
        %3259 = vmatpush1.bf16.msra.mxu0 0
        %3260 = vmatprep.subr.bf16.mxu0 0
        %3261 = vmatpush1.bf16.msra.mxu0 0
        %3262 = vmatprep.subr.bf16.mxu0 0
        %3263 = vmatpush1.bf16.msra.mxu0 0
        %3264 = vmatprep.subr.bf16.mxu0 0
        %3265 = vmatpush1.bf16.msra.mxu0 0
        %3266 = vmatprep.subr.bf16.mxu0 0
        %3267 = vmatpush1.bf16.msra.mxu0 0
        %3268 = vmatprep.subr.bf16.mxu0 0
        %3269 = vmatpush1.bf16.msra.mxu0 0
        %3270 = vmatprep.subr.bf16.mxu0 0
        %3271 = vmatpush1.bf16.msra.mxu0 0
        %3272 = vmatprep.subr.bf16.mxu0 0
        %3273 = vmatpush1.bf16.msra.mxu0 0
        %3274 = vmatprep.subr.bf16.mxu0 0
        %3275 = vmatpush1.bf16.msra.mxu0 0
        %3276 = vmatprep.mubr.bf16.mxu0 0
        %3277 = vmatmul.mubr.bf16.gmra.mrb[0].mxu0 %v3193
        %v3278 = vpop.f32.mrb[0].mxu0
        %v3279 = vadd.f32 0.0, %v3278
        %v3280 = vpop.f32.mrb[0].mxu0
        %v3281 = vpop.f32.mrb[0].mxu0
        %v3282 = vadd.f32 0.0, %v3281
        %v3283 = vpop.f32.mrb[0].mxu0
        %3284 = vmatprep.mubr.bf16.mxu0 0
        %3285 = vmatmul.mubr.bf16.gmra.mrb[0].mxu0 %v3196
        %v3286 = vpop.f32.mrb[0].mxu0
        %v3287 = vadd.f32 0.0, %v3286
        %v3288 = vpop.f32.mrb[0].mxu0
        %v3289 = vpop.f32.mrb[0].mxu0
        %v3290 = vadd.f32 0.0, %v3289
        %v3291 = vpop.f32.mrb[0].mxu0
        %3292 = vmatprep.mubr.bf16.mxu0 0
        %3293 = vmatmul.mubr.bf16.gmra.mrb[0].mxu0 %v3199
        %v3294 = vpop.f32.mrb[0].mxu0
        %v3295 = vadd.f32 0.0, %v3294
        %v3296 = vpop.f32.mrb[0].mxu0
        %v3297 = vpop.f32.mrb[0].mxu0
        %v3298 = vadd.f32 0.0, %v3297
        %v3299 = vpop.f32.mrb[0].mxu0
        %3300 = vmatprep.mubr.bf16.mxu0 0
        %3301 = vmatmul.mubr.bf16.gmra.mrb[0].mxu0 %v3202
        %v3302 = vpop.f32.mrb[0].mxu0
        %v3303 = vadd.f32 0.0, %v3302
        %v3304 = vpop.f32.mrb[0].mxu0
        %v3305 = vpop.f32.mrb[0].mxu0
        %v3306 = vadd.f32 0.0, %v3305
        %v3307 = vpop.f32.mrb[0].mxu0
        %3308 = vmatprep.mubr.bf16.mxu0 0
        %3309 = vmatmul.mubr.bf16.gmra.mrb[0].mxu0 %v3205
        %v3310 = vpop.f32.mrb[0].mxu0
        %v3311 = vadd.f32 0.0, %v3310
        %v3312 = vpop.f32.mrb[0].mxu0
        %v3313 = vpop.f32.mrb[0].mxu0
        %v3314 = vadd.f32 0.0, %v3313
        %v3315 = vpop.f32.mrb[0].mxu0
        %3316 = vmatprep.mubr.bf16.mxu0 0
        %3317 = vmatmul.mubr.bf16.gmra.mrb[0].mxu0 %v3208
        %v3318 = vpop.f32.mrb[0].mxu0
        %v3319 = vadd.f32 0.0, %v3318
        %v3320 = vpop.f32.mrb[0].mxu0
        %v3321 = vpop.f32.mrb[0].mxu0
        %v3322 = vadd.f32 0.0, %v3321
        %v3323 = vpop.f32.mrb[0].mxu0
        %3324 = vmatprep.mubr.bf16.mxu0 0
        %3325 = vmatmul.mubr.bf16.gmra.mrb[0].mxu0 %v3211
        %v3326 = vpop.f32.mrb[0].mxu0
        %v3327 = vadd.f32 0.0, %v3326
        %v3328 = vpop.f32.mrb[0].mxu0
        %v3329 = vpop.f32.mrb[0].mxu0
        %v3330 = vadd.f32 0.0, %v3329
        %v3331 = vpop.f32.mrb[0].mxu0
        %3332 = vmatprep.mubr.bf16.mxu0 0
        %3333 = vmatmul.mubr.bf16.gmra.mrb[0].mxu0 %v3214
        %v3334 = vpop.f32.mrb[0].mxu0
        %v3335 = vadd.f32 0.0, %v3334
        %v3336 = vpop.f32.mrb[0].mxu0
        %v3337 = vpop.f32.mrb[0].mxu0
        %v3338 = vadd.f32 0.0, %v3337
        %v3339 = vpop.f32.mrb[0].mxu0
        %3340 = vmatprep.mubr.bf16.mxu0 0
        %3341 = vmatmul.mubr.bf16.gmra.mrb[0].mxu0 %v3217
        %v3342 = vpop.f32.mrb[0].mxu0
        %v3343 = vadd.f32 0.0, %v3342
        %v3344 = vpop.f32.mrb[0].mxu0
        %v3345 = vpop.f32.mrb[0].mxu0
        %v3346 = vadd.f32 0.0, %v3345
        %v3347 = vpop.f32.mrb[0].mxu0
        %3348 = vmatprep.mubr.bf16.mxu0 0
        %3349 = vmatmul.mubr.bf16.gmra.mrb[0].mxu0 %v3220
        %v3350 = vpop.f32.mrb[0].mxu0
        %v3351 = vadd.f32 0.0, %v3350
        %v3352 = vpop.f32.mrb[0].mxu0
        %v3353 = vpop.f32.mrb[0].mxu0
        %v3354 = vadd.f32 0.0, %v3353
        %v3355 = vpop.f32.mrb[0].mxu0
        %3356 = vmatprep.mubr.bf16.mxu0 0
        %3357 = vmatmul.mubr.bf16.gmra.mrb[0].mxu0 %v3223
        %v3358 = vpop.f32.mrb[0].mxu0
        %v3359 = vadd.f32 0.0, %v3358
        %v3360 = vpop.f32.mrb[0].mxu0
        %v3361 = vpop.f32.mrb[0].mxu0
        %v3362 = vadd.f32 0.0, %v3361
        %v3363 = vpop.f32.mrb[0].mxu0
        %3364 = vmatprep.mubr.bf16.mxu0 0
        %3365 = vmatmul.mubr.bf16.gmra.mrb[0].mxu0 %v3226
        %v3366 = vpop.f32.mrb[0].mxu0
        %v3367 = vadd.f32 0.0, %v3366
        %v3368 = vpop.f32.mrb[0].mxu0
        %v3369 = vpop.f32.mrb[0].mxu0
        %v3370 = vadd.f32 0.0, %v3369
        %v3371 = vpop.f32.mrb[0].mxu0
        %3372 = vmatprep.mubr.bf16.mxu0 0
        %3373 = vmatmul.mubr.bf16.gmra.mrb[0].mxu0 %v3229
        %v3374 = vpop.f32.mrb[0].mxu0
        %v3375 = vadd.f32 0.0, %v3374
        %v3376 = vpop.f32.mrb[0].mxu0
        %v3377 = vpop.f32.mrb[0].mxu0
        %v3378 = vadd.f32 0.0, %v3377
        %v3379 = vpop.f32.mrb[0].mxu0
        %3380 = vmatprep.mubr.bf16.mxu0 0
        %3381 = vmatmul.mubr.bf16.gmra.mrb[0].mxu0 %v3232
        %v3382 = vpop.f32.mrb[0].mxu0
        %v3383 = vadd.f32 0.0, %v3382
        %v3384 = vpop.f32.mrb[0].mxu0
        %v3385 = vpop.f32.mrb[0].mxu0
        %v3386 = vadd.f32 0.0, %v3385
        %v3387 = vpop.f32.mrb[0].mxu0
        %3388 = vmatprep.mubr.bf16.mxu0 0
        %3389 = vmatmul.mubr.bf16.gmra.mrb[0].mxu0 %v3235
        %v3390 = vpop.f32.mrb[0].mxu0
        %v3391 = vadd.f32 0.0, %v3390
        %v3392 = vpop.f32.mrb[0].mxu0
        %v3393 = vpop.f32.mrb[0].mxu0
        %v3394 = vadd.f32 0.0, %v3393
        %v3395 = vpop.f32.mrb[0].mxu0
        %3396 = vmatprep.mubr.bf16.mxu0 0
        %3397 = vmatmul.mubr.bf16.gmra.mrb[0].mxu0 %v3238
        %v3398 = vpop.f32.mrb[0].mxu0
        %v3399 = vadd.f32 0.0, %v3398
        %v3400 = vpop.f32.mrb[0].mxu0
        %v3401 = vpop.f32.mrb[0].mxu0
        %v3402 = vadd.f32 0.0, %v3401
        %v3403 = vpop.f32.mrb[0].mxu0
        %3404 = vdwg.mxu0
        %v3405 = vpack.c.bf16 %v3095, %v3094
        %v3406 = vpack.c.bf16 %v3097, %v3096
        %v3407 = vpack.c.bf16 %v3099, %v3098
        %v3408 = vpack.c.bf16 %v3101, %v3100
        %v3409 = vpack.c.bf16 %v3103, %v3102
        %v3410 = vpack.c.bf16 %v3105, %v3104
        %v3411 = vpack.c.bf16 %v3107, %v3106
        %v3412 = vpack.c.bf16 %v3109, %v3108
        %v3413 = vpack.c.bf16 %v3111, %v3110
        %v3414 = vpack.c.bf16 %v3113, %v3112
        %v3415 = vpack.c.bf16 %v3115, %v3114
        %v3416 = vpack.c.bf16 %v3117, %v3116
        %v3417 = vpack.c.bf16 %v3119, %v3118
        %v3418 = vpack.c.bf16 %v3121, %v3120
        %v3419 = vpack.c.bf16 %v3123, %v3122
        %v3420 = vpack.c.bf16 %v3125, %v3124
        %v3421 = vld [vmem:[%s6] sm:$0x3]
        %3438 = vrot.lane.b32.xlu0 %v3405, 28
        %v3439 = vpop.permute.xlu0 %3438
        %3440 = vrot.lane.b32.xlu0 %v3406, 28
        %v3441 = vpop.permute.xlu0 %3440
        %3442 = vrot.lane.b32.xlu0 %v3407, 28
        %v3443 = vpop.permute.xlu0 %3442
        %3444 = vrot.lane.b32.xlu0 %v3408, 28
        %v3445 = vpop.permute.xlu0 %3444
        %3446 = vrot.lane.b32.xlu0 %v3409, 28
        %v3447 = vpop.permute.xlu0 %3446
        %3448 = vrot.lane.b32.xlu0 %v3410, 28
        %v3449 = vpop.permute.xlu0 %3448
        %3450 = vrot.lane.b32.xlu0 %v3411, 28
        %v3451 = vpop.permute.xlu0 %3450
        %3452 = vrot.lane.b32.xlu0 %v3412, 28
        %v3453 = vpop.permute.xlu0 %3452
        %3454 = vrot.lane.b32.xlu0 %v3413, 28
        %v3455 = vpop.permute.xlu0 %3454
        %3456 = vrot.lane.b32.xlu0 %v3414, 28
        %v3457 = vpop.permute.xlu0 %3456
        %3458 = vrot.lane.b32.xlu0 %v3415, 28
        %v3459 = vpop.permute.xlu0 %3458
        %3460 = vrot.lane.b32.xlu0 %v3416, 28
        %v3461 = vpop.permute.xlu0 %3460
        %3462 = vrot.lane.b32.xlu0 %v3417, 28
        %v3463 = vpop.permute.xlu0 %3462
        %3464 = vrot.lane.b32.xlu0 %v3418, 28
        %v3465 = vpop.permute.xlu0 %3464
        %3466 = vrot.lane.b32.xlu0 %v3419, 28
        %v3467 = vpop.permute.xlu0 %3466
        %3468 = vrot.lane.b32.xlu0 %v3420, 28
        %v3469 = vpop.permute.xlu0 %3468
        %v3471 = vsel %vm3191, %v3439, 0
        %v3474 = vsel %vm3191, %v3441, 0
        %v3477 = vsel %vm3191, %v3443, 0
        %v3480 = vsel %vm3191, %v3445, 0
        %v3483 = vsel %vm3191, %v3447, 0
        %v3486 = vsel %vm3191, %v3449, 0
        %v3489 = vsel %vm3191, %v3451, 0
        %v3492 = vsel %vm3191, %v3453, 0
        %v3495 = vsel %vm3191, %v3455, 0
        %v3498 = vsel %vm3191, %v3457, 0
        %v3501 = vsel %vm3191, %v3459, 0
        %v3504 = vsel %vm3191, %v3461, 0
        %v3507 = vsel %vm3191, %v3463, 0
        %v3510 = vsel %vm3191, %v3465, 0
        %v3513 = vsel %vm3191, %v3467, 0
        %v3516 = vsel %vm3191, %v3469, 0
        %v3519 = vsel %vm3240, %v3421, 0
        %3521 = vmatprep.subr.bf16.mxu0 0
        %3522 = vmatpush1.bf16.msra.mxu0 %v3519
        %3523 = vmatprep.subr.bf16.mxu0 0
        %3524 = vmatpush1.bf16.msra.mxu0 0
        %3525 = vmatprep.subr.bf16.mxu0 0
        %3526 = vmatpush1.bf16.msra.mxu0 0
        %3527 = vmatprep.subr.bf16.mxu0 0
        %3528 = vmatpush1.bf16.msra.mxu0 0
        %3529 = vmatprep.subr.bf16.mxu0 0
        %3530 = vmatpush1.bf16.msra.mxu0 0
        %3531 = vmatprep.subr.bf16.mxu0 0
        %3532 = vmatpush1.bf16.msra.mxu0 0
        %3533 = vmatprep.subr.bf16.mxu0 0
        %3534 = vmatpush1.bf16.msra.mxu0 0
        %3535 = vmatprep.subr.bf16.mxu0 0
        %3536 = vmatpush1.bf16.msra.mxu0 0
        %3537 = vmatprep.subr.bf16.mxu0 0
        %3538 = vmatpush1.bf16.msra.mxu0 0
        %3539 = vmatprep.subr.bf16.mxu0 0
        %3540 = vmatpush1.bf16.msra.mxu0 0
        %3541 = vmatprep.subr.bf16.mxu0 0
        %3542 = vmatpush1.bf16.msra.mxu0 0
        %3543 = vmatprep.subr.bf16.mxu0 0
        %3544 = vmatpush1.bf16.msra.mxu0 0
        %3545 = vmatprep.subr.bf16.mxu0 0
        %3546 = vmatpush1.bf16.msra.mxu0 0
        %3547 = vmatprep.subr.bf16.mxu0 0
        %3548 = vmatpush1.bf16.msra.mxu0 0
        %3549 = vmatprep.subr.bf16.mxu0 0
        %3550 = vmatpush1.bf16.msra.mxu0 0
        %3551 = vmatprep.subr.bf16.mxu0 0
        %3552 = vmatpush1.bf16.msra.mxu0 0
        %3553 = vmatprep.mubr.bf16.mxu0 0
        %3554 = vmatmul.mubr.bf16.gmra.mrb[0].mxu0 %v3471
        %v3555 = vpop.f32.mrb[0].mxu0
        %v3556 = vadd.f32 0.0, %v3555
        %v3557 = vpop.f32.mrb[0].mxu0
        %v3558 = vpop.f32.mrb[0].mxu0
        %v3559 = vadd.f32 0.0, %v3558
        %v3560 = vpop.f32.mrb[0].mxu0
        %3561 = vmatprep.mubr.bf16.mxu0 0
        %3562 = vmatmul.mubr.bf16.gmra.mrb[0].mxu0 %v3474
        %v3563 = vpop.f32.mrb[0].mxu0
        %v3564 = vadd.f32 0.0, %v3563
        %v3565 = vpop.f32.mrb[0].mxu0
        %v3566 = vpop.f32.mrb[0].mxu0
        %v3567 = vadd.f32 0.0, %v3566
        %v3568 = vpop.f32.mrb[0].mxu0
        %3569 = vmatprep.mubr.bf16.mxu0 0
        %3570 = vmatmul.mubr.bf16.gmra.mrb[0].mxu0 %v3477
        %v3571 = vpop.f32.mrb[0].mxu0
        %v3572 = vadd.f32 0.0, %v3571
        %v3573 = vpop.f32.mrb[0].mxu0
        %v3574 = vpop.f32.mrb[0].mxu0
        %v3575 = vadd.f32 0.0, %v3574
        %v3576 = vpop.f32.mrb[0].mxu0
        %3577 = vmatprep.mubr.bf16.mxu0 0
        %3578 = vmatmul.mubr.bf16.gmra.mrb[0].mxu0 %v3480
        %v3579 = vpop.f32.mrb[0].mxu0
        %v3580 = vadd.f32 0.0, %v3579
        %v3581 = vpop.f32.mrb[0].mxu0
        %v3582 = vpop.f32.mrb[0].mxu0
        %v3583 = vadd.f32 0.0, %v3582
        %v3584 = vpop.f32.mrb[0].mxu0
        %3585 = vmatprep.mubr.bf16.mxu0 0
        %3586 = vmatmul.mubr.bf16.gmra.mrb[0].mxu0 %v3483
        %v3587 = vpop.f32.mrb[0].mxu0
        %v3588 = vadd.f32 0.0, %v3587
        %v3589 = vpop.f32.mrb[0].mxu0
        %v3590 = vpop.f32.mrb[0].mxu0
        %v3591 = vadd.f32 0.0, %v3590
        %v3592 = vpop.f32.mrb[0].mxu0
        %3593 = vmatprep.mubr.bf16.mxu0 0
        %3594 = vmatmul.mubr.bf16.gmra.mrb[0].mxu0 %v3486
        %v3595 = vpop.f32.mrb[0].mxu0
        %v3596 = vadd.f32 0.0, %v3595
        %v3597 = vpop.f32.mrb[0].mxu0
        %v3598 = vpop.f32.mrb[0].mxu0
        %v3599 = vadd.f32 0.0, %v3598
        %v3600 = vpop.f32.mrb[0].mxu0
        %3601 = vmatprep.mubr.bf16.mxu0 0
        %3602 = vmatmul.mubr.bf16.gmra.mrb[0].mxu0 %v3489
        %v3603 = vpop.f32.mrb[0].mxu0
        %v3604 = vadd.f32 0.0, %v3603
        %v3605 = vpop.f32.mrb[0].mxu0
        %v3606 = vpop.f32.mrb[0].mxu0
        %v3607 = vadd.f32 0.0, %v3606
        %v3608 = vpop.f32.mrb[0].mxu0
        %3609 = vmatprep.mubr.bf16.mxu0 0
        %3610 = vmatmul.mubr.bf16.gmra.mrb[0].mxu0 %v3492
        %v3611 = vpop.f32.mrb[0].mxu0
        %v3612 = vadd.f32 0.0, %v3611
        %v3613 = vpop.f32.mrb[0].mxu0
        %v3614 = vpop.f32.mrb[0].mxu0
        %v3615 = vadd.f32 0.0, %v3614
        %v3616 = vpop.f32.mrb[0].mxu0
        %3617 = vmatprep.mubr.bf16.mxu0 0
        %3618 = vmatmul.mubr.bf16.gmra.mrb[0].mxu0 %v3495
        %v3619 = vpop.f32.mrb[0].mxu0
        %v3620 = vadd.f32 0.0, %v3619
        %v3621 = vpop.f32.mrb[0].mxu0
        %v3622 = vpop.f32.mrb[0].mxu0
        %v3623 = vadd.f32 0.0, %v3622
        %v3624 = vpop.f32.mrb[0].mxu0
        %3625 = vmatprep.mubr.bf16.mxu0 0
        %3626 = vmatmul.mubr.bf16.gmra.mrb[0].mxu0 %v3498
        %v3627 = vpop.f32.mrb[0].mxu0
        %v3628 = vadd.f32 0.0, %v3627
        %v3629 = vpop.f32.mrb[0].mxu0
        %v3630 = vpop.f32.mrb[0].mxu0
        %v3631 = vadd.f32 0.0, %v3630
        %v3632 = vpop.f32.mrb[0].mxu0
        %3633 = vmatprep.mubr.bf16.mxu0 0
        %3634 = vmatmul.mubr.bf16.gmra.mrb[0].mxu0 %v3501
        %v3635 = vpop.f32.mrb[0].mxu0
        %v3636 = vadd.f32 0.0, %v3635
        %v3637 = vpop.f32.mrb[0].mxu0
        %v3638 = vpop.f32.mrb[0].mxu0
        %v3639 = vadd.f32 0.0, %v3638
        %v3640 = vpop.f32.mrb[0].mxu0
        %3641 = vmatprep.mubr.bf16.mxu0 0
        %3642 = vmatmul.mubr.bf16.gmra.mrb[0].mxu0 %v3504
        %v3643 = vpop.f32.mrb[0].mxu0
        %v3644 = vadd.f32 0.0, %v3643
        %v3645 = vpop.f32.mrb[0].mxu0
        %v3646 = vpop.f32.mrb[0].mxu0
        %v3647 = vadd.f32 0.0, %v3646
        %v3648 = vpop.f32.mrb[0].mxu0
        %3649 = vmatprep.mubr.bf16.mxu0 0
        %3650 = vmatmul.mubr.bf16.gmra.mrb[0].mxu0 %v3507
        %v3651 = vpop.f32.mrb[0].mxu0
        %v3652 = vadd.f32 0.0, %v3651
        %v3653 = vpop.f32.mrb[0].mxu0
        %v3654 = vpop.f32.mrb[0].mxu0
        %v3655 = vadd.f32 0.0, %v3654
        %v3656 = vpop.f32.mrb[0].mxu0
        %3657 = vmatprep.mubr.bf16.mxu0 0
        %3658 = vmatmul.mubr.bf16.gmra.mrb[0].mxu0 %v3510
        %v3659 = vpop.f32.mrb[0].mxu0
        %v3660 = vadd.f32 0.0, %v3659
        %v3661 = vpop.f32.mrb[0].mxu0
        %v3662 = vpop.f32.mrb[0].mxu0
        %v3663 = vadd.f32 0.0, %v3662
        %v3664 = vpop.f32.mrb[0].mxu0
        %3665 = vmatprep.mubr.bf16.mxu0 0
        %3666 = vmatmul.mubr.bf16.gmra.mrb[0].mxu0 %v3513
        %v3667 = vpop.f32.mrb[0].mxu0
        %v3668 = vadd.f32 0.0, %v3667
        %v3669 = vpop.f32.mrb[0].mxu0
        %v3670 = vpop.f32.mrb[0].mxu0
        %v3671 = vadd.f32 0.0, %v3670
        %v3672 = vpop.f32.mrb[0].mxu0
        %3673 = vmatprep.mubr.bf16.mxu0 0
        %3674 = vmatmul.mubr.bf16.gmra.mrb[0].mxu0 %v3516
        %v3675 = vpop.f32.mrb[0].mxu0
        %v3676 = vadd.f32 0.0, %v3675
        %v3677 = vpop.f32.mrb[0].mxu0
        %v3678 = vpop.f32.mrb[0].mxu0
        %v3679 = vadd.f32 0.0, %v3678
        %v3680 = vpop.f32.mrb[0].mxu0
        %3681 = vdwg.mxu0
        %v3682 = vadd.f32 %v694, %v3279
        %v3683 = vadd.f32 %v695, %v3282
        %v3684 = vadd.f32 %v696, %v3287
        %v3685 = vadd.f32 %v697, %v3290
        %v3686 = vadd.f32 %v698, %v3295
        %v3687 = vadd.f32 %v699, %v3298
        %v3688 = vadd.f32 %v700, %v3303
        %v3689 = vadd.f32 %v701, %v3306
        %v3690 = vadd.f32 %v702, %v3311
        %v3691 = vadd.f32 %v703, %v3314
        %v3692 = vadd.f32 %v704, %v3319
        %v3693 = vadd.f32 %v705, %v3322
        %v3694 = vadd.f32 %v706, %v3327
        %v3695 = vadd.f32 %v707, %v3330
        %v3696 = vadd.f32 %v708, %v3335
        %v3697 = vadd.f32 %v709, %v3338
        %v3698 = vadd.f32 %v710, %v3343
        %v3699 = vadd.f32 %v711, %v3346
        %v3700 = vadd.f32 %v712, %v3351
        %v3701 = vadd.f32 %v713, %v3354
        %v3702 = vadd.f32 %v714, %v3359
        %v3703 = vadd.f32 %v715, %v3362
        %v3704 = vadd.f32 %v716, %v3367
        %v3705 = vadd.f32 %v717, %v3370
        %v3706 = vadd.f32 %v718, %v3375
        %v3707 = vadd.f32 %v719, %v3378
        %v3708 = vadd.f32 %v720, %v3383
        %v3709 = vadd.f32 %v721, %v3386
        %v3710 = vadd.f32 %v722, %v3391
        %v3711 = vadd.f32 %v723, %v3394
        %v3712 = vadd.f32 %v724, %v3399
        %v3713 = vadd.f32 %v725, %v3402
        %vm3714 = vcmask 261120
        %3715 = vst.msk [vmem:[%s304] sm:$0xff] %vm3714, %v3682
        %3716 = vst.msk [vmem:[%s304 + $0x8] sm:$0xff] %vm3714, %v3683
        %3717 = vst.msk [vmem:[%s304 + $0x10] sm:$0xff] %vm3714, %v3684
        %3718 = vst.msk [vmem:[%s304 + $0x18] sm:$0xff] %vm3714, %v3685
        %3719 = vst.msk [vmem:[%s304 + $0x20] sm:$0xff] %vm3714, %v3686
        %3720 = vst.msk [vmem:[%s304 + $0x28] sm:$0xff] %vm3714, %v3687
        %3721 = vst.msk [vmem:[%s304 + $0x30] sm:$0xff] %vm3714, %v3688
        %3722 = vst.msk [vmem:[%s304 + $0x38] sm:$0xff] %vm3714, %v3689
        %3723 = vst.msk [vmem:[%s304 + $0x40] sm:$0xff] %vm3714, %v3690
        %3724 = vst.msk [vmem:[%s304 + $0x48] sm:$0xff] %vm3714, %v3691
        %3725 = vst.msk [vmem:[%s304 + $0x50] sm:$0xff] %vm3714, %v3692
        %3726 = vst.msk [vmem:[%s304 + $0x58] sm:$0xff] %vm3714, %v3693
        %3727 = vst.msk [vmem:[%s304 + $0x60] sm:$0xff] %vm3714, %v3694
        %3728 = vst.msk [vmem:[%s304 + $0x68] sm:$0xff] %vm3714, %v3695
        %3729 = vst.msk [vmem:[%s304 + $0x70] sm:$0xff] %vm3714, %v3696
        %3730 = vst.msk [vmem:[%s304 + $0x78] sm:$0xff] %vm3714, %v3697
        %3731 = vst.msk [vmem:[%s304 + $0x80] sm:$0xff] %vm3714, %v3698
        %3732 = vst.msk [vmem:[%s304 + $0x88] sm:$0xff] %vm3714, %v3699
        %3733 = vst.msk [vmem:[%s304 + $0x90] sm:$0xff] %vm3714, %v3700
        %3734 = vst.msk [vmem:[%s304 + $0x98] sm:$0xff] %vm3714, %v3701
        %3735 = vst.msk [vmem:[%s304 + $0xa0] sm:$0xff] %vm3714, %v3702
        %3736 = vst.msk [vmem:[%s304 + $0xa8] sm:$0xff] %vm3714, %v3703
        %3737 = vst.msk [vmem:[%s304 + $0xb0] sm:$0xff] %vm3714, %v3704
        %3738 = vst.msk [vmem:[%s304 + $0xb8] sm:$0xff] %vm3714, %v3705
        %3739 = vst.msk [vmem:[%s304 + $0xc0] sm:$0xff] %vm3714, %v3706
        %3740 = vst.msk [vmem:[%s304 + $0xc8] sm:$0xff] %vm3714, %v3707
        %3741 = vst.msk [vmem:[%s304 + $0xd0] sm:$0xff] %vm3714, %v3708
        %3742 = vst.msk [vmem:[%s304 + $0xd8] sm:$0xff] %vm3714, %v3709
        %3743 = vst.msk [vmem:[%s304 + $0xe0] sm:$0xff] %vm3714, %v3710
        %3744 = vst.msk [vmem:[%s304 + $0xe8] sm:$0xff] %vm3714, %v3711
        %3745 = vst.msk [vmem:[%s304 + $0xf0] sm:$0xff] %vm3714, %v3712
        %3746 = vst.msk [vmem:[%s304 + $0xf8] sm:$0xff] %vm3714, %v3713
        %vm3747 = vcmask 523520
        %3748 = vst.msk [vmem:[%s304] sm:$0xff] %vm3747, %v694
        %3749 = vst.msk [vmem:[%s304 + $0x8] sm:$0xff] %vm3747, %v695
        %3750 = vst.msk [vmem:[%s304 + $0x10] sm:$0xff] %vm3747, %v696
        %3751 = vst.msk [vmem:[%s304 + $0x18] sm:$0xff] %vm3747, %v697
        %3752 = vst.msk [vmem:[%s304 + $0x20] sm:$0xff] %vm3747, %v698
        %3753 = vst.msk [vmem:[%s304 + $0x28] sm:$0xff] %vm3747, %v699
        %3754 = vst.msk [vmem:[%s304 + $0x30] sm:$0xff] %vm3747, %v700
        %3755 = vst.msk [vmem:[%s304 + $0x38] sm:$0xff] %vm3747, %v701
        %3756 = vst.msk [vmem:[%s304 + $0x40] sm:$0xff] %vm3747, %v702
        %3757 = vst.msk [vmem:[%s304 + $0x48] sm:$0xff] %vm3747, %v703
        %3758 = vst.msk [vmem:[%s304 + $0x50] sm:$0xff] %vm3747, %v704
        %3759 = vst.msk [vmem:[%s304 + $0x58] sm:$0xff] %vm3747, %v705
        %3760 = vst.msk [vmem:[%s304 + $0x60] sm:$0xff] %vm3747, %v706
        %3761 = vst.msk [vmem:[%s304 + $0x68] sm:$0xff] %vm3747, %v707
        %3762 = vst.msk [vmem:[%s304 + $0x70] sm:$0xff] %vm3747, %v708
        %3763 = vst.msk [vmem:[%s304 + $0x78] sm:$0xff] %vm3747, %v709
        %3764 = vst.msk [vmem:[%s304 + $0x80] sm:$0xff] %vm3747, %v710
        %3765 = vst.msk [vmem:[%s304 + $0x88] sm:$0xff] %vm3747, %v711
        %3766 = vst.msk [vmem:[%s304 + $0x90] sm:$0xff] %vm3747, %v712
        %3767 = vst.msk [vmem:[%s304 + $0x98] sm:$0xff] %vm3747, %v713
        %3768 = vst.msk [vmem:[%s304 + $0xa0] sm:$0xff] %vm3747, %v714
        %3769 = vst.msk [vmem:[%s304 + $0xa8] sm:$0xff] %vm3747, %v715
        %3770 = vst.msk [vmem:[%s304 + $0xb0] sm:$0xff] %vm3747, %v716
        %3771 = vst.msk [vmem:[%s304 + $0xb8] sm:$0xff] %vm3747, %v717
        %3772 = vst.msk [vmem:[%s304 + $0xc0] sm:$0xff] %vm3747, %v718
        %3773 = vst.msk [vmem:[%s304 + $0xc8] sm:$0xff] %vm3747, %v719
        %3774 = vst.msk [vmem:[%s304 + $0xd0] sm:$0xff] %vm3747, %v720
        %3775 = vst.msk [vmem:[%s304 + $0xd8] sm:$0xff] %vm3747, %v721
        %3776 = vst.msk [vmem:[%s304 + $0xe0] sm:$0xff] %vm3747, %v722
        %3777 = vst.msk [vmem:[%s304 + $0xe8] sm:$0xff] %vm3747, %v723
        %3778 = vst.msk [vmem:[%s304 + $0xf0] sm:$0xff] %vm3747, %v724
        %3779 = vst.msk [vmem:[%s304 + $0xf8] sm:$0xff] %vm3747, %v725
        %3812 = vrot.lane.b32.xlu0 %v3556, 64
        %v3813 = vpop.permute.xlu0 %3812
        %3814 = vrot.lane.b32.xlu0 %v3559, 64
        %v3815 = vpop.permute.xlu0 %3814
        %3816 = vrot.lane.b32.xlu0 %v3564, 64
        %v3817 = vpop.permute.xlu0 %3816
        %3818 = vrot.lane.b32.xlu0 %v3567, 64
        %v3819 = vpop.permute.xlu0 %3818
        %3820 = vrot.lane.b32.xlu0 %v3572, 64
        %v3821 = vpop.permute.xlu0 %3820
        %3822 = vrot.lane.b32.xlu0 %v3575, 64
        %v3823 = vpop.permute.xlu0 %3822
        %3824 = vrot.lane.b32.xlu0 %v3580, 64
        %v3825 = vpop.permute.xlu0 %3824
        %3826 = vrot.lane.b32.xlu0 %v3583, 64
        %v3827 = vpop.permute.xlu0 %3826
        %3828 = vrot.lane.b32.xlu0 %v3588, 64
        %v3829 = vpop.permute.xlu0 %3828
        %3830 = vrot.lane.b32.xlu0 %v3591, 64
        %v3831 = vpop.permute.xlu0 %3830
        %3832 = vrot.lane.b32.xlu0 %v3596, 64
        %v3833 = vpop.permute.xlu0 %3832
        %3834 = vrot.lane.b32.xlu0 %v3599, 64
        %v3835 = vpop.permute.xlu0 %3834
        %3836 = vrot.lane.b32.xlu0 %v3604, 64
        %v3837 = vpop.permute.xlu0 %3836
        %3838 = vrot.lane.b32.xlu0 %v3607, 64
        %v3839 = vpop.permute.xlu0 %3838
        %3840 = vrot.lane.b32.xlu0 %v3612, 64
        %v3841 = vpop.permute.xlu0 %3840
        %3842 = vrot.lane.b32.xlu0 %v3615, 64
        %v3843 = vpop.permute.xlu0 %3842
        %3844 = vrot.lane.b32.xlu0 %v3620, 64
        %v3845 = vpop.permute.xlu0 %3844
        %3846 = vrot.lane.b32.xlu0 %v3623, 64
        %v3847 = vpop.permute.xlu0 %3846
        %3848 = vrot.lane.b32.xlu0 %v3628, 64
        %v3849 = vpop.permute.xlu0 %3848
        %3850 = vrot.lane.b32.xlu0 %v3631, 64
        %v3851 = vpop.permute.xlu0 %3850
        %3852 = vrot.lane.b32.xlu0 %v3636, 64
        %v3853 = vpop.permute.xlu0 %3852
        %3854 = vrot.lane.b32.xlu0 %v3639, 64
        %v3855 = vpop.permute.xlu0 %3854
        %3856 = vrot.lane.b32.xlu0 %v3644, 64
        %v3857 = vpop.permute.xlu0 %3856
        %3858 = vrot.lane.b32.xlu0 %v3647, 64
        %v3859 = vpop.permute.xlu0 %3858
        %3860 = vrot.lane.b32.xlu0 %v3652, 64
        %v3861 = vpop.permute.xlu0 %3860
        %3862 = vrot.lane.b32.xlu0 %v3655, 64
        %v3863 = vpop.permute.xlu0 %3862
        %3864 = vrot.lane.b32.xlu0 %v3660, 64
        %v3865 = vpop.permute.xlu0 %3864
        %3866 = vrot.lane.b32.xlu0 %v3663, 64
        %v3867 = vpop.permute.xlu0 %3866
        %3868 = vrot.lane.b32.xlu0 %v3668, 64
        %v3869 = vpop.permute.xlu0 %3868
        %3870 = vrot.lane.b32.xlu0 %v3671, 64
        %v3871 = vpop.permute.xlu0 %3870
        %3872 = vrot.lane.b32.xlu0 %v3676, 64
        %v3873 = vpop.permute.xlu0 %3872
        %3874 = vrot.lane.b32.xlu0 %v3679, 64
        %v3875 = vpop.permute.xlu0 %3874
        %v3908 = vadd.f32 %v694, %v3813
        %v3909 = vadd.f32 %v695, %v3815
        %v3910 = vadd.f32 %v696, %v3817
        %v3911 = vadd.f32 %v697, %v3819
        %v3912 = vadd.f32 %v698, %v3821
        %v3913 = vadd.f32 %v699, %v3823
        %v3914 = vadd.f32 %v700, %v3825
        %v3915 = vadd.f32 %v701, %v3827
        %v3916 = vadd.f32 %v702, %v3829
        %v3917 = vadd.f32 %v703, %v3831
        %v3918 = vadd.f32 %v704, %v3833
        %v3919 = vadd.f32 %v705, %v3835
        %v3920 = vadd.f32 %v706, %v3837
        %v3921 = vadd.f32 %v707, %v3839
        %v3922 = vadd.f32 %v708, %v3841
        %v3923 = vadd.f32 %v709, %v3843
        %v3924 = vadd.f32 %v710, %v3845
        %v3925 = vadd.f32 %v711, %v3847
        %v3926 = vadd.f32 %v712, %v3849
        %v3927 = vadd.f32 %v713, %v3851
        %v3928 = vadd.f32 %v714, %v3853
        %v3929 = vadd.f32 %v715, %v3855
        %v3930 = vadd.f32 %v716, %v3857
        %v3931 = vadd.f32 %v717, %v3859
        %v3932 = vadd.f32 %v718, %v3861
        %v3933 = vadd.f32 %v719, %v3863
        %v3934 = vadd.f32 %v720, %v3865
        %v3935 = vadd.f32 %v721, %v3867
        %v3936 = vadd.f32 %v722, %v3869
        %v3937 = vadd.f32 %v723, %v3871
        %v3938 = vadd.f32 %v724, %v3873
        %v3939 = vadd.f32 %v725, %v3875
        %vm3940 = vcmask 785920
        %3941 = vst.msk [vmem:[%s304] sm:$0xff] %vm3940, %v3908
        %3942 = vst.msk [vmem:[%s304 + $0x8] sm:$0xff] %vm3940, %v3909
        %3943 = vst.msk [vmem:[%s304 + $0x10] sm:$0xff] %vm3940, %v3910
        %3944 = vst.msk [vmem:[%s304 + $0x18] sm:$0xff] %vm3940, %v3911
        %3945 = vst.msk [vmem:[%s304 + $0x20] sm:$0xff] %vm3940, %v3912
        %3946 = vst.msk [vmem:[%s304 + $0x28] sm:$0xff] %vm3940, %v3913
        %3947 = vst.msk [vmem:[%s304 + $0x30] sm:$0xff] %vm3940, %v3914
        %3948 = vst.msk [vmem:[%s304 + $0x38] sm:$0xff] %vm3940, %v3915
        %3949 = vst.msk [vmem:[%s304 + $0x40] sm:$0xff] %vm3940, %v3916
        %3950 = vst.msk [vmem:[%s304 + $0x48] sm:$0xff] %vm3940, %v3917
        %3951 = vst.msk [vmem:[%s304 + $0x50] sm:$0xff] %vm3940, %v3918
        %3952 = vst.msk [vmem:[%s304 + $0x58] sm:$0xff] %vm3940, %v3919
        %3953 = vst.msk [vmem:[%s304 + $0x60] sm:$0xff] %vm3940, %v3920
        %3954 = vst.msk [vmem:[%s304 + $0x68] sm:$0xff] %vm3940, %v3921
        %3955 = vst.msk [vmem:[%s304 + $0x70] sm:$0xff] %vm3940, %v3922
        %3956 = vst.msk [vmem:[%s304 + $0x78] sm:$0xff] %vm3940, %v3923
        %3957 = vst.msk [vmem:[%s304 + $0x80] sm:$0xff] %vm3940, %v3924
        %3958 = vst.msk [vmem:[%s304 + $0x88] sm:$0xff] %vm3940, %v3925
        %3959 = vst.msk [vmem:[%s304 + $0x90] sm:$0xff] %vm3940, %v3926
        %3960 = vst.msk [vmem:[%s304 + $0x98] sm:$0xff] %vm3940, %v3927
        %3961 = vst.msk [vmem:[%s304 + $0xa0] sm:$0xff] %vm3940, %v3928
        %3962 = vst.msk [vmem:[%s304 + $0xa8] sm:$0xff] %vm3940, %v3929
        %3963 = vst.msk [vmem:[%s304 + $0xb0] sm:$0xff] %vm3940, %v3930
        %3964 = vst.msk [vmem:[%s304 + $0xb8] sm:$0xff] %vm3940, %v3931
        %3965 = vst.msk [vmem:[%s304 + $0xc0] sm:$0xff] %vm3940, %v3932
        %3966 = vst.msk [vmem:[%s304 + $0xc8] sm:$0xff] %vm3940, %v3933
        %3967 = vst.msk [vmem:[%s304 + $0xd0] sm:$0xff] %vm3940, %v3934
        %3968 = vst.msk [vmem:[%s304 + $0xd8] sm:$0xff] %vm3940, %v3935
        %3969 = vst.msk [vmem:[%s304 + $0xe0] sm:$0xff] %vm3940, %v3936
        %3970 = vst.msk [vmem:[%s304 + $0xe8] sm:$0xff] %vm3940, %v3937
        %3971 = vst.msk [vmem:[%s304 + $0xf0] sm:$0xff] %vm3940, %v3938
        %3972 = vst.msk [vmem:[%s304 + $0xf8] sm:$0xff] %vm3940, %v3939
        %s3973 = sand.u32 %s191, 1
        %s3974 = scalar_lea.sflag [#allocation3], %s3973
        %s3975 = sand.u32 %s191, 1
        %s3976 = smul.addr %s3975, 256
        %s3977 = scalar_lea.vmem [#allocation2], %s3976
        // Predicated region
        $region49: #{conv_lora_qkv_forward.3} parent=47 // pred_check
          %p3978 = pneg %p201
        $region50: #{conv_lora_qkv_forward.3} parent=47 // pred_check_branch
          %3980 = sbr.rel (%p3978) target = $region52
        $region51: #{conv_lora_qkv_forward.3} parent=47 // pred_region
          %s3981 = smul.u32 32, %s21
          %s3983 = ssub.s32 4096, 4096
          %3984 = vsyncadd %s3974, %s3983
          %s3985 = smul.addr %s3981, 128
          %s3986 = scalar_lea.hbm %s7, %s3985
          %s3987 = sshll.u32 %s3977, 4
          %s3988 = int_to_ptr.vmem [resolvable:$true] %s3987
          %3993 = dma.vmem_to_hbm [thread:$0]  %s3988, 4096, %s3986, %s3974, 128, 128, 8
        $region52: #{conv_lora_qkv_forward.3} parent=47 // pred_fallthru
          _
      $region48: #{conv_lora_qkv_forward.3} parent=5 // pred_fallthru
        _
      %p3994 = scmp.le.s32.totalorder 2, %s16
      // Predicated region
      $region53: #{conv_lora_qkv_forward.3} parent=5 // pred_check
        %p3995 = pneg %p3994
      $region54: #{conv_lora_qkv_forward.3} parent=5 // pred_check_branch
        %3997 = sbr.rel (%p3995) target = $region56
      $region55: #{conv_lora_qkv_forward.3} parent=5 // pred_region
        %s3998 = ssub.s32 %s16, 2
        // Predicated region
        $region57: #{conv_lora_qkv_forward.3} parent=55 // pred_check
          %p3999 = pneg %p207
        $region58: #{conv_lora_qkv_forward.3} parent=55 // pred_check_branch
          %4001 = sbr.rel (%p3999) target = $region60
        $region59: #{conv_lora_qkv_forward.3} parent=55 // pred_region
          %s4002 = sand.u32 %s192, 1
          %s4003 = scalar_lea.sflag [#allocation3], %s4002
          %s4004 = sand.u32 %s192, 1
          %s4005 = smul.addr %s4004, 256
          %s4006 = scalar_lea.vmem [#allocation2], %s4005
          %4007 = dma.done %s4003, 4096
        $region60: #{conv_lora_qkv_forward.3} parent=55 // pred_fallthru
          _
      $region56: #{conv_lora_qkv_forward.3} parent=5 // pred_fallthru
        _
    $region6: #{conv_lora_qkv_forward.3} parent=1 // loop_footer
      %s20 = sadd.s32 1, %s16
    $region7: #{conv_lora_qkv_forward.3} parent=1 // loop_footer_branch
      %15 = sbr.rel target = $region3
    $region8: #{conv_lora_qkv_forward.3} parent=1 // loop_exit
      _
    %4008 = vsyncpa [#allocation3], 1
    %s4009 = scalar_lea.sflag [#allocation3], 1
    %4010 = vsyncpa %s4009, 1

</llo_original>
